<compile_context>
chip_gen: v5e
topology: v5e:2x2
jax: 0.10.0
libtpu: 0.0.40
codegen_flags: <defaults>
</compile_context>

<pallas_src>
import functools

import jax
import jax.numpy as jnp
from jax.experimental import pallas as pl
from jax.experimental.pallas import tpu as pltpu

EPS = 1e-5  # torch.nn.LayerNorm default


def _vmem_limit_bytes():
    default = 48 * 1024 * 1024
    try:
        cap = pltpu.get_tpu_info().vmem_capacity_bytes
        return min(default, int(cap * 0.7))   # ~44 MiB on a 64 MiB v7x core
    except Exception:
        return default


VMEM_LIMIT = _vmem_limit_bytes()


def _ln(x, g, b):
    mean = jnp.mean(x, axis=-1, keepdims=True)
    var = jnp.mean(jnp.square(x - mean), axis=-1, keepdims=True)
    return (x - mean) * jax.lax.rsqrt(var + EPS) * g + b


# ---------------- fused per-window unit-encoder layer (one call / layer) ----

def _unit_encoder_kernel(x_ref, wqkv_ref, bqkv_ref, wo_ref, bo_ref,
                         ln1g_ref, ln1b_ref, w1_ref, b1_ref, w2_ref, b2_ref,
                         ln2g_ref, ln2b_ref, ing_ref, inb_ref, o_ref, *,
                         num_heads, apply_input_ln):
    x = x_ref[0]                                    # (Lw, D) f32, one window
    Lw, D = x.shape
    d = D // num_heads
    scale = d ** -0.5

    if apply_input_ln:                              # layer 0: fused input LN
        x = _ln(x, ing_ref[...], inb_ref[...])

    # Fused QKV projection: one (Lw,D) x (D,3D) matmul, bf16 in / f32 acc.
    qkv = jnp.dot(x.astype(jnp.bfloat16), wqkv_ref[...],
                  preferred_element_type=jnp.float32) + bqkv_ref[...]

    # Windowed MHSA: every token in this block shares a window -> no mask.
    # Accumulated output projection: one live (Lw, D) f32 accumulator, no
    # concat / lane relayout of per-head outputs.
    # TODO(synk): at prod sizes, pad/pack head slabs to 128 lanes and batch
    # >=2 heads per score matmul to fill the 256-wide MXU on v6e/v7x.
    acc = jnp.zeros((Lw, D), jnp.float32)
    for h in range(num_heads):
        qh = qkv[:, h * d:(h + 1) * d] * scale              # fold scale into q
        kh = qkv[:, D + h * d:D + (h + 1) * d]
        vh = qkv[:, 2 * D + h * d:2 * D + (h + 1) * d]
        s = jax.lax.dot_general(qh, kh, (((1,), (1,)), ((), ())),
                                preferred_element_type=jnp.float32)  # (Lw, Lw)
        m = jnp.max(s, axis=-1, keepdims=True)
        p = jnp.exp(s - m)
        p = p * pl.reciprocal(jnp.sum(p, axis=-1, keepdims=True), approx=True)
        oh = jnp.dot(p.astype(jnp.bfloat16), vh.astype(jnp.bfloat16),
                     preferred_element_type=jnp.float32)             # (Lw, d)
        acc = acc + jnp.dot(oh.astype(jnp.bfloat16),
                            wo_ref[h * d:(h + 1) * d, :],
                            preferred_element_type=jnp.float32)      # (Lw, D)

    # Output projection bias + residual + post-LN.
    x1 = _ln(x + acc + bo_ref[...], ln1g_ref[...], ln1b_ref[...])

    # Relu-FFN + residual + post-LN (per-window: (Lw, F) stays tiny in VMEM).
    h1 = jnp.dot(x1.astype(jnp.bfloat16), w1_ref[...],
                 preferred_element_type=jnp.float32) + b1_ref[...]
    h1 = jnp.maximum(h1, 0.0)
    h2 = jnp.dot(h1.astype(jnp.bfloat16), w2_ref[...],
                 preferred_element_type=jnp.float32) + b2_ref[...]
    x2 = _ln(x1 + h2, ln2g_ref[...], ln2b_ref[...])

    o_ref[0] = x2.astype(o_ref.dtype)


def _const_specs(shapes, single_buffer):
    """BlockSpecs for grid-invariant (weight/bias/LN) operands."""
    specs = []
    for shp in shapes:
        if single_buffer:
            specs.append(pl.BlockSpec(shp, lambda b, w: (0, 0),
                                      pipeline_mode=pl.Buffered(1)))
        else:
            specs.append(pl.BlockSpec(shp, lambda b, w: (0, 0)))
    return specs


def _unit_encoder_layer_impl(x, lp, in_ln, num_heads, local_size,
                             apply_input_ln, single_buffer_weights):
    B, T, D = x.shape
    assert T % local_size == 0, "T must be divisible by local_size"
    # TPU block constraint: second-minor block dim must be a multiple of 8
    # (or the full extent).  TODO(synk): pad tiny windows to 8 if needed.
    assert local_size % 8 == 0 or local_size == T
    W = T // local_size
    F = lp["w1"].shape[1]
    in_ln_g, in_ln_b = in_ln
    kern = functools.partial(_unit_encoder_kernel, num_heads=num_heads,
                             apply_input_ln=apply_input_ln)
    wshapes = [(D, 3 * D), (1, 3 * D),          # wqkv, bqkv
               (D, D), (1, D),                  # wo, bo
               (1, D), (1, D),                  # ln1_g, ln1_b
               (D, F), (1, F),                  # w1, b1
               (F, D), (1, D),                  # w2, b2
               (1, D), (1, D),                  # ln2_g, ln2_b
               (1, D), (1, D)]                  # in_ln_g, in_ln_b
    wspecs = _const_specs(wshapes, single_buffer_weights)
    return pl.pallas_call(
        kern,
        out_shape=jax.ShapeDtypeStruct((B, T, D), x.dtype),
        grid=(B, W),
        in_specs=[pl.BlockSpec((1, local_size, D), lambda b, w: (b, w, 0))]
                 + wspecs,
        out_specs=pl.BlockSpec((1, local_size, D), lambda b, w: (b, w, 0)),
        compiler_params=pltpu.CompilerParams(
            dimension_semantics=("parallel", "parallel"),
            vmem_limit_bytes=VMEM_LIMIT),
    )(x,
      lp["wqkv"], lp["bqkv"].reshape(1, 3 * D),
      lp["wo"], lp["bo"].reshape(1, D),
      lp["ln1_g"].reshape(1, D), lp["ln1_b"].reshape(1, D),
      lp["w1"], lp["b1"].reshape(1, F),
      lp["w2"], lp["b2"].reshape(1, D),
      lp["ln2_g"].reshape(1, D), lp["ln2_b"].reshape(1, D),
      in_ln_g.reshape(1, D), in_ln_b.reshape(1, D))


def unit_encoder_layer(x, lp, in_ln, num_heads, local_size, apply_input_ln):
    try:
        return _unit_encoder_layer_impl(x, lp, in_ln, num_heads, local_size,
                                        apply_input_ln,
                                        single_buffer_weights=True)
    except Exception:
        # pl.Buffered(1) not supported on this jax version -> default buffers.
        return _unit_encoder_layer_impl(x, lp, in_ln, num_heads, local_size,
                                        apply_input_ln,
                                        single_buffer_weights=False)


# --------------------------------------------------------------- the model --

def _xavier(key, shape):
    fan_in, fan_out = shape[0], shape[1]
    limit = (6.0 / (fan_in + fan_out)) ** 0.5
    return jax.random.uniform(key, shape, jnp.float32, -limit, limit)


def init_params(key, embed_dim, ffn_embed_dim, num_heads, num_layers):
    D, F = embed_dim, ffn_embed_dim
    params = {
        "num_heads": num_heads,
        "in_ln_g": jnp.ones((D,), jnp.float32),
        "in_ln_b": jnp.zeros((D,), jnp.float32),
        "layers": [],
    }
    for _ in range(num_layers):
        key, *ks = jax.random.split(key, 7)
        wq = _xavier(ks[0], (D, D))
        wk = _xavier(ks[1], (D, D))
        wv = _xavier(ks[2], (D, D))
        lp = {
            # fused QKV weight; bf16 storage halves weight HBM traffic
            # (intentional deviation from the f32 PyTorch weights).
            "wqkv": jnp.concatenate([wq, wk, wv], axis=1).astype(jnp.bfloat16),
            "bqkv": jnp.zeros((3 * D,), jnp.float32),
            "wo": _xavier(ks[3], (D, D)).astype(jnp.bfloat16),
            "bo": jnp.zeros((D,), jnp.float32),
            "w1": _xavier(ks[4], (D, F)).astype(jnp.bfloat16),
            "b1": jnp.zeros((F,), jnp.float32),
            "w2": _xavier(ks[5], (F, D)).astype(jnp.bfloat16),
            "b2": jnp.zeros((D,), jnp.float32),
            "ln1_g": jnp.ones((D,), jnp.float32),
            "ln1_b": jnp.zeros((D,), jnp.float32),
            "ln2_g": jnp.ones((D,), jnp.float32),
            "ln2_b": jnp.zeros((D,), jnp.float32),
        }
        params["layers"].append(lp)
    return params


def speech_dw_encoder_block(x, window_mapping, params, local_size):
    """x: [B, T, D] f32, window_mapping: [B, W, T] binary membership
    (assumed to be the contiguous equal-size windows implied by local_size)."""
    out = x
    in_ln = (params["in_ln_g"], params["in_ln_b"])
    for i, lp in enumerate(params["layers"]):
        out = unit_encoder_layer(out, lp, in_ln, params["num_heads"],
                                 local_size, apply_input_ln=(i == 0))
    return out, window_mapping.shape[1]


# ------------------------------------------------------------------- main ---

if __name__ == "__main__":
    B, T, D, H, FFN, W = 2, 32, 32, 4, 64, 4
    local_size = T // W   # 8 (multiple of 8 -> clean TPU block shape)
    Encoder_args = dict(embed_dim=D, ffn_embed_dim=FFN, local_size=local_size,
                        num_heads=H, dropout=0.1, attention_dropout=0.1,
                        activation="relu")

    key = jax.random.PRNGKey(0)
    kx, kp = jax.random.split(key)
    x = jax.random.normal(kx, (B, T, D), jnp.float32)

    # W contiguous windows of size local_size, one-hot membership [B, W, T]
    win_id = jnp.arange(T) // local_size                          # [T]
    window_mapping = (jax.nn.one_hot(win_id, W, dtype=jnp.float32)
                      .T[None].repeat(B, axis=0))                 # [B, W, T]

    params = init_params(kp, Encoder_args["embed_dim"],
                         Encoder_args["ffn_embed_dim"],
                         Encoder_args["num_heads"], num_layers=1)

    out, num_windows = speech_dw_encoder_block(x, window_mapping, params,
                                               local_size=local_size)
    jax.block_until_ready(out)

    assert out.shape == (B, T, D) and out.dtype == jnp.float32
    assert num_windows == W
    assert bool(jnp.all(jnp.isfinite(out)))
    print("KERNEL_OK")
</pallas_src>

<mosaic_0001>
module attributes {stable_mosaic.version = 11 : i64} {
  func.func @_unit_encoder_kernel(%arg0: i32, %arg1: i32, %arg2: memref<1x8x32xf32, #tpu.memory_space<vmem>>, %arg3: memref<32x96xbf16, #tpu.memory_space<vmem>>, %arg4: memref<1x96xf32, #tpu.memory_space<vmem>>, %arg5: memref<32x32xbf16, #tpu.memory_space<vmem>>, %arg6: memref<1x32xf32, #tpu.memory_space<vmem>>, %arg7: memref<1x32xf32, #tpu.memory_space<vmem>>, %arg8: memref<1x32xf32, #tpu.memory_space<vmem>>, %arg9: memref<32x64xbf16, #tpu.memory_space<vmem>>, %arg10: memref<1x64xf32, #tpu.memory_space<vmem>>, %arg11: memref<64x32xbf16, #tpu.memory_space<vmem>>, %arg12: memref<1x32xf32, #tpu.memory_space<vmem>>, %arg13: memref<1x32xf32, #tpu.memory_space<vmem>>, %arg14: memref<1x32xf32, #tpu.memory_space<vmem>>, %arg15: memref<1x32xf32, #tpu.memory_space<vmem>>, %arg16: memref<1x32xf32, #tpu.memory_space<vmem>>, %arg17: memref<1x8x32xf32, #tpu.memory_space<vmem>>) attributes {dimension_semantics = [#tpu.dimension_semantics<parallel>, #tpu.dimension_semantics<parallel>], iteration_bounds = array<i64: 2, 4>, scalar_prefetch = 0 : i64, scratch_operands = 0 : i64, tpu.core_type = #tpu.core_type<tc>, window_params = [{transform_indices = @transform_0, window_bounds = array<i64: 1, 8, 32>}, {pipeline_mode = #tpu.pipeline_mode<synchronous>, transform_indices = @transform_1, window_bounds = array<i64: 32, 96>}, {pipeline_mode = #tpu.pipeline_mode<synchronous>, transform_indices = @transform_2, window_bounds = array<i64: 1, 96>}, {pipeline_mode = #tpu.pipeline_mode<synchronous>, transform_indices = @transform_3, window_bounds = array<i64: 32, 32>}, {pipeline_mode = #tpu.pipeline_mode<synchronous>, transform_indices = @transform_4, window_bounds = array<i64: 1, 32>}, {pipeline_mode = #tpu.pipeline_mode<synchronous>, transform_indices = @transform_5, window_bounds = array<i64: 1, 32>}, {pipeline_mode = #tpu.pipeline_mode<synchronous>, transform_indices = @transform_6, window_bounds = array<i64: 1, 32>}, {pipeline_mode = #tpu.pipeline_mode<synchronous>, transform_indices = @transform_7, window_bounds = array<i64: 32, 64>}, {pipeline_mode = #tpu.pipeline_mode<synchronous>, transform_indices = @transform_8, window_bounds = array<i64: 1, 64>}, {pipeline_mode = #tpu.pipeline_mode<synchronous>, transform_indices = @transform_9, window_bounds = array<i64: 64, 32>}, {pipeline_mode = #tpu.pipeline_mode<synchronous>, transform_indices = @transform_10, window_bounds = array<i64: 1, 32>}, {pipeline_mode = #tpu.pipeline_mode<synchronous>, transform_indices = @transform_11, window_bounds = array<i64: 1, 32>}, {pipeline_mode = #tpu.pipeline_mode<synchronous>, transform_indices = @transform_12, window_bounds = array<i64: 1, 32>}, {pipeline_mode = #tpu.pipeline_mode<synchronous>, transform_indices = @transform_13, window_bounds = array<i64: 1, 32>}, {pipeline_mode = #tpu.pipeline_mode<synchronous>, transform_indices = @transform_14, window_bounds = array<i64: 1, 32>}, {transform_indices = @transform_15, window_bounds = array<i64: 1, 8, 32>}]} {
    %c0 = arith.constant 0 : index
    %c0_0 = arith.constant 0 : index
    %c0_1 = arith.constant 0 : index
    %0 = vector.load %arg2[%c0, %c0_0, %c0_1] : memref<1x8x32xf32, #tpu.memory_space<vmem>>, vector<1x8x32xf32>
    %1 = vector.shape_cast %0 : vector<1x8x32xf32> to vector<8x32xf32>
    %c0_2 = arith.constant 0 : index
    %c0_3 = arith.constant 0 : index
    %2 = vector.load %arg15[%c0_2, %c0_3] : memref<1x32xf32, #tpu.memory_space<vmem>>, vector<1x32xf32>
    %c0_4 = arith.constant 0 : index
    %c0_5 = arith.constant 0 : index
    %3 = vector.load %arg16[%c0_4, %c0_5] : memref<1x32xf32, #tpu.memory_space<vmem>>, vector<1x32xf32>
    %cst = arith.constant dense<0.000000e+00> : vector<8xf32>
    %4 = vector.multi_reduction <add>, %1, %cst [1] : vector<8x32xf32> to vector<8xf32>
    %5 = vector.shape_cast %4 : vector<8xf32> to vector<8x1xf32>
    %cst_6 = arith.constant 3.200000e+01 : f32
    %6 = vector.broadcast %cst_6 : f32 to vector<8x1xf32>
    %7 = arith.divf %5, %6 : vector<8x1xf32>
    %8 = vector.broadcast %7 : vector<8x1xf32> to vector<8x32xf32>
    %9 = arith.subf %1, %8 : vector<8x32xf32>
    %10 = arith.mulf %9, %9 : vector<8x32xf32>
    %cst_7 = arith.constant dense<0.000000e+00> : vector<8xf32>
    %11 = vector.multi_reduction <add>, %10, %cst_7 [1] : vector<8x32xf32> to vector<8xf32>
    %12 = vector.shape_cast %11 : vector<8xf32> to vector<8x1xf32>
    %cst_8 = arith.constant 3.200000e+01 : f32
    %13 = vector.broadcast %cst_8 : f32 to vector<8x1xf32>
    %14 = arith.divf %12, %13 : vector<8x1xf32>
    %15 = vector.broadcast %7 : vector<8x1xf32> to vector<8x32xf32>
    %16 = arith.subf %1, %15 : vector<8x32xf32>
    %cst_9 = arith.constant 9.99999974E-6 : f32
    %17 = vector.broadcast %cst_9 : f32 to vector<8x1xf32>
    %18 = arith.addf %14, %17 : vector<8x1xf32>
    %19 = math.rsqrt %18 : vector<8x1xf32>
    %20 = vector.broadcast %19 : vector<8x1xf32> to vector<8x32xf32>
    %21 = arith.mulf %16, %20 : vector<8x32xf32>
    %22 = vector.broadcast %2 : vector<1x32xf32> to vector<8x32xf32>
    %23 = arith.mulf %21, %22 : vector<8x32xf32>
    %24 = vector.broadcast %3 : vector<1x32xf32> to vector<8x32xf32>
    %25 = arith.addf %23, %24 : vector<8x32xf32>
    %26 = arith.truncf %25 : vector<8x32xf32> to vector<8x32xbf16>
    %c0_10 = arith.constant 0 : index
    %c0_11 = arith.constant 0 : index
    %27 = vector.load %arg3[%c0_10, %c0_11] : memref<32x96xbf16, #tpu.memory_space<vmem>>, vector<32x96xbf16>
    %cst_12 = arith.constant dense<0.000000e+00> : vector<8x96xf32>
    %28 = tpu.matmul %26, %27, %cst_12 {dimension_numbers = #tpu.dot_dimension_numbers<[1], [0], [0], [1], [0, 0, 1, 1], [], []>} : vector<8x32xbf16>, vector<32x96xbf16>, vector<8x96xf32> -> vector<8x96xf32>
    %c0_13 = arith.constant 0 : index
    %c0_14 = arith.constant 0 : index
    %29 = vector.load %arg4[%c0_13, %c0_14] : memref<1x96xf32, #tpu.memory_space<vmem>>, vector<1x96xf32>
    %30 = vector.broadcast %29 : vector<1x96xf32> to vector<8x96xf32>
    %31 = arith.addf %28, %30 : vector<8x96xf32>
    %cst_15 = arith.constant 0.000000e+00 : f32
    %32 = vector.broadcast %cst_15 : f32 to vector<8x32xf32>
    %33 = vector.extract_strided_slice %31 {offsets = [0, 0], sizes = [8, 8], strides = [1, 1]} : vector<8x96xf32> to vector<8x8xf32>
    %cst_16 = arith.constant 0.353553385 : f32
    %34 = vector.broadcast %cst_16 : f32 to vector<8x8xf32>
    %35 = arith.mulf %33, %34 : vector<8x8xf32>
    %36 = vector.extract_strided_slice %31 {offsets = [0, 32], sizes = [8, 8], strides = [1, 1]} : vector<8x96xf32> to vector<8x8xf32>
    %37 = vector.extract_strided_slice %31 {offsets = [0, 64], sizes = [8, 8], strides = [1, 1]} : vector<8x96xf32> to vector<8x8xf32>
    %cst_17 = arith.constant dense<0.000000e+00> : vector<8x8xf32>
    %38 = tpu.matmul %35, %36, %cst_17 {dimension_numbers = #tpu.dot_dimension_numbers<[1], [1], [0], [0], [0, 0, 1, 0], [], []>} : vector<8x8xf32>, vector<8x8xf32>, vector<8x8xf32> -> vector<8x8xf32>
    %cst_18 = arith.constant dense<0xFF800000> : vector<8xf32>
    %39 = vector.multi_reduction <maximumf>, %38, %cst_18 [1] : vector<8x8xf32> to vector<8xf32>
    %40 = vector.shape_cast %39 : vector<8xf32> to vector<8x1xf32>
    %41 = vector.broadcast %40 : vector<8x1xf32> to vector<8x8xf32>
    %42 = arith.subf %38, %41 : vector<8x8xf32>
    %43 = math.exp %42 : vector<8x8xf32>
    %cst_19 = arith.constant dense<0.000000e+00> : vector<8xf32>
    %44 = vector.multi_reduction <add>, %43, %cst_19 [1] : vector<8x8xf32> to vector<8xf32>
    %45 = vector.shape_cast %44 : vector<8xf32> to vector<8x1xf32>
    %46 = tpu.reciprocal %45 {approx = true} : vector<8x1xf32> -> vector<8x1xf32>
    %47 = vector.broadcast %46 : vector<8x1xf32> to vector<8x8xf32>
    %48 = arith.mulf %43, %47 : vector<8x8xf32>
    %49 = arith.truncf %48 : vector<8x8xf32> to vector<8x8xbf16>
    %50 = arith.truncf %37 : vector<8x8xf32> to vector<8x8xbf16>
    %cst_20 = arith.constant dense<0.000000e+00> : vector<8x8xf32>
    %51 = tpu.matmul %49, %50, %cst_20 {dimension_numbers = #tpu.dot_dimension_numbers<[1], [0], [0], [1], [0, 0, 1, 1], [], []>} : vector<8x8xbf16>, vector<8x8xbf16>, vector<8x8xf32> -> vector<8x8xf32>
    %52 = arith.truncf %51 : vector<8x8xf32> to vector<8x8xbf16>
    %c0_21 = arith.constant 0 : index
    %c0_22 = arith.constant 0 : index
    %53 = vector.load %arg5[%c0_21, %c0_22] : memref<32x32xbf16, #tpu.memory_space<vmem>>, vector<8x32xbf16>
    %cst_23 = arith.constant dense<0.000000e+00> : vector<8x32xf32>
    %54 = tpu.matmul %52, %53, %cst_23 {dimension_numbers = #tpu.dot_dimension_numbers<[1], [0], [0], [1], [0, 0, 1, 1], [], []>} : vector<8x8xbf16>, vector<8x32xbf16>, vector<8x32xf32> -> vector<8x32xf32>
    %55 = arith.addf %32, %54 : vector<8x32xf32>
    %56 = vector.extract_strided_slice %31 {offsets = [0, 8], sizes = [8, 8], strides = [1, 1]} : vector<8x96xf32> to vector<8x8xf32>
    %cst_24 = arith.constant 0.353553385 : f32
    %57 = vector.broadcast %cst_24 : f32 to vector<8x8xf32>
    %58 = arith.mulf %56, %57 : vector<8x8xf32>
    %59 = vector.extract_strided_slice %31 {offsets = [0, 40], sizes = [8, 8], strides = [1, 1]} : vector<8x96xf32> to vector<8x8xf32>
    %60 = vector.extract_strided_slice %31 {offsets = [0, 72], sizes = [8, 8], strides = [1, 1]} : vector<8x96xf32> to vector<8x8xf32>
    %cst_25 = arith.constant dense<0.000000e+00> : vector<8x8xf32>
    %61 = tpu.matmul %58, %59, %cst_25 {dimension_numbers = #tpu.dot_dimension_numbers<[1], [1], [0], [0], [0, 0, 1, 0], [], []>} : vector<8x8xf32>, vector<8x8xf32>, vector<8x8xf32> -> vector<8x8xf32>
    %cst_26 = arith.constant dense<0xFF800000> : vector<8xf32>
    %62 = vector.multi_reduction <maximumf>, %61, %cst_26 [1] : vector<8x8xf32> to vector<8xf32>
    %63 = vector.shape_cast %62 : vector<8xf32> to vector<8x1xf32>
    %64 = vector.broadcast %63 : vector<8x1xf32> to vector<8x8xf32>
    %65 = arith.subf %61, %64 : vector<8x8xf32>
    %66 = math.exp %65 : vector<8x8xf32>
    %cst_27 = arith.constant dense<0.000000e+00> : vector<8xf32>
    %67 = vector.multi_reduction <add>, %66, %cst_27 [1] : vector<8x8xf32> to vector<8xf32>
    %68 = vector.shape_cast %67 : vector<8xf32> to vector<8x1xf32>
    %69 = tpu.reciprocal %68 {approx = true} : vector<8x1xf32> -> vector<8x1xf32>
    %70 = vector.broadcast %69 : vector<8x1xf32> to vector<8x8xf32>
    %71 = arith.mulf %66, %70 : vector<8x8xf32>
    %72 = arith.truncf %71 : vector<8x8xf32> to vector<8x8xbf16>
    %73 = arith.truncf %60 : vector<8x8xf32> to vector<8x8xbf16>
    %cst_28 = arith.constant dense<0.000000e+00> : vector<8x8xf32>
    %74 = tpu.matmul %72, %73, %cst_28 {dimension_numbers = #tpu.dot_dimension_numbers<[1], [0], [0], [1], [0, 0, 1, 1], [], []>} : vector<8x8xbf16>, vector<8x8xbf16>, vector<8x8xf32> -> vector<8x8xf32>
    %75 = arith.truncf %74 : vector<8x8xf32> to vector<8x8xbf16>
    %c8 = arith.constant 8 : index
    %c0_29 = arith.constant 0 : index
    %76 = vector.load %arg5[%c8, %c0_29] : memref<32x32xbf16, #tpu.memory_space<vmem>>, vector<8x32xbf16>
    %cst_30 = arith.constant dense<0.000000e+00> : vector<8x32xf32>
    %77 = tpu.matmul %75, %76, %cst_30 {dimension_numbers = #tpu.dot_dimension_numbers<[1], [0], [0], [1], [0, 0, 1, 1], [], []>} : vector<8x8xbf16>, vector<8x32xbf16>, vector<8x32xf32> -> vector<8x32xf32>
    %78 = arith.addf %55, %77 : vector<8x32xf32>
    %79 = vector.extract_strided_slice %31 {offsets = [0, 16], sizes = [8, 8], strides = [1, 1]} : vector<8x96xf32> to vector<8x8xf32>
    %cst_31 = arith.constant 0.353553385 : f32
    %80 = vector.broadcast %cst_31 : f32 to vector<8x8xf32>
    %81 = arith.mulf %79, %80 : vector<8x8xf32>
    %82 = vector.extract_strided_slice %31 {offsets = [0, 48], sizes = [8, 8], strides = [1, 1]} : vector<8x96xf32> to vector<8x8xf32>
    %83 = vector.extract_strided_slice %31 {offsets = [0, 80], sizes = [8, 8], strides = [1, 1]} : vector<8x96xf32> to vector<8x8xf32>
    %cst_32 = arith.constant dense<0.000000e+00> : vector<8x8xf32>
    %84 = tpu.matmul %81, %82, %cst_32 {dimension_numbers = #tpu.dot_dimension_numbers<[1], [1], [0], [0], [0, 0, 1, 0], [], []>} : vector<8x8xf32>, vector<8x8xf32>, vector<8x8xf32> -> vector<8x8xf32>
    %cst_33 = arith.constant dense<0xFF800000> : vector<8xf32>
    %85 = vector.multi_reduction <maximumf>, %84, %cst_33 [1] : vector<8x8xf32> to vector<8xf32>
    %86 = vector.shape_cast %85 : vector<8xf32> to vector<8x1xf32>
    %87 = vector.broadcast %86 : vector<8x1xf32> to vector<8x8xf32>
    %88 = arith.subf %84, %87 : vector<8x8xf32>
    %89 = math.exp %88 : vector<8x8xf32>
    %cst_34 = arith.constant dense<0.000000e+00> : vector<8xf32>
    %90 = vector.multi_reduction <add>, %89, %cst_34 [1] : vector<8x8xf32> to vector<8xf32>
    %91 = vector.shape_cast %90 : vector<8xf32> to vector<8x1xf32>
    %92 = tpu.reciprocal %91 {approx = true} : vector<8x1xf32> -> vector<8x1xf32>
    %93 = vector.broadcast %92 : vector<8x1xf32> to vector<8x8xf32>
    %94 = arith.mulf %89, %93 : vector<8x8xf32>
    %95 = arith.truncf %94 : vector<8x8xf32> to vector<8x8xbf16>
    %96 = arith.truncf %83 : vector<8x8xf32> to vector<8x8xbf16>
    %cst_35 = arith.constant dense<0.000000e+00> : vector<8x8xf32>
    %97 = tpu.matmul %95, %96, %cst_35 {dimension_numbers = #tpu.dot_dimension_numbers<[1], [0], [0], [1], [0, 0, 1, 1], [], []>} : vector<8x8xbf16>, vector<8x8xbf16>, vector<8x8xf32> -> vector<8x8xf32>
    %98 = arith.truncf %97 : vector<8x8xf32> to vector<8x8xbf16>
    %c16 = arith.constant 16 : index
    %c0_36 = arith.constant 0 : index
    %99 = vector.load %arg5[%c16, %c0_36] : memref<32x32xbf16, #tpu.memory_space<vmem>>, vector<8x32xbf16>
    %cst_37 = arith.constant dense<0.000000e+00> : vector<8x32xf32>
    %100 = tpu.matmul %98, %99, %cst_37 {dimension_numbers = #tpu.dot_dimension_numbers<[1], [0], [0], [1], [0, 0, 1, 1], [], []>} : vector<8x8xbf16>, vector<8x32xbf16>, vector<8x32xf32> -> vector<8x32xf32>
    %101 = arith.addf %78, %100 : vector<8x32xf32>
    %102 = vector.extract_strided_slice %31 {offsets = [0, 24], sizes = [8, 8], strides = [1, 1]} : vector<8x96xf32> to vector<8x8xf32>
    %cst_38 = arith.constant 0.353553385 : f32
    %103 = vector.broadcast %cst_38 : f32 to vector<8x8xf32>
    %104 = arith.mulf %102, %103 : vector<8x8xf32>
    %105 = vector.extract_strided_slice %31 {offsets = [0, 56], sizes = [8, 8], strides = [1, 1]} : vector<8x96xf32> to vector<8x8xf32>
    %106 = vector.extract_strided_slice %31 {offsets = [0, 88], sizes = [8, 8], strides = [1, 1]} : vector<8x96xf32> to vector<8x8xf32>
    %cst_39 = arith.constant dense<0.000000e+00> : vector<8x8xf32>
    %107 = tpu.matmul %104, %105, %cst_39 {dimension_numbers = #tpu.dot_dimension_numbers<[1], [1], [0], [0], [0, 0, 1, 0], [], []>} : vector<8x8xf32>, vector<8x8xf32>, vector<8x8xf32> -> vector<8x8xf32>
    %cst_40 = arith.constant dense<0xFF800000> : vector<8xf32>
    %108 = vector.multi_reduction <maximumf>, %107, %cst_40 [1] : vector<8x8xf32> to vector<8xf32>
    %109 = vector.shape_cast %108 : vector<8xf32> to vector<8x1xf32>
    %110 = vector.broadcast %109 : vector<8x1xf32> to vector<8x8xf32>
    %111 = arith.subf %107, %110 : vector<8x8xf32>
    %112 = math.exp %111 : vector<8x8xf32>
    %cst_41 = arith.constant dense<0.000000e+00> : vector<8xf32>
    %113 = vector.multi_reduction <add>, %112, %cst_41 [1] : vector<8x8xf32> to vector<8xf32>
    %114 = vector.shape_cast %113 : vector<8xf32> to vector<8x1xf32>
    %115 = tpu.reciprocal %114 {approx = true} : vector<8x1xf32> -> vector<8x1xf32>
    %116 = vector.broadcast %115 : vector<8x1xf32> to vector<8x8xf32>
    %117 = arith.mulf %112, %116 : vector<8x8xf32>
    %118 = arith.truncf %117 : vector<8x8xf32> to vector<8x8xbf16>
    %119 = arith.truncf %106 : vector<8x8xf32> to vector<8x8xbf16>
    %cst_42 = arith.constant dense<0.000000e+00> : vector<8x8xf32>
    %120 = tpu.matmul %118, %119, %cst_42 {dimension_numbers = #tpu.dot_dimension_numbers<[1], [0], [0], [1], [0, 0, 1, 1], [], []>} : vector<8x8xbf16>, vector<8x8xbf16>, vector<8x8xf32> -> vector<8x8xf32>
    %121 = arith.truncf %120 : vector<8x8xf32> to vector<8x8xbf16>
    %c24 = arith.constant 24 : index
    %c0_43 = arith.constant 0 : index
    %122 = vector.load %arg5[%c24, %c0_43] : memref<32x32xbf16, #tpu.memory_space<vmem>>, vector<8x32xbf16>
    %cst_44 = arith.constant dense<0.000000e+00> : vector<8x32xf32>
    %123 = tpu.matmul %121, %122, %cst_44 {dimension_numbers = #tpu.dot_dimension_numbers<[1], [0], [0], [1], [0, 0, 1, 1], [], []>} : vector<8x8xbf16>, vector<8x32xbf16>, vector<8x32xf32> -> vector<8x32xf32>
    %124 = arith.addf %101, %123 : vector<8x32xf32>
    %125 = arith.addf %25, %124 : vector<8x32xf32>
    %c0_45 = arith.constant 0 : index
    %c0_46 = arith.constant 0 : index
    %126 = vector.load %arg6[%c0_45, %c0_46] : memref<1x32xf32, #tpu.memory_space<vmem>>, vector<1x32xf32>
    %127 = vector.broadcast %126 : vector<1x32xf32> to vector<8x32xf32>
    %128 = arith.addf %125, %127 : vector<8x32xf32>
    %c0_47 = arith.constant 0 : index
    %c0_48 = arith.constant 0 : index
    %129 = vector.load %arg7[%c0_47, %c0_48] : memref<1x32xf32, #tpu.memory_space<vmem>>, vector<1x32xf32>
    %c0_49 = arith.constant 0 : index
    %c0_50 = arith.constant 0 : index
    %130 = vector.load %arg8[%c0_49, %c0_50] : memref<1x32xf32, #tpu.memory_space<vmem>>, vector<1x32xf32>
    %cst_51 = arith.constant dense<0.000000e+00> : vector<8xf32>
    %131 = vector.multi_reduction <add>, %128, %cst_51 [1] : vector<8x32xf32> to vector<8xf32>
    %132 = vector.shape_cast %131 : vector<8xf32> to vector<8x1xf32>
    %cst_52 = arith.constant 3.200000e+01 : f32
    %133 = vector.broadcast %cst_52 : f32 to vector<8x1xf32>
    %134 = arith.divf %132, %133 : vector<8x1xf32>
    %135 = vector.broadcast %134 : vector<8x1xf32> to vector<8x32xf32>
    %136 = arith.subf %128, %135 : vector<8x32xf32>
    %137 = arith.mulf %136, %136 : vector<8x32xf32>
    %cst_53 = arith.constant dense<0.000000e+00> : vector<8xf32>
    %138 = vector.multi_reduction <add>, %137, %cst_53 [1] : vector<8x32xf32> to vector<8xf32>
    %139 = vector.shape_cast %138 : vector<8xf32> to vector<8x1xf32>
    %cst_54 = arith.constant 3.200000e+01 : f32
    %140 = vector.broadcast %cst_54 : f32 to vector<8x1xf32>
    %141 = arith.divf %139, %140 : vector<8x1xf32>
    %142 = vector.broadcast %134 : vector<8x1xf32> to vector<8x32xf32>
    %143 = arith.subf %128, %142 : vector<8x32xf32>
    %cst_55 = arith.constant 9.99999974E-6 : f32
    %144 = vector.broadcast %cst_55 : f32 to vector<8x1xf32>
    %145 = arith.addf %141, %144 : vector<8x1xf32>
    %146 = math.rsqrt %145 : vector<8x1xf32>
    %147 = vector.broadcast %146 : vector<8x1xf32> to vector<8x32xf32>
    %148 = arith.mulf %143, %147 : vector<8x32xf32>
    %149 = vector.broadcast %129 : vector<1x32xf32> to vector<8x32xf32>
    %150 = arith.mulf %148, %149 : vector<8x32xf32>
    %151 = vector.broadcast %130 : vector<1x32xf32> to vector<8x32xf32>
    %152 = arith.addf %150, %151 : vector<8x32xf32>
    %153 = arith.truncf %152 : vector<8x32xf32> to vector<8x32xbf16>
    %c0_56 = arith.constant 0 : index
    %c0_57 = arith.constant 0 : index
    %154 = vector.load %arg9[%c0_56, %c0_57] : memref<32x64xbf16, #tpu.memory_space<vmem>>, vector<32x64xbf16>
    %cst_58 = arith.constant dense<0.000000e+00> : vector<8x64xf32>
    %155 = tpu.matmul %153, %154, %cst_58 {dimension_numbers = #tpu.dot_dimension_numbers<[1], [0], [0], [1], [0, 0, 1, 1], [], []>} : vector<8x32xbf16>, vector<32x64xbf16>, vector<8x64xf32> -> vector<8x64xf32>
    %c0_59 = arith.constant 0 : index
    %c0_60 = arith.constant 0 : index
    %156 = vector.load %arg10[%c0_59, %c0_60] : memref<1x64xf32, #tpu.memory_space<vmem>>, vector<1x64xf32>
    %157 = vector.broadcast %156 : vector<1x64xf32> to vector<8x64xf32>
    %158 = arith.addf %155, %157 : vector<8x64xf32>
    %cst_61 = arith.constant 0.000000e+00 : f32
    %159 = vector.broadcast %cst_61 : f32 to vector<8x64xf32>
    %160 = arith.maximumf %158, %159 : vector<8x64xf32>
    %161 = arith.truncf %160 : vector<8x64xf32> to vector<8x64xbf16>
    %c0_62 = arith.constant 0 : index
    %c0_63 = arith.constant 0 : index
    %162 = vector.load %arg11[%c0_62, %c0_63] : memref<64x32xbf16, #tpu.memory_space<vmem>>, vector<64x32xbf16>
    %cst_64 = arith.constant dense<0.000000e+00> : vector<8x32xf32>
    %163 = tpu.matmul %161, %162, %cst_64 {dimension_numbers = #tpu.dot_dimension_numbers<[1], [0], [0], [1], [0, 0, 1, 1], [], []>} : vector<8x64xbf16>, vector<64x32xbf16>, vector<8x32xf32> -> vector<8x32xf32>
    %c0_65 = arith.constant 0 : index
    %c0_66 = arith.constant 0 : index
    %164 = vector.load %arg12[%c0_65, %c0_66] : memref<1x32xf32, #tpu.memory_space<vmem>>, vector<1x32xf32>
    %165 = vector.broadcast %164 : vector<1x32xf32> to vector<8x32xf32>
    %166 = arith.addf %163, %165 : vector<8x32xf32>
    %167 = arith.addf %152, %166 : vector<8x32xf32>
    %c0_67 = arith.constant 0 : index
    %c0_68 = arith.constant 0 : index
    %168 = vector.load %arg13[%c0_67, %c0_68] : memref<1x32xf32, #tpu.memory_space<vmem>>, vector<1x32xf32>
    %c0_69 = arith.constant 0 : index
    %c0_70 = arith.constant 0 : index
    %169 = vector.load %arg14[%c0_69, %c0_70] : memref<1x32xf32, #tpu.memory_space<vmem>>, vector<1x32xf32>
    %cst_71 = arith.constant dense<0.000000e+00> : vector<8xf32>
    %170 = vector.multi_reduction <add>, %167, %cst_71 [1] : vector<8x32xf32> to vector<8xf32>
    %171 = vector.shape_cast %170 : vector<8xf32> to vector<8x1xf32>
    %cst_72 = arith.constant 3.200000e+01 : f32
    %172 = vector.broadcast %cst_72 : f32 to vector<8x1xf32>
    %173 = arith.divf %171, %172 : vector<8x1xf32>
    %174 = vector.broadcast %173 : vector<8x1xf32> to vector<8x32xf32>
    %175 = arith.subf %167, %174 : vector<8x32xf32>
    %176 = arith.mulf %175, %175 : vector<8x32xf32>
    %cst_73 = arith.constant dense<0.000000e+00> : vector<8xf32>
    %177 = vector.multi_reduction <add>, %176, %cst_73 [1] : vector<8x32xf32> to vector<8xf32>
    %178 = vector.shape_cast %177 : vector<8xf32> to vector<8x1xf32>
    %cst_74 = arith.constant 3.200000e+01 : f32
    %179 = vector.broadcast %cst_74 : f32 to vector<8x1xf32>
    %180 = arith.divf %178, %179 : vector<8x1xf32>
    %181 = vector.broadcast %173 : vector<8x1xf32> to vector<8x32xf32>
    %182 = arith.subf %167, %181 : vector<8x32xf32>
    %cst_75 = arith.constant 9.99999974E-6 : f32
    %183 = vector.broadcast %cst_75 : f32 to vector<8x1xf32>
    %184 = arith.addf %180, %183 : vector<8x1xf32>
    %185 = math.rsqrt %184 : vector<8x1xf32>
    %186 = vector.broadcast %185 : vector<8x1xf32> to vector<8x32xf32>
    %187 = arith.mulf %182, %186 : vector<8x32xf32>
    %188 = vector.broadcast %168 : vector<1x32xf32> to vector<8x32xf32>
    %189 = arith.mulf %187, %188 : vector<8x32xf32>
    %190 = vector.broadcast %169 : vector<1x32xf32> to vector<8x32xf32>
    %191 = arith.addf %189, %190 : vector<8x32xf32>
    %c0_76 = arith.constant 0 : index
    %c0_77 = arith.constant 0 : index
    %c0_78 = arith.constant 0 : index
    %192 = vector.load %arg17[%c0_76, %c0_77, %c0_78] : memref<1x8x32xf32, #tpu.memory_space<vmem>>, vector<1x8x32xf32>
    %193 = vector.shape_cast %192 : vector<1x8x32xf32> to vector<8x32xf32>
    %194 = vector.shape_cast %191 : vector<8x32xf32> to vector<1x8x32xf32>
    tpu.vector_store %arg17[%c0_76, %c0_77, %c0_78], %194 {strides = array<i32>} : memref<1x8x32xf32, #tpu.memory_space<vmem>>, vector<1x8x32xf32>,
    return
  }
  func.func @transform_0(%arg0: i32, %arg1: i32) -> (i32, i32, i32) {
    %c0_i32 = arith.constant 0 : i32
    %c0_i32_0 = arith.constant 0 : i32
    return %arg0, %arg1, %c0_i32 : i32, i32, i32
  }
  func.func @transform_1(%arg0: i32, %arg1: i32) -> (i32, i32) {
    %c0_i32 = arith.constant 0 : i32
    %c0_i32_0 = arith.constant 0 : i32
    %c0_i32_1 = arith.constant 0 : i32
    return %c0_i32, %c0_i32_0 : i32, i32
  }
  func.func @transform_2(%arg0: i32, %arg1: i32) -> (i32, i32) {
    %c0_i32 = arith.constant 0 : i32
    %c0_i32_0 = arith.constant 0 : i32
    %c0_i32_1 = arith.constant 0 : i32
    return %c0_i32, %c0_i32_0 : i32, i32
  }
  func.func @transform_3(%arg0: i32, %arg1: i32) -> (i32, i32) {
    %c0_i32 = arith.constant 0 : i32
    %c0_i32_0 = arith.constant 0 : i32
    %c0_i32_1 = arith.constant 0 : i32
    return %c0_i32, %c0_i32_0 : i32, i32
  }
  func.func @transform_4(%arg0: i32, %arg1: i32) -> (i32, i32) {
    %c0_i32 = arith.constant 0 : i32
    %c0_i32_0 = arith.constant 0 : i32
    %c0_i32_1 = arith.constant 0 : i32
    return %c0_i32, %c0_i32_0 : i32, i32
  }
  func.func @transform_5(%arg0: i32, %arg1: i32) -> (i32, i32) {
    %c0_i32 = arith.constant 0 : i32
    %c0_i32_0 = arith.constant 0 : i32
    %c0_i32_1 = arith.constant 0 : i32
    return %c0_i32, %c0_i32_0 : i32, i32
  }
  func.func @transform_6(%arg0: i32, %arg1: i32) -> (i32, i32) {
    %c0_i32 = arith.constant 0 : i32
    %c0_i32_0 = arith.constant 0 : i32
    %c0_i32_1 = arith.constant 0 : i32
    return %c0_i32, %c0_i32_0 : i32, i32
  }
  func.func @transform_7(%arg0: i32, %arg1: i32) -> (i32, i32) {
    %c0_i32 = arith.constant 0 : i32
    %c0_i32_0 = arith.constant 0 : i32
    %c0_i32_1 = arith.constant 0 : i32
    return %c0_i32, %c0_i32_0 : i32, i32
  }
  func.func @transform_8(%arg0: i32, %arg1: i32) -> (i32, i32) {
    %c0_i32 = arith.constant 0 : i32
    %c0_i32_0 = arith.constant 0 : i32
    %c0_i32_1 = arith.constant 0 : i32
    return %c0_i32, %c0_i32_0 : i32, i32
  }
  func.func @transform_9(%arg0: i32, %arg1: i32) -> (i32, i32) {
    %c0_i32 = arith.constant 0 : i32
    %c0_i32_0 = arith.constant 0 : i32
    %c0_i32_1 = arith.constant 0 : i32
    return %c0_i32, %c0_i32_0 : i32, i32
  }
  func.func @transform_10(%arg0: i32, %arg1: i32) -> (i32, i32) {
    %c0_i32 = arith.constant 0 : i32
    %c0_i32_0 = arith.constant 0 : i32
    %c0_i32_1 = arith.constant 0 : i32
    return %c0_i32, %c0_i32_0 : i32, i32
  }
  func.func @transform_11(%arg0: i32, %arg1: i32) -> (i32, i32) {
    %c0_i32 = arith.constant 0 : i32
    %c0_i32_0 = arith.constant 0 : i32
    %c0_i32_1 = arith.constant 0 : i32
    return %c0_i32, %c0_i32_0 : i32, i32
  }
  func.func @transform_12(%arg0: i32, %arg1: i32) -> (i32, i32) {
    %c0_i32 = arith.constant 0 : i32
    %c0_i32_0 = arith.constant 0 : i32
    %c0_i32_1 = arith.constant 0 : i32
    return %c0_i32, %c0_i32_0 : i32, i32
  }
  func.func @transform_13(%arg0: i32, %arg1: i32) -> (i32, i32) {
    %c0_i32 = arith.constant 0 : i32
    %c0_i32_0 = arith.constant 0 : i32
    %c0_i32_1 = arith.constant 0 : i32
    return %c0_i32, %c0_i32_0 : i32, i32
  }
  func.func @transform_14(%arg0: i32, %arg1: i32) -> (i32, i32) {
    %c0_i32 = arith.constant 0 : i32
    %c0_i32_0 = arith.constant 0 : i32
    %c0_i32_1 = arith.constant 0 : i32
    return %c0_i32, %c0_i32_0 : i32, i32
  }
  func.func @transform_15(%arg0: i32, %arg1: i32) -> (i32, i32, i32) {
    %c0_i32 = arith.constant 0 : i32
    %c0_i32_0 = arith.constant 0 : i32
    return %arg0, %arg1, %c0_i32 : i32, i32, i32
  }
}

module attributes {stable_mosaic.version = 11 : i64} {
  func.func @_unit_encoder_kernel(%arg0: i32, %arg1: i32, %arg2: memref<1x8x32xf32, #tpu.memory_space<vmem>>, %arg3: memref<32x96xbf16, #tpu.memory_space<vmem>>, %arg4: memref<1x96xf32, #tpu.memory_space<vmem>>, %arg5: memref<32x32xbf16, #tpu.memory_space<vmem>>, %arg6: memref<1x32xf32, #tpu.memory_space<vmem>>, %arg7: memref<1x32xf32, #tpu.memory_space<vmem>>, %arg8: memref<1x32xf32, #tpu.memory_space<vmem>>, %arg9: memref<32x64xbf16, #tpu.memory_space<vmem>>, %arg10: memref<1x64xf32, #tpu.memory_space<vmem>>, %arg11: memref<64x32xbf16, #tpu.memory_space<vmem>>, %arg12: memref<1x32xf32, #tpu.memory_space<vmem>>, %arg13: memref<1x32xf32, #tpu.memory_space<vmem>>, %arg14: memref<1x32xf32, #tpu.memory_space<vmem>>, %arg15: memref<1x32xf32, #tpu.memory_space<vmem>>, %arg16: memref<1x32xf32, #tpu.memory_space<vmem>>, %arg17: memref<1x8x32xf32, #tpu.memory_space<vmem>>) attributes {dimension_semantics = [#tpu.dimension_semantics<parallel>, #tpu.dimension_semantics<parallel>], iteration_bounds = array<i64: 2, 4>, scalar_prefetch = 0 : i64, scratch_operands = 0 : i64, tpu.core_type = #tpu.core_type<tc>, window_params = [{transform_indices = @transform_0, window_bounds = array<i64: 1, 8, 32>}, {pipeline_mode = #tpu.pipeline_mode<synchronous>, transform_indices = @transform_1, window_bounds = array<i64: 32, 96>}, {pipeline_mode = #tpu.pipeline_mode<synchronous>, transform_indices = @transform_2, window_bounds = array<i64: 1, 96>}, {pipeline_mode = #tpu.pipeline_mode<synchronous>, transform_indices = @transform_3, window_bounds = array<i64: 32, 32>}, {pipeline_mode = #tpu.pipeline_mode<synchronous>, transform_indices = @transform_4, window_bounds = array<i64: 1, 32>}, {pipeline_mode = #tpu.pipeline_mode<synchronous>, transform_indices = @transform_5, window_bounds = array<i64: 1, 32>}, {pipeline_mode = #tpu.pipeline_mode<synchronous>, transform_indices = @transform_6, window_bounds = array<i64: 1, 32>}, {pipeline_mode = #tpu.pipeline_mode<synchronous>, transform_indices = @transform_7, window_bounds = array<i64: 32, 64>}, {pipeline_mode = #tpu.pipeline_mode<synchronous>, transform_indices = @transform_8, window_bounds = array<i64: 1, 64>}, {pipeline_mode = #tpu.pipeline_mode<synchronous>, transform_indices = @transform_9, window_bounds = array<i64: 64, 32>}, {pipeline_mode = #tpu.pipeline_mode<synchronous>, transform_indices = @transform_10, window_bounds = array<i64: 1, 32>}, {pipeline_mode = #tpu.pipeline_mode<synchronous>, transform_indices = @transform_11, window_bounds = array<i64: 1, 32>}, {pipeline_mode = #tpu.pipeline_mode<synchronous>, transform_indices = @transform_12, window_bounds = array<i64: 1, 32>}, {pipeline_mode = #tpu.pipeline_mode<synchronous>, transform_indices = @transform_13, window_bounds = array<i64: 1, 32>}, {pipeline_mode = #tpu.pipeline_mode<synchronous>, transform_indices = @transform_14, window_bounds = array<i64: 1, 32>}, {transform_indices = @transform_15, window_bounds = array<i64: 1, 8, 32>}]} {
    %c0 = arith.constant 0 : index
    %c0_0 = arith.constant 0 : index
    %c0_1 = arith.constant 0 : index
    %0 = vector.load %arg2[%c0, %c0_0, %c0_1] : memref<1x8x32xf32, #tpu.memory_space<vmem>>, vector<1x8x32xf32>
    %1 = vector.shape_cast %0 : vector<1x8x32xf32> to vector<8x32xf32>
    %c0_2 = arith.constant 0 : index
    %c0_3 = arith.constant 0 : index
    %2 = vector.load %arg15[%c0_2, %c0_3] : memref<1x32xf32, #tpu.memory_space<vmem>>, vector<1x32xf32>
    %c0_4 = arith.constant 0 : index
    %c0_5 = arith.constant 0 : index
    %3 = vector.load %arg16[%c0_4, %c0_5] : memref<1x32xf32, #tpu.memory_space<vmem>>, vector<1x32xf32>
    %cst = arith.constant dense<0.000000e+00> : vector<8xf32>
    %4 = vector.multi_reduction <add>, %1, %cst [1] : vector<8x32xf32> to vector<8xf32>
    %5 = vector.shape_cast %4 : vector<8xf32> to vector<8x1xf32>
    %cst_6 = arith.constant 3.200000e+01 : f32
    %6 = vector.broadcast %cst_6 : f32 to vector<8x1xf32>
    %7 = arith.divf %5, %6 : vector<8x1xf32>
    %8 = vector.broadcast %7 : vector<8x1xf32> to vector<8x32xf32>
    %9 = arith.subf %1, %8 : vector<8x32xf32>
    %10 = arith.mulf %9, %9 : vector<8x32xf32>
    %cst_7 = arith.constant dense<0.000000e+00> : vector<8xf32>
    %11 = vector.multi_reduction <add>, %10, %cst_7 [1] : vector<8x32xf32> to vector<8xf32>
    %12 = vector.shape_cast %11 : vector<8xf32> to vector<8x1xf32>
    %cst_8 = arith.constant 3.200000e+01 : f32
    %13 = vector.broadcast %cst_8 : f32 to vector<8x1xf32>
    %14 = arith.divf %12, %13 : vector<8x1xf32>
    %15 = vector.broadcast %7 : vector<8x1xf32> to vector<8x32xf32>
    %16 = arith.subf %1, %15 : vector<8x32xf32>
    %cst_9 = arith.constant 9.99999974E-6 : f32
    %17 = vector.broadcast %cst_9 : f32 to vector<8x1xf32>
    %18 = arith.addf %14, %17 : vector<8x1xf32>
    %19 = math.rsqrt %18 : vector<8x1xf32>
    %20 = vector.broadcast %19 : vector<8x1xf32> to vector<8x32xf32>
    %21 = arith.mulf %16, %20 : vector<8x32xf32>
    %22 = vector.broadcast %2 : vector<1x32xf32> to vector<8x32xf32>
    %23 = arith.mulf %21, %22 : vector<8x32xf32>
    %24 = vector.broadcast %3 : vector<1x32xf32> to vector<8x32xf32>
    %25 = arith.addf %23, %24 : vector<8x32xf32>
    %26 = arith.truncf %25 : vector<8x32xf32> to vector<8x32xbf16>
    %c0_10 = arith.constant 0 : index
    %c0_11 = arith.constant 0 : index
    %27 = vector.load %arg3[%c0_10, %c0_11] : memref<32x96xbf16, #tpu.memory_space<vmem>>, vector<32x96xbf16>
    %cst_12 = arith.constant dense<0.000000e+00> : vector<8x96xf32>
    %28 = tpu.matmul %26, %27, %cst_12 {dimension_numbers = #tpu.dot_dimension_numbers<[1], [0], [0], [1], [0, 0, 1, 1], [], []>} : vector<8x32xbf16>, vector<32x96xbf16>, vector<8x96xf32> -> vector<8x96xf32>
    %c0_13 = arith.constant 0 : index
    %c0_14 = arith.constant 0 : index
    %29 = vector.load %arg4[%c0_13, %c0_14] : memref<1x96xf32, #tpu.memory_space<vmem>>, vector<1x96xf32>
    %30 = vector.broadcast %29 : vector<1x96xf32> to vector<8x96xf32>
    %31 = arith.addf %28, %30 : vector<8x96xf32>
    %cst_15 = arith.constant 0.000000e+00 : f32
    %32 = vector.broadcast %cst_15 : f32 to vector<8x32xf32>
    %33 = vector.extract_strided_slice %31 {offsets = [0, 0], sizes = [8, 8], strides = [1, 1]} : vector<8x96xf32> to vector<8x8xf32>
    %cst_16 = arith.constant 0.353553385 : f32
    %34 = vector.broadcast %cst_16 : f32 to vector<8x8xf32>
    %35 = arith.mulf %33, %34 : vector<8x8xf32>
    %36 = vector.extract_strided_slice %31 {offsets = [0, 32], sizes = [8, 8], strides = [1, 1]} : vector<8x96xf32> to vector<8x8xf32>
    %37 = vector.extract_strided_slice %31 {offsets = [0, 64], sizes = [8, 8], strides = [1, 1]} : vector<8x96xf32> to vector<8x8xf32>
    %cst_17 = arith.constant dense<0.000000e+00> : vector<8x8xf32>
    %38 = tpu.matmul %35, %36, %cst_17 {dimension_numbers = #tpu.dot_dimension_numbers<[1], [1], [0], [0], [0, 0, 1, 0], [], []>} : vector<8x8xf32>, vector<8x8xf32>, vector<8x8xf32> -> vector<8x8xf32>
    %cst_18 = arith.constant dense<0xFF800000> : vector<8xf32>
    %39 = vector.multi_reduction <maximumf>, %38, %cst_18 [1] : vector<8x8xf32> to vector<8xf32>
    %40 = vector.shape_cast %39 : vector<8xf32> to vector<8x1xf32>
    %41 = vector.broadcast %40 : vector<8x1xf32> to vector<8x8xf32>
    %42 = arith.subf %38, %41 : vector<8x8xf32>
    %43 = math.exp %42 : vector<8x8xf32>
    %cst_19 = arith.constant dense<0.000000e+00> : vector<8xf32>
    %44 = vector.multi_reduction <add>, %43, %cst_19 [1] : vector<8x8xf32> to vector<8xf32>
    %45 = vector.shape_cast %44 : vector<8xf32> to vector<8x1xf32>
    %46 = tpu.reciprocal %45 {approx = true} : vector<8x1xf32> -> vector<8x1xf32>
    %47 = vector.broadcast %46 : vector<8x1xf32> to vector<8x8xf32>
    %48 = arith.mulf %43, %47 : vector<8x8xf32>
    %49 = arith.truncf %48 : vector<8x8xf32> to vector<8x8xbf16>
    %50 = arith.truncf %37 : vector<8x8xf32> to vector<8x8xbf16>
    %cst_20 = arith.constant dense<0.000000e+00> : vector<8x8xf32>
    %51 = tpu.matmul %49, %50, %cst_20 {dimension_numbers = #tpu.dot_dimension_numbers<[1], [0], [0], [1], [0, 0, 1, 1], [], []>} : vector<8x8xbf16>, vector<8x8xbf16>, vector<8x8xf32> -> vector<8x8xf32>
    %52 = arith.truncf %51 : vector<8x8xf32> to vector<8x8xbf16>
    %c0_21 = arith.constant 0 : index
    %c0_22 = arith.constant 0 : index
    %53 = vector.load %arg5[%c0_21, %c0_22] : memref<32x32xbf16, #tpu.memory_space<vmem>>, vector<8x32xbf16>
    %cst_23 = arith.constant dense<0.000000e+00> : vector<8x32xf32>
    %54 = tpu.matmul %52, %53, %cst_23 {dimension_numbers = #tpu.dot_dimension_numbers<[1], [0], [0], [1], [0, 0, 1, 1], [], []>} : vector<8x8xbf16>, vector<8x32xbf16>, vector<8x32xf32> -> vector<8x32xf32>
    %55 = arith.addf %32, %54 : vector<8x32xf32>
    %56 = vector.extract_strided_slice %31 {offsets = [0, 8], sizes = [8, 8], strides = [1, 1]} : vector<8x96xf32> to vector<8x8xf32>
    %cst_24 = arith.constant 0.353553385 : f32
    %57 = vector.broadcast %cst_24 : f32 to vector<8x8xf32>
    %58 = arith.mulf %56, %57 : vector<8x8xf32>
    %59 = vector.extract_strided_slice %31 {offsets = [0, 40], sizes = [8, 8], strides = [1, 1]} : vector<8x96xf32> to vector<8x8xf32>
    %60 = vector.extract_strided_slice %31 {offsets = [0, 72], sizes = [8, 8], strides = [1, 1]} : vector<8x96xf32> to vector<8x8xf32>
    %cst_25 = arith.constant dense<0.000000e+00> : vector<8x8xf32>
    %61 = tpu.matmul %58, %59, %cst_25 {dimension_numbers = #tpu.dot_dimension_numbers<[1], [1], [0], [0], [0, 0, 1, 0], [], []>} : vector<8x8xf32>, vector<8x8xf32>, vector<8x8xf32> -> vector<8x8xf32>
    %cst_26 = arith.constant dense<0xFF800000> : vector<8xf32>
    %62 = vector.multi_reduction <maximumf>, %61, %cst_26 [1] : vector<8x8xf32> to vector<8xf32>
    %63 = vector.shape_cast %62 : vector<8xf32> to vector<8x1xf32>
    %64 = vector.broadcast %63 : vector<8x1xf32> to vector<8x8xf32>
    %65 = arith.subf %61, %64 : vector<8x8xf32>
    %66 = math.exp %65 : vector<8x8xf32>
    %cst_27 = arith.constant dense<0.000000e+00> : vector<8xf32>
    %67 = vector.multi_reduction <add>, %66, %cst_27 [1] : vector<8x8xf32> to vector<8xf32>
    %68 = vector.shape_cast %67 : vector<8xf32> to vector<8x1xf32>
    %69 = tpu.reciprocal %68 {approx = true} : vector<8x1xf32> -> vector<8x1xf32>
    %70 = vector.broadcast %69 : vector<8x1xf32> to vector<8x8xf32>
    %71 = arith.mulf %66, %70 : vector<8x8xf32>
    %72 = arith.truncf %71 : vector<8x8xf32> to vector<8x8xbf16>
    %73 = arith.truncf %60 : vector<8x8xf32> to vector<8x8xbf16>
    %cst_28 = arith.constant dense<0.000000e+00> : vector<8x8xf32>
    %74 = tpu.matmul %72, %73, %cst_28 {dimension_numbers = #tpu.dot_dimension_numbers<[1], [0], [0], [1], [0, 0, 1, 1], [], []>} : vector<8x8xbf16>, vector<8x8xbf16>, vector<8x8xf32> -> vector<8x8xf32>
    %75 = arith.truncf %74 : vector<8x8xf32> to vector<8x8xbf16>
    %c8 = arith.constant 8 : index
    %c0_29 = arith.constant 0 : index
    %76 = vector.load %arg5[%c8, %c0_29] : memref<32x32xbf16, #tpu.memory_space<vmem>>, vector<8x32xbf16>
    %cst_30 = arith.constant dense<0.000000e+00> : vector<8x32xf32>
    %77 = tpu.matmul %75, %76, %cst_30 {dimension_numbers = #tpu.dot_dimension_numbers<[1], [0], [0], [1], [0, 0, 1, 1], [], []>} : vector<8x8xbf16>, vector<8x32xbf16>, vector<8x32xf32> -> vector<8x32xf32>
    %78 = arith.addf %55, %77 : vector<8x32xf32>
    %79 = vector.extract_strided_slice %31 {offsets = [0, 16], sizes = [8, 8], strides = [1, 1]} : vector<8x96xf32> to vector<8x8xf32>
    %cst_31 = arith.constant 0.353553385 : f32
    %80 = vector.broadcast %cst_31 : f32 to vector<8x8xf32>
    %81 = arith.mulf %79, %80 : vector<8x8xf32>
    %82 = vector.extract_strided_slice %31 {offsets = [0, 48], sizes = [8, 8], strides = [1, 1]} : vector<8x96xf32> to vector<8x8xf32>
    %83 = vector.extract_strided_slice %31 {offsets = [0, 80], sizes = [8, 8], strides = [1, 1]} : vector<8x96xf32> to vector<8x8xf32>
    %cst_32 = arith.constant dense<0.000000e+00> : vector<8x8xf32>
    %84 = tpu.matmul %81, %82, %cst_32 {dimension_numbers = #tpu.dot_dimension_numbers<[1], [1], [0], [0], [0, 0, 1, 0], [], []>} : vector<8x8xf32>, vector<8x8xf32>, vector<8x8xf32> -> vector<8x8xf32>
    %cst_33 = arith.constant dense<0xFF800000> : vector<8xf32>
    %85 = vector.multi_reduction <maximumf>, %84, %cst_33 [1] : vector<8x8xf32> to vector<8xf32>
    %86 = vector.shape_cast %85 : vector<8xf32> to vector<8x1xf32>
    %87 = vector.broadcast %86 : vector<8x1xf32> to vector<8x8xf32>
    %88 = arith.subf %84, %87 : vector<8x8xf32>
    %89 = math.exp %88 : vector<8x8xf32>
    %cst_34 = arith.constant dense<0.000000e+00> : vector<8xf32>
    %90 = vector.multi_reduction <add>, %89, %cst_34 [1] : vector<8x8xf32> to vector<8xf32>
    %91 = vector.shape_cast %90 : vector<8xf32> to vector<8x1xf32>
    %92 = tpu.reciprocal %91 {approx = true} : vector<8x1xf32> -> vector<8x1xf32>
    %93 = vector.broadcast %92 : vector<8x1xf32> to vector<8x8xf32>
    %94 = arith.mulf %89, %93 : vector<8x8xf32>
    %95 = arith.truncf %94 : vector<8x8xf32> to vector<8x8xbf16>
    %96 = arith.truncf %83 : vector<8x8xf32> to vector<8x8xbf16>
    %cst_35 = arith.constant dense<0.000000e+00> : vector<8x8xf32>
    %97 = tpu.matmul %95, %96, %cst_35 {dimension_numbers = #tpu.dot_dimension_numbers<[1], [0], [0], [1], [0, 0, 1, 1], [], []>} : vector<8x8xbf16>, vector<8x8xbf16>, vector<8x8xf32> -> vector<8x8xf32>
    %98 = arith.truncf %97 : vector<8x8xf32> to vector<8x8xbf16>
    %c16 = arith.constant 16 : index
    %c0_36 = arith.constant 0 : index
    %99 = vector.load %arg5[%c16, %c0_36] : memref<32x32xbf16, #tpu.memory_space<vmem>>, vector<8x32xbf16>
    %cst_37 = arith.constant dense<0.000000e+00> : vector<8x32xf32>
    %100 = tpu.matmul %98, %99, %cst_37 {dimension_numbers = #tpu.dot_dimension_numbers<[1], [0], [0], [1], [0, 0, 1, 1], [], []>} : vector<8x8xbf16>, vector<8x32xbf16>, vector<8x32xf32> -> vector<8x32xf32>
    %101 = arith.addf %78, %100 : vector<8x32xf32>
    %102 = vector.extract_strided_slice %31 {offsets = [0, 24], sizes = [8, 8], strides = [1, 1]} : vector<8x96xf32> to vector<8x8xf32>
    %cst_38 = arith.constant 0.353553385 : f32
    %103 = vector.broadcast %cst_38 : f32 to vector<8x8xf32>
    %104 = arith.mulf %102, %103 : vector<8x8xf32>
    %105 = vector.extract_strided_slice %31 {offsets = [0, 56], sizes = [8, 8], strides = [1, 1]} : vector<8x96xf32> to vector<8x8xf32>
    %106 = vector.extract_strided_slice %31 {offsets = [0, 88], sizes = [8, 8], strides = [1, 1]} : vector<8x96xf32> to vector<8x8xf32>
    %cst_39 = arith.constant dense<0.000000e+00> : vector<8x8xf32>
    %107 = tpu.matmul %104, %105, %cst_39 {dimension_numbers = #tpu.dot_dimension_numbers<[1], [1], [0], [0], [0, 0, 1, 0], [], []>} : vector<8x8xf32>, vector<8x8xf32>, vector<8x8xf32> -> vector<8x8xf32>
    %cst_40 = arith.constant dense<0xFF800000> : vector<8xf32>
    %108 = vector.multi_reduction <maximumf>, %107, %cst_40 [1] : vector<8x8xf32> to vector<8xf32>
    %109 = vector.shape_cast %108 : vector<8xf32> to vector<8x1xf32>
    %110 = vector.broadcast %109 : vector<8x1xf32> to vector<8x8xf32>
    %111 = arith.subf %107, %110 : vector<8x8xf32>
    %112 = math.exp %111 : vector<8x8xf32>
    %cst_41 = arith.constant dense<0.000000e+00> : vector<8xf32>
    %113 = vector.multi_reduction <add>, %112, %cst_41 [1] : vector<8x8xf32> to vector<8xf32>
    %114 = vector.shape_cast %113 : vector<8xf32> to vector<8x1xf32>
    %115 = tpu.reciprocal %114 {approx = true} : vector<8x1xf32> -> vector<8x1xf32>
    %116 = vector.broadcast %115 : vector<8x1xf32> to vector<8x8xf32>
    %117 = arith.mulf %112, %116 : vector<8x8xf32>
    %118 = arith.truncf %117 : vector<8x8xf32> to vector<8x8xbf16>
    %119 = arith.truncf %106 : vector<8x8xf32> to vector<8x8xbf16>
    %cst_42 = arith.constant dense<0.000000e+00> : vector<8x8xf32>
    %120 = tpu.matmul %118, %119, %cst_42 {dimension_numbers = #tpu.dot_dimension_numbers<[1], [0], [0], [1], [0, 0, 1, 1], [], []>} : vector<8x8xbf16>, vector<8x8xbf16>, vector<8x8xf32> -> vector<8x8xf32>
    %121 = arith.truncf %120 : vector<8x8xf32> to vector<8x8xbf16>
    %c24 = arith.constant 24 : index
    %c0_43 = arith.constant 0 : index
    %122 = vector.load %arg5[%c24, %c0_43] : memref<32x32xbf16, #tpu.memory_space<vmem>>, vector<8x32xbf16>
    %cst_44 = arith.constant dense<0.000000e+00> : vector<8x32xf32>
    %123 = tpu.matmul %121, %122, %cst_44 {dimension_numbers = #tpu.dot_dimension_numbers<[1], [0], [0], [1], [0, 0, 1, 1], [], []>} : vector<8x8xbf16>, vector<8x32xbf16>, vector<8x32xf32> -> vector<8x32xf32>
    %124 = arith.addf %101, %123 : vector<8x32xf32>
    %125 = arith.addf %25, %124 : vector<8x32xf32>
    %c0_45 = arith.constant 0 : index
    %c0_46 = arith.constant 0 : index
    %126 = vector.load %arg6[%c0_45, %c0_46] : memref<1x32xf32, #tpu.memory_space<vmem>>, vector<1x32xf32>
    %127 = vector.broadcast %126 : vector<1x32xf32> to vector<8x32xf32>
    %128 = arith.addf %125, %127 : vector<8x32xf32>
    %c0_47 = arith.constant 0 : index
    %c0_48 = arith.constant 0 : index
    %129 = vector.load %arg7[%c0_47, %c0_48] : memref<1x32xf32, #tpu.memory_space<vmem>>, vector<1x32xf32>
    %c0_49 = arith.constant 0 : index
    %c0_50 = arith.constant 0 : index
    %130 = vector.load %arg8[%c0_49, %c0_50] : memref<1x32xf32, #tpu.memory_space<vmem>>, vector<1x32xf32>
    %cst_51 = arith.constant dense<0.000000e+00> : vector<8xf32>
    %131 = vector.multi_reduction <add>, %128, %cst_51 [1] : vector<8x32xf32> to vector<8xf32>
    %132 = vector.shape_cast %131 : vector<8xf32> to vector<8x1xf32>
    %cst_52 = arith.constant 3.200000e+01 : f32
    %133 = vector.broadcast %cst_52 : f32 to vector<8x1xf32>
    %134 = arith.divf %132, %133 : vector<8x1xf32>
    %135 = vector.broadcast %134 : vector<8x1xf32> to vector<8x32xf32>
    %136 = arith.subf %128, %135 : vector<8x32xf32>
    %137 = arith.mulf %136, %136 : vector<8x32xf32>
    %cst_53 = arith.constant dense<0.000000e+00> : vector<8xf32>
    %138 = vector.multi_reduction <add>, %137, %cst_53 [1] : vector<8x32xf32> to vector<8xf32>
    %139 = vector.shape_cast %138 : vector<8xf32> to vector<8x1xf32>
    %cst_54 = arith.constant 3.200000e+01 : f32
    %140 = vector.broadcast %cst_54 : f32 to vector<8x1xf32>
    %141 = arith.divf %139, %140 : vector<8x1xf32>
    %142 = vector.broadcast %134 : vector<8x1xf32> to vector<8x32xf32>
    %143 = arith.subf %128, %142 : vector<8x32xf32>
    %cst_55 = arith.constant 9.99999974E-6 : f32
    %144 = vector.broadcast %cst_55 : f32 to vector<8x1xf32>
    %145 = arith.addf %141, %144 : vector<8x1xf32>
    %146 = math.rsqrt %145 : vector<8x1xf32>
    %147 = vector.broadcast %146 : vector<8x1xf32> to vector<8x32xf32>
    %148 = arith.mulf %143, %147 : vector<8x32xf32>
    %149 = vector.broadcast %129 : vector<1x32xf32> to vector<8x32xf32>
    %150 = arith.mulf %148, %149 : vector<8x32xf32>
    %151 = vector.broadcast %130 : vector<1x32xf32> to vector<8x32xf32>
    %152 = arith.addf %150, %151 : vector<8x32xf32>
    %153 = arith.truncf %152 : vector<8x32xf32> to vector<8x32xbf16>
    %c0_56 = arith.constant 0 : index
    %c0_57 = arith.constant 0 : index
    %154 = vector.load %arg9[%c0_56, %c0_57] : memref<32x64xbf16, #tpu.memory_space<vmem>>, vector<32x64xbf16>
    %cst_58 = arith.constant dense<0.000000e+00> : vector<8x64xf32>
    %155 = tpu.matmul %153, %154, %cst_58 {dimension_numbers = #tpu.dot_dimension_numbers<[1], [0], [0], [1], [0, 0, 1, 1], [], []>} : vector<8x32xbf16>, vector<32x64xbf16>, vector<8x64xf32> -> vector<8x64xf32>
    %c0_59 = arith.constant 0 : index
    %c0_60 = arith.constant 0 : index
    %156 = vector.load %arg10[%c0_59, %c0_60] : memref<1x64xf32, #tpu.memory_space<vmem>>, vector<1x64xf32>
    %157 = vector.broadcast %156 : vector<1x64xf32> to vector<8x64xf32>
    %158 = arith.addf %155, %157 : vector<8x64xf32>
    %cst_61 = arith.constant 0.000000e+00 : f32
    %159 = vector.broadcast %cst_61 : f32 to vector<8x64xf32>
    %160 = arith.maximumf %158, %159 : vector<8x64xf32>
    %161 = arith.truncf %160 : vector<8x64xf32> to vector<8x64xbf16>
    %c0_62 = arith.constant 0 : index
    %c0_63 = arith.constant 0 : index
    %162 = vector.load %arg11[%c0_62, %c0_63] : memref<64x32xbf16, #tpu.memory_space<vmem>>, vector<64x32xbf16>
    %cst_64 = arith.constant dense<0.000000e+00> : vector<8x32xf32>
    %163 = tpu.matmul %161, %162, %cst_64 {dimension_numbers = #tpu.dot_dimension_numbers<[1], [0], [0], [1], [0, 0, 1, 1], [], []>} : vector<8x64xbf16>, vector<64x32xbf16>, vector<8x32xf32> -> vector<8x32xf32>
    %c0_65 = arith.constant 0 : index
    %c0_66 = arith.constant 0 : index
    %164 = vector.load %arg12[%c0_65, %c0_66] : memref<1x32xf32, #tpu.memory_space<vmem>>, vector<1x32xf32>
    %165 = vector.broadcast %164 : vector<1x32xf32> to vector<8x32xf32>
    %166 = arith.addf %163, %165 : vector<8x32xf32>
    %167 = arith.addf %152, %166 : vector<8x32xf32>
    %c0_67 = arith.constant 0 : index
    %c0_68 = arith.constant 0 : index
    %168 = vector.load %arg13[%c0_67, %c0_68] : memref<1x32xf32, #tpu.memory_space<vmem>>, vector<1x32xf32>
    %c0_69 = arith.constant 0 : index
    %c0_70 = arith.constant 0 : index
    %169 = vector.load %arg14[%c0_69, %c0_70] : memref<1x32xf32, #tpu.memory_space<vmem>>, vector<1x32xf32>
    %cst_71 = arith.constant dense<0.000000e+00> : vector<8xf32>
    %170 = vector.multi_reduction <add>, %167, %cst_71 [1] : vector<8x32xf32> to vector<8xf32>
    %171 = vector.shape_cast %170 : vector<8xf32> to vector<8x1xf32>
    %cst_72 = arith.constant 3.200000e+01 : f32
    %172 = vector.broadcast %cst_72 : f32 to vector<8x1xf32>
    %173 = arith.divf %171, %172 : vector<8x1xf32>
    %174 = vector.broadcast %173 : vector<8x1xf32> to vector<8x32xf32>
    %175 = arith.subf %167, %174 : vector<8x32xf32>
    %176 = arith.mulf %175, %175 : vector<8x32xf32>
    %cst_73 = arith.constant dense<0.000000e+00> : vector<8xf32>
    %177 = vector.multi_reduction <add>, %176, %cst_73 [1] : vector<8x32xf32> to vector<8xf32>
    %178 = vector.shape_cast %177 : vector<8xf32> to vector<8x1xf32>
    %cst_74 = arith.constant 3.200000e+01 : f32
    %179 = vector.broadcast %cst_74 : f32 to vector<8x1xf32>
    %180 = arith.divf %178, %179 : vector<8x1xf32>
    %181 = vector.broadcast %173 : vector<8x1xf32> to vector<8x32xf32>
    %182 = arith.subf %167, %181 : vector<8x32xf32>
    %cst_75 = arith.constant 9.99999974E-6 : f32
    %183 = vector.broadcast %cst_75 : f32 to vector<8x1xf32>
    %184 = arith.addf %180, %183 : vector<8x1xf32>
    %185 = math.rsqrt %184 : vector<8x1xf32>
    %186 = vector.broadcast %185 : vector<8x1xf32> to vector<8x32xf32>
    %187 = arith.mulf %182, %186 : vector<8x32xf32>
    %188 = vector.broadcast %168 : vector<1x32xf32> to vector<8x32xf32>
    %189 = arith.mulf %187, %188 : vector<8x32xf32>
    %190 = vector.broadcast %169 : vector<1x32xf32> to vector<8x32xf32>
    %191 = arith.addf %189, %190 : vector<8x32xf32>
    %c0_76 = arith.constant 0 : index
    %c0_77 = arith.constant 0 : index
    %c0_78 = arith.constant 0 : index
    %192 = vector.load %arg17[%c0_76, %c0_77, %c0_78] : memref<1x8x32xf32, #tpu.memory_space<vmem>>, vector<1x8x32xf32>
    %193 = vector.shape_cast %192 : vector<1x8x32xf32> to vector<8x32xf32>
    %194 = vector.shape_cast %191 : vector<8x32xf32> to vector<1x8x32xf32>
    tpu.vector_store %arg17[%c0_76, %c0_77, %c0_78], %194 {strides = array<i32>} : memref<1x8x32xf32, #tpu.memory_space<vmem>>, vector<1x8x32xf32>,
    return
  }
  func.func @transform_0(%arg0: i32, %arg1: i32) -> (i32, i32, i32) {
    %c0_i32 = arith.constant 0 : i32
    %c0_i32_0 = arith.constant 0 : i32
    return %arg0, %arg1, %c0_i32 : i32, i32, i32
  }
  func.func @transform_1(%arg0: i32, %arg1: i32) -> (i32, i32) {
    %c0_i32 = arith.constant 0 : i32
    %c0_i32_0 = arith.constant 0 : i32
    %c0_i32_1 = arith.constant 0 : i32
    return %c0_i32, %c0_i32_0 : i32, i32
  }
  func.func @transform_2(%arg0: i32, %arg1: i32) -> (i32, i32) {
    %c0_i32 = arith.constant 0 : i32
    %c0_i32_0 = arith.constant 0 : i32
    %c0_i32_1 = arith.constant 0 : i32
    return %c0_i32, %c0_i32_0 : i32, i32
  }
  func.func @transform_3(%arg0: i32, %arg1: i32) -> (i32, i32) {
    %c0_i32 = arith.constant 0 : i32
    %c0_i32_0 = arith.constant 0 : i32
    %c0_i32_1 = arith.constant 0 : i32
    return %c0_i32, %c0_i32_0 : i32, i32
  }
  func.func @transform_4(%arg0: i32, %arg1: i32) -> (i32, i32) {
    %c0_i32 = arith.constant 0 : i32
    %c0_i32_0 = arith.constant 0 : i32
    %c0_i32_1 = arith.constant 0 : i32
    return %c0_i32, %c0_i32_0 : i32, i32
  }
  func.func @transform_5(%arg0: i32, %arg1: i32) -> (i32, i32) {
    %c0_i32 = arith.constant 0 : i32
    %c0_i32_0 = arith.constant 0 : i32
    %c0_i32_1 = arith.constant 0 : i32
    return %c0_i32, %c0_i32_0 : i32, i32
  }
  func.func @transform_6(%arg0: i32, %arg1: i32) -> (i32, i32) {
    %c0_i32 = arith.constant 0 : i32
    %c0_i32_0 = arith.constant 0 : i32
    %c0_i32_1 = arith.constant 0 : i32
    return %c0_i32, %c0_i32_0 : i32, i32
  }
  func.func @transform_7(%arg0: i32, %arg1: i32) -> (i32, i32) {
    %c0_i32 = arith.constant 0 : i32
    %c0_i32_0 = arith.constant 0 : i32
    %c0_i32_1 = arith.constant 0 : i32
    return %c0_i32, %c0_i32_0 : i32, i32
  }
  func.func @transform_8(%arg0: i32, %arg1: i32) -> (i32, i32) {
    %c0_i32 = arith.constant 0 : i32
    %c0_i32_0 = arith.constant 0 : i32
    %c0_i32_1 = arith.constant 0 : i32
    return %c0_i32, %c0_i32_0 : i32, i32
  }
  func.func @transform_9(%arg0: i32, %arg1: i32) -> (i32, i32) {
    %c0_i32 = arith.constant 0 : i32
    %c0_i32_0 = arith.constant 0 : i32
    %c0_i32_1 = arith.constant 0 : i32
    return %c0_i32, %c0_i32_0 : i32, i32
  }
  func.func @transform_10(%arg0: i32, %arg1: i32) -> (i32, i32) {
    %c0_i32 = arith.constant 0 : i32
    %c0_i32_0 = arith.constant 0 : i32
    %c0_i32_1 = arith.constant 0 : i32
    return %c0_i32, %c0_i32_0 : i32, i32
  }
  func.func @transform_11(%arg0: i32, %arg1: i32) -> (i32, i32) {
    %c0_i32 = arith.constant 0 : i32
    %c0_i32_0 = arith.constant 0 : i32
    %c0_i32_1 = arith.constant 0 : i32
    return %c0_i32, %c0_i32_0 : i32, i32
  }
  func.func @transform_12(%arg0: i32, %arg1: i32) -> (i32, i32) {
    %c0_i32 = arith.constant 0 : i32
    %c0_i32_0 = arith.constant 0 : i32
    %c0_i32_1 = arith.constant 0 : i32
    return %c0_i32, %c0_i32_0 : i32, i32
  }
  func.func @transform_13(%arg0: i32, %arg1: i32) -> (i32, i32) {
    %c0_i32 = arith.constant 0 : i32
    %c0_i32_0 = arith.constant 0 : i32
    %c0_i32_1 = arith.constant 0 : i32
    return %c0_i32, %c0_i32_0 : i32, i32
  }
  func.func @transform_14(%arg0: i32, %arg1: i32) -> (i32, i32) {
    %c0_i32 = arith.constant 0 : i32
    %c0_i32_0 = arith.constant 0 : i32
    %c0_i32_1 = arith.constant 0 : i32
    return %c0_i32, %c0_i32_0 : i32, i32
  }
  func.func @transform_15(%arg0: i32, %arg1: i32) -> (i32, i32, i32) {
    %c0_i32 = arith.constant 0 : i32
    %c0_i32_0 = arith.constant 0 : i32
    return %arg0, %arg1, %c0_i32 : i32, i32, i32
  }
}

</mosaic_0001>

<llo_original>
// kernel: tpu_custom_call.1
$region0: #{tpu_custom_call.1}
  #allocation0 [shape = 'u32[]', space=smem, size = 0x4, offset = 0x4, fixed_abs, tag = 'smem constant byte address 0x4 - core index']
  #allocation1 [shape = 'u32[72,128]{1,0:T(1,128)}', space=vmem, size = 0x9000, scoped, tag = 'internal scratch']
  %s0 = inlined_call_operand.hbm [shape: f32[2,32,32], index: 0, kind: input, shape index: {}]
  %s1 = inlined_call_operand.vmem [shape: bf16[32,96], index: 1, kind: input, shape index: {}]
  %s2 = inlined_call_operand.vmem [shape: f32[1,96], index: 2, kind: input, shape index: {}]
  %s3 = inlined_call_operand.vmem [shape: bf16[32,32], index: 3, kind: input, shape index: {}]
  %s4 = inlined_call_operand.vmem [shape: f32[1,32], index: 4, kind: input, shape index: {}]
  %s5 = inlined_call_operand.vmem [shape: f32[1,32], index: 5, kind: input, shape index: {}]
  %s6 = inlined_call_operand.vmem [shape: f32[1,32], index: 6, kind: input, shape index: {}]
  %s7 = inlined_call_operand.vmem [shape: bf16[32,64], index: 7, kind: input, shape index: {}]
  %s8 = inlined_call_operand.vmem [shape: f32[1,64], index: 8, kind: input, shape index: {}]
  %s9 = inlined_call_operand.vmem [shape: bf16[64,32], index: 9, kind: input, shape index: {}]
  %s10 = inlined_call_operand.vmem [shape: f32[1,32], index: 10, kind: input, shape index: {}]
  %s11 = inlined_call_operand.vmem [shape: f32[1,32], index: 11, kind: input, shape index: {}]
  %s12 = inlined_call_operand.vmem [shape: f32[1,32], index: 12, kind: input, shape index: {}]
  %s13 = inlined_call_operand.vmem [shape: f32[1,32], index: 13, kind: input, shape index: {}]
  %s14 = inlined_call_operand.vmem [shape: f32[1,32], index: 14, kind: input, shape index: {}]
  %s15 = inlined_call_operand.hbm [shape: f32[2,32,32], index: 15, kind: output, shape index: {}]
  %s16 = sld [smem:[#allocation0]]
  $region97: #{tpu_custom_call.1} parent=0
    _
  %s18 = ssub.s32 1, %s16
  %s19 = scalar_select 0, %s18, %s16
  $region1: #{tpu_custom_call.1} parent=0
    #allocation2 [shape = 'u8[8192]{0}', space=vmem, size = 0x2000, scoped, tag = 'input window, operand 0']
    #allocation3 [shape = 's32[2]{0}', space=sflag, size = 0x8, scoped, tag = 'scoped memory for tpu_custom_call.1']
    #allocation4 [shape = 's32[2]{0}', space=sflag, size = 0x8, scoped, tag = 'scoped memory for tpu_custom_call.1']
    #allocation5 [shape = 'u8[8192]{0}', space=vmem, size = 0x2000, scoped, tag = 'output window, operand 0']
    %20 = vsyncpa [#allocation3], 0
    %s21 = scalar_lea.sflag [#allocation3], 1
    %22 = vsyncpa %s21, 0
    %23 = vsyncpa [#allocation4], 0
    %s24 = scalar_lea.sflag [#allocation4], 1
    %25 = vsyncpa %s24, 0
    loop: start=0, step=1, limit=10
    $region2: #{tpu_custom_call.1} parent=1 // loop_pre_header
      _
    $region3: #{tpu_custom_call.1} parent=1 // loop_header
      %s27 = sphi 0, %s31
      %p28 = scmp.ge.s32.totalorder %s27, 10
      %s34 = sphi 0, %s46
      %s35 = sphi 0, %s42
      %s36 = sphi 0, %s34
      %s37 = sphi 0, %s35
      %s38 = sphi 0, %s36
      %s39 = sphi 0, %s37
      %s51 = sphi 0, %s53
      %s54 = sphi 0, %s51
      %s55 = sphi 0, %s54
      %s71 = sphi 0, %s55
      %s75 = sphi 0, %s75
      %s77 = sphi 0, %s75
      %s78 = sphi 0, %s77
      %s92 = sphi 0, %s78
      %s96 = sphi 0, %s96
      %s98 = sphi 0, %s96
      %s99 = sphi 0, %s98
      %s113 = sphi 0, %s99
      %s117 = sphi 0, %s117
      %s119 = sphi 0, %s117
      %s120 = sphi 0, %s119
      %s134 = sphi 0, %s120
      %s138 = sphi 0, %s138
      %s140 = sphi 0, %s138
      %s141 = sphi 0, %s140
      %s155 = sphi 0, %s141
      %s159 = sphi 0, %s159
      %s161 = sphi 0, %s159
      %s162 = sphi 0, %s161
      %s176 = sphi 0, %s162
      %s180 = sphi 0, %s180
      %s182 = sphi 0, %s180
      %s183 = sphi 0, %s182
      %s197 = sphi 0, %s183
      %s201 = sphi 0, %s201
      %s203 = sphi 0, %s201
      %s204 = sphi 0, %s203
      %s218 = sphi 0, %s204
      %s222 = sphi 0, %s222
      %s224 = sphi 0, %s222
      %s225 = sphi 0, %s224
      %s239 = sphi 0, %s225
      %s243 = sphi 0, %s243
      %s245 = sphi 0, %s243
      %s246 = sphi 0, %s245
      %s260 = sphi 0, %s246
      %s264 = sphi 0, %s264
      %s266 = sphi 0, %s264
      %s267 = sphi 0, %s266
      %s281 = sphi 0, %s267
      %s285 = sphi 0, %s285
      %s287 = sphi 0, %s285
      %s288 = sphi 0, %s287
      %s302 = sphi 0, %s288
      %s306 = sphi 0, %s306
      %s308 = sphi 0, %s306
      %s309 = sphi 0, %s308
      %s323 = sphi 0, %s309
      %s327 = sphi 0, %s327
      %s329 = sphi 0, %s327
      %s330 = sphi 0, %s329
      %s344 = sphi 0, %s330
      %s348 = sphi 0, %s348
      %s350 = sphi 0, %s348
      %s351 = sphi 0, %s350
      %s365 = sphi 0, %s351
      %s373 = sphi 0, %s375
      %s376 = sphi 0, %s373
      %s377 = sphi 0, %s376
      %s393 = sphi 0, %s377
    $region4: #{tpu_custom_call.1} parent=1 // loop_header_branch
      %30 = sbr.rel (%p28) target = $region8
    $region5: #{tpu_custom_call.1} parent=1 // loop_body
      %s32 = ssub.s32 %s27, 1
      %s33 = ssub.s32 %s27, 2
      %s40 = sadd.s32 1, %s35
      %p41 = scmp.ge.s32.totalorder %s40, 4
      %s42 = scalar_select %p41, 0, %s40
      %s43 = sadd.s32 1, %s34
      %s44 = scalar_select %p41, %s43, %s34
      %p45 = scmp.ge.s32.totalorder %s44, 2
      %s46 = scalar_select %p45, 0, %s44
      %s47 = ssub.s32 %s34, %s46
      %s48 = ssub.s32 %s35, %s42
      %s49 = sor.u32 %s47, %s48
      %p50 = scmp.eq.s32.totalorder %s49, 0
      %s52 = sadd.s32 %s51, 1
      %s53 = scalar_select %p50, %s51, %s52
      %p56 = pneg %p50
      %p57 = scmp.eq.s32.totalorder %s27, 7
      %p58 = por %p56, %p57
      %p59 = scmp.ne.s32.totalorder %s51, %s54
      %p60 = scmp.eq.s32.totalorder %s27, 0
      %p61 = por %p59, %p60
      %p62 = scmp.ne.s32.totalorder %s51, %s54
      %p63 = scmp.eq.s32.totalorder %s32, 7
      %p64 = por %p62, %p63
      %p65 = scmp.ne.s32.totalorder %s54, %s55
      %p66 = scmp.eq.s32.totalorder %s32, 0
      %p67 = por %p65, %p66
      %p68 = scmp.ne.s32.totalorder %s54, %s55
      %p69 = scmp.eq.s32.totalorder %s33, 7
      %p70 = por %p68, %p69
      %p72 = scmp.ne.s32.totalorder %s55, %s71
      %p73 = scmp.eq.s32.totalorder %s33, 0
      %p74 = por %p72, %p73
      %s76 = sadd.s32 %s75, 1
      %p79 = scmp.eq.s32.totalorder %s27, 7
      %p80 = scmp.ne.s32.totalorder %s75, %s77
      %p81 = scmp.eq.s32.totalorder %s27, 0
      %p82 = por %p80, %p81
      %p83 = scmp.ne.s32.totalorder %s75, %s77
      %p84 = scmp.eq.s32.totalorder %s32, 7
      %p85 = por %p83, %p84
      %p86 = scmp.ne.s32.totalorder %s77, %s78
      %p87 = scmp.eq.s32.totalorder %s32, 0
      %p88 = por %p86, %p87
      %p89 = scmp.ne.s32.totalorder %s77, %s78
      %p90 = scmp.eq.s32.totalorder %s33, 7
      %p91 = por %p89, %p90
      %p93 = scmp.ne.s32.totalorder %s78, %s92
      %p94 = scmp.eq.s32.totalorder %s33, 0
      %p95 = por %p93, %p94
      %s97 = sadd.s32 %s96, 1
      %p100 = scmp.eq.s32.totalorder %s27, 7
      %p101 = scmp.ne.s32.totalorder %s96, %s98
      %p102 = scmp.eq.s32.totalorder %s27, 0
      %p103 = por %p101, %p102
      %p104 = scmp.ne.s32.totalorder %s96, %s98
      %p105 = scmp.eq.s32.totalorder %s32, 7
      %p106 = por %p104, %p105
      %p107 = scmp.ne.s32.totalorder %s98, %s99
      %p108 = scmp.eq.s32.totalorder %s32, 0
      %p109 = por %p107, %p108
      %p110 = scmp.ne.s32.totalorder %s98, %s99
      %p111 = scmp.eq.s32.totalorder %s33, 7
      %p112 = por %p110, %p111
      %p114 = scmp.ne.s32.totalorder %s99, %s113
      %p115 = scmp.eq.s32.totalorder %s33, 0
      %p116 = por %p114, %p115
      %s118 = sadd.s32 %s117, 1
      %p121 = scmp.eq.s32.totalorder %s27, 7
      %p122 = scmp.ne.s32.totalorder %s117, %s119
      %p123 = scmp.eq.s32.totalorder %s27, 0
      %p124 = por %p122, %p123
      %p125 = scmp.ne.s32.totalorder %s117, %s119
      %p126 = scmp.eq.s32.totalorder %s32, 7
      %p127 = por %p125, %p126
      %p128 = scmp.ne.s32.totalorder %s119, %s120
      %p129 = scmp.eq.s32.totalorder %s32, 0
      %p130 = por %p128, %p129
      %p131 = scmp.ne.s32.totalorder %s119, %s120
      %p132 = scmp.eq.s32.totalorder %s33, 7
      %p133 = por %p131, %p132
      %p135 = scmp.ne.s32.totalorder %s120, %s134
      %p136 = scmp.eq.s32.totalorder %s33, 0
      %p137 = por %p135, %p136
      %s139 = sadd.s32 %s138, 1
      %p142 = scmp.eq.s32.totalorder %s27, 7
      %p143 = scmp.ne.s32.totalorder %s138, %s140
      %p144 = scmp.eq.s32.totalorder %s27, 0
      %p145 = por %p143, %p144
      %p146 = scmp.ne.s32.totalorder %s138, %s140
      %p147 = scmp.eq.s32.totalorder %s32, 7
      %p148 = por %p146, %p147
      %p149 = scmp.ne.s32.totalorder %s140, %s141
      %p150 = scmp.eq.s32.totalorder %s32, 0
      %p151 = por %p149, %p150
      %p152 = scmp.ne.s32.totalorder %s140, %s141
      %p153 = scmp.eq.s32.totalorder %s33, 7
      %p154 = por %p152, %p153
      %p156 = scmp.ne.s32.totalorder %s141, %s155
      %p157 = scmp.eq.s32.totalorder %s33, 0
      %p158 = por %p156, %p157
      %s160 = sadd.s32 %s159, 1
      %p163 = scmp.eq.s32.totalorder %s27, 7
      %p164 = scmp.ne.s32.totalorder %s159, %s161
      %p165 = scmp.eq.s32.totalorder %s27, 0
      %p166 = por %p164, %p165
      %p167 = scmp.ne.s32.totalorder %s159, %s161
      %p168 = scmp.eq.s32.totalorder %s32, 7
      %p169 = por %p167, %p168
      %p170 = scmp.ne.s32.totalorder %s161, %s162
      %p171 = scmp.eq.s32.totalorder %s32, 0
      %p172 = por %p170, %p171
      %p173 = scmp.ne.s32.totalorder %s161, %s162
      %p174 = scmp.eq.s32.totalorder %s33, 7
      %p175 = por %p173, %p174
      %p177 = scmp.ne.s32.totalorder %s162, %s176
      %p178 = scmp.eq.s32.totalorder %s33, 0
      %p179 = por %p177, %p178
      %s181 = sadd.s32 %s180, 1
      %p184 = scmp.eq.s32.totalorder %s27, 7
      %p185 = scmp.ne.s32.totalorder %s180, %s182
      %p186 = scmp.eq.s32.totalorder %s27, 0
      %p187 = por %p185, %p186
      %p188 = scmp.ne.s32.totalorder %s180, %s182
      %p189 = scmp.eq.s32.totalorder %s32, 7
      %p190 = por %p188, %p189
      %p191 = scmp.ne.s32.totalorder %s182, %s183
      %p192 = scmp.eq.s32.totalorder %s32, 0
      %p193 = por %p191, %p192
      %p194 = scmp.ne.s32.totalorder %s182, %s183
      %p195 = scmp.eq.s32.totalorder %s33, 7
      %p196 = por %p194, %p195
      %p198 = scmp.ne.s32.totalorder %s183, %s197
      %p199 = scmp.eq.s32.totalorder %s33, 0
      %p200 = por %p198, %p199
      %s202 = sadd.s32 %s201, 1
      %p205 = scmp.eq.s32.totalorder %s27, 7
      %p206 = scmp.ne.s32.totalorder %s201, %s203
      %p207 = scmp.eq.s32.totalorder %s27, 0
      %p208 = por %p206, %p207
      %p209 = scmp.ne.s32.totalorder %s201, %s203
      %p210 = scmp.eq.s32.totalorder %s32, 7
      %p211 = por %p209, %p210
      %p212 = scmp.ne.s32.totalorder %s203, %s204
      %p213 = scmp.eq.s32.totalorder %s32, 0
      %p214 = por %p212, %p213
      %p215 = scmp.ne.s32.totalorder %s203, %s204
      %p216 = scmp.eq.s32.totalorder %s33, 7
      %p217 = por %p215, %p216
      %p219 = scmp.ne.s32.totalorder %s204, %s218
      %p220 = scmp.eq.s32.totalorder %s33, 0
      %p221 = por %p219, %p220
      %s223 = sadd.s32 %s222, 1
      %p226 = scmp.eq.s32.totalorder %s27, 7
      %p227 = scmp.ne.s32.totalorder %s222, %s224
      %p228 = scmp.eq.s32.totalorder %s27, 0
      %p229 = por %p227, %p228
      %p230 = scmp.ne.s32.totalorder %s222, %s224
      %p231 = scmp.eq.s32.totalorder %s32, 7
      %p232 = por %p230, %p231
      %p233 = scmp.ne.s32.totalorder %s224, %s225
      %p234 = scmp.eq.s32.totalorder %s32, 0
      %p235 = por %p233, %p234
      %p236 = scmp.ne.s32.totalorder %s224, %s225
      %p237 = scmp.eq.s32.totalorder %s33, 7
      %p238 = por %p236, %p237
      %p240 = scmp.ne.s32.totalorder %s225, %s239
      %p241 = scmp.eq.s32.totalorder %s33, 0
      %p242 = por %p240, %p241
      %s244 = sadd.s32 %s243, 1
      %p247 = scmp.eq.s32.totalorder %s27, 7
      %p248 = scmp.ne.s32.totalorder %s243, %s245
      %p249 = scmp.eq.s32.totalorder %s27, 0
      %p250 = por %p248, %p249
      %p251 = scmp.ne.s32.totalorder %s243, %s245
      %p252 = scmp.eq.s32.totalorder %s32, 7
      %p253 = por %p251, %p252
      %p254 = scmp.ne.s32.totalorder %s245, %s246
      %p255 = scmp.eq.s32.totalorder %s32, 0
      %p256 = por %p254, %p255
      %p257 = scmp.ne.s32.totalorder %s245, %s246
      %p258 = scmp.eq.s32.totalorder %s33, 7
      %p259 = por %p257, %p258
      %p261 = scmp.ne.s32.totalorder %s246, %s260
      %p262 = scmp.eq.s32.totalorder %s33, 0
      %p263 = por %p261, %p262
      %s265 = sadd.s32 %s264, 1
      %p268 = scmp.eq.s32.totalorder %s27, 7
      %p269 = scmp.ne.s32.totalorder %s264, %s266
      %p270 = scmp.eq.s32.totalorder %s27, 0
      %p271 = por %p269, %p270
      %p272 = scmp.ne.s32.totalorder %s264, %s266
      %p273 = scmp.eq.s32.totalorder %s32, 7
      %p274 = por %p272, %p273
      %p275 = scmp.ne.s32.totalorder %s266, %s267
      %p276 = scmp.eq.s32.totalorder %s32, 0
      %p277 = por %p275, %p276
      %p278 = scmp.ne.s32.totalorder %s266, %s267
      %p279 = scmp.eq.s32.totalorder %s33, 7
      %p280 = por %p278, %p279
      %p282 = scmp.ne.s32.totalorder %s267, %s281
      %p283 = scmp.eq.s32.totalorder %s33, 0
      %p284 = por %p282, %p283
      %s286 = sadd.s32 %s285, 1
      %p289 = scmp.eq.s32.totalorder %s27, 7
      %p290 = scmp.ne.s32.totalorder %s285, %s287
      %p291 = scmp.eq.s32.totalorder %s27, 0
      %p292 = por %p290, %p291
      %p293 = scmp.ne.s32.totalorder %s285, %s287
      %p294 = scmp.eq.s32.totalorder %s32, 7
      %p295 = por %p293, %p294
      %p296 = scmp.ne.s32.totalorder %s287, %s288
      %p297 = scmp.eq.s32.totalorder %s32, 0
      %p298 = por %p296, %p297
      %p299 = scmp.ne.s32.totalorder %s287, %s288
      %p300 = scmp.eq.s32.totalorder %s33, 7
      %p301 = por %p299, %p300
      %p303 = scmp.ne.s32.totalorder %s288, %s302
      %p304 = scmp.eq.s32.totalorder %s33, 0
      %p305 = por %p303, %p304
      %s307 = sadd.s32 %s306, 1
      %p310 = scmp.eq.s32.totalorder %s27, 7
      %p311 = scmp.ne.s32.totalorder %s306, %s308
      %p312 = scmp.eq.s32.totalorder %s27, 0
      %p313 = por %p311, %p312
      %p314 = scmp.ne.s32.totalorder %s306, %s308
      %p315 = scmp.eq.s32.totalorder %s32, 7
      %p316 = por %p314, %p315
      %p317 = scmp.ne.s32.totalorder %s308, %s309
      %p318 = scmp.eq.s32.totalorder %s32, 0
      %p319 = por %p317, %p318
      %p320 = scmp.ne.s32.totalorder %s308, %s309
      %p321 = scmp.eq.s32.totalorder %s33, 7
      %p322 = por %p320, %p321
      %p324 = scmp.ne.s32.totalorder %s309, %s323
      %p325 = scmp.eq.s32.totalorder %s33, 0
      %p326 = por %p324, %p325
      %s328 = sadd.s32 %s327, 1
      %p331 = scmp.eq.s32.totalorder %s27, 7
      %p332 = scmp.ne.s32.totalorder %s327, %s329
      %p333 = scmp.eq.s32.totalorder %s27, 0
      %p334 = por %p332, %p333
      %p335 = scmp.ne.s32.totalorder %s327, %s329
      %p336 = scmp.eq.s32.totalorder %s32, 7
      %p337 = por %p335, %p336
      %p338 = scmp.ne.s32.totalorder %s329, %s330
      %p339 = scmp.eq.s32.totalorder %s32, 0
      %p340 = por %p338, %p339
      %p341 = scmp.ne.s32.totalorder %s329, %s330
      %p342 = scmp.eq.s32.totalorder %s33, 7
      %p343 = por %p341, %p342
      %p345 = scmp.ne.s32.totalorder %s330, %s344
      %p346 = scmp.eq.s32.totalorder %s33, 0
      %p347 = por %p345, %p346
      %s349 = sadd.s32 %s348, 1
      %p352 = scmp.eq.s32.totalorder %s27, 7
      %p353 = scmp.ne.s32.totalorder %s348, %s350
      %p354 = scmp.eq.s32.totalorder %s27, 0
      %p355 = por %p353, %p354
      %p356 = scmp.ne.s32.totalorder %s348, %s350
      %p357 = scmp.eq.s32.totalorder %s32, 7
      %p358 = por %p356, %p357
      %p359 = scmp.ne.s32.totalorder %s350, %s351
      %p360 = scmp.eq.s32.totalorder %s32, 0
      %p361 = por %p359, %p360
      %p362 = scmp.ne.s32.totalorder %s350, %s351
      %p363 = scmp.eq.s32.totalorder %s33, 7
      %p364 = por %p362, %p363
      %p366 = scmp.ne.s32.totalorder %s351, %s365
      %p367 = scmp.eq.s32.totalorder %s33, 0
      %p368 = por %p366, %p367
      %s369 = ssub.s32 %s34, %s46
      %s370 = ssub.s32 %s35, %s42
      %s371 = sor.u32 %s369, %s370
      %p372 = scmp.eq.s32.totalorder %s371, 0
      %s374 = sadd.s32 %s373, 1
      %s375 = scalar_select %p372, %s373, %s374
      %p378 = pneg %p372
      %p379 = scmp.eq.s32.totalorder %s27, 7
      %p380 = por %p378, %p379
      %p381 = scmp.ne.s32.totalorder %s373, %s376
      %p382 = scmp.eq.s32.totalorder %s27, 0
      %p383 = por %p381, %p382
      %p384 = scmp.ne.s32.totalorder %s373, %s376
      %p385 = scmp.eq.s32.totalorder %s32, 7
      %p386 = por %p384, %p385
      %p387 = scmp.ne.s32.totalorder %s376, %s377
      %p388 = scmp.eq.s32.totalorder %s32, 0
      %p389 = por %p387, %p388
      %p390 = scmp.ne.s32.totalorder %s376, %s377
      %p391 = scmp.eq.s32.totalorder %s33, 7
      %p392 = por %p390, %p391
      %p394 = scmp.ne.s32.totalorder %s377, %s393
      %p395 = scmp.eq.s32.totalorder %s33, 0
      %p396 = por %p394, %p395
      %p397 = scmp.le.s32.totalorder 1, %s27
      %p398 = scmp.lt.s32.totalorder %s27, 9
      %p399 = pnand %p397, %p398
      %p400 = pneg %p399
      // Predicated region
      $region9: #{tpu_custom_call.1} parent=5 // pred_check
        _
      $region10: #{tpu_custom_call.1} parent=5 // pred_check_branch
        %402 = sbr.rel (%p399) target = $region12
      $region11: #{tpu_custom_call.1} parent=5 // pred_region
        %s403 = ssub.s32 %s27, 1
        // Predicated region
        $region13: #{tpu_custom_call.1} parent=11 // pred_check
          %p404 = pneg %p88
        $region14: #{tpu_custom_call.1} parent=11 // pred_check_branch
          %406 = sbr.rel (%p404) target = $region16
        $region15: #{tpu_custom_call.1} parent=11 // pred_region
          _
        $region16: #{tpu_custom_call.1} parent=11 // pred_fallthru
          _
        // Predicated region
        $region17: #{tpu_custom_call.1} parent=11 // pred_check
          %p407 = pneg %p109
        $region18: #{tpu_custom_call.1} parent=11 // pred_check_branch
          %409 = sbr.rel (%p407) target = $region20
        $region19: #{tpu_custom_call.1} parent=11 // pred_region
          _
        $region20: #{tpu_custom_call.1} parent=11 // pred_fallthru
          _
        // Predicated region
        $region21: #{tpu_custom_call.1} parent=11 // pred_check
          %p410 = pneg %p130
        $region22: #{tpu_custom_call.1} parent=11 // pred_check_branch
          %412 = sbr.rel (%p410) target = $region24
        $region23: #{tpu_custom_call.1} parent=11 // pred_region
          _
        $region24: #{tpu_custom_call.1} parent=11 // pred_fallthru
          _
        // Predicated region
        $region25: #{tpu_custom_call.1} parent=11 // pred_check
          %p413 = pneg %p151
        $region26: #{tpu_custom_call.1} parent=11 // pred_check_branch
          %415 = sbr.rel (%p413) target = $region28
        $region27: #{tpu_custom_call.1} parent=11 // pred_region
          _
        $region28: #{tpu_custom_call.1} parent=11 // pred_fallthru
          _
        // Predicated region
        $region29: #{tpu_custom_call.1} parent=11 // pred_check
          %p416 = pneg %p172
        $region30: #{tpu_custom_call.1} parent=11 // pred_check_branch
          %418 = sbr.rel (%p416) target = $region32
        $region31: #{tpu_custom_call.1} parent=11 // pred_region
          _
        $region32: #{tpu_custom_call.1} parent=11 // pred_fallthru
          _
        // Predicated region
        $region33: #{tpu_custom_call.1} parent=11 // pred_check
          %p419 = pneg %p193
        $region34: #{tpu_custom_call.1} parent=11 // pred_check_branch
          %421 = sbr.rel (%p419) target = $region36
        $region35: #{tpu_custom_call.1} parent=11 // pred_region
          _
        $region36: #{tpu_custom_call.1} parent=11 // pred_fallthru
          _
        // Predicated region
        $region37: #{tpu_custom_call.1} parent=11 // pred_check
          %p422 = pneg %p214
        $region38: #{tpu_custom_call.1} parent=11 // pred_check_branch
          %424 = sbr.rel (%p422) target = $region40
        $region39: #{tpu_custom_call.1} parent=11 // pred_region
          _
        $region40: #{tpu_custom_call.1} parent=11 // pred_fallthru
          _
        // Predicated region
        $region41: #{tpu_custom_call.1} parent=11 // pred_check
          %p425 = pneg %p235
        $region42: #{tpu_custom_call.1} parent=11 // pred_check_branch
          %427 = sbr.rel (%p425) target = $region44
        $region43: #{tpu_custom_call.1} parent=11 // pred_region
          _
        $region44: #{tpu_custom_call.1} parent=11 // pred_fallthru
          _
        // Predicated region
        $region45: #{tpu_custom_call.1} parent=11 // pred_check
          %p428 = pneg %p256
        $region46: #{tpu_custom_call.1} parent=11 // pred_check_branch
          %430 = sbr.rel (%p428) target = $region48
        $region47: #{tpu_custom_call.1} parent=11 // pred_region
          _
        $region48: #{tpu_custom_call.1} parent=11 // pred_fallthru
          _
        // Predicated region
        $region49: #{tpu_custom_call.1} parent=11 // pred_check
          %p431 = pneg %p277
        $region50: #{tpu_custom_call.1} parent=11 // pred_check_branch
          %433 = sbr.rel (%p431) target = $region52
        $region51: #{tpu_custom_call.1} parent=11 // pred_region
          _
        $region52: #{tpu_custom_call.1} parent=11 // pred_fallthru
          _
        // Predicated region
        $region53: #{tpu_custom_call.1} parent=11 // pred_check
          %p434 = pneg %p298
        $region54: #{tpu_custom_call.1} parent=11 // pred_check_branch
          %436 = sbr.rel (%p434) target = $region56
        $region55: #{tpu_custom_call.1} parent=11 // pred_region
          _
        $region56: #{tpu_custom_call.1} parent=11 // pred_fallthru
          _
        // Predicated region
        $region57: #{tpu_custom_call.1} parent=11 // pred_check
          %p437 = pneg %p319
        $region58: #{tpu_custom_call.1} parent=11 // pred_check_branch
          %439 = sbr.rel (%p437) target = $region60
        $region59: #{tpu_custom_call.1} parent=11 // pred_region
          _
        $region60: #{tpu_custom_call.1} parent=11 // pred_fallthru
          _
        // Predicated region
        $region61: #{tpu_custom_call.1} parent=11 // pred_check
          %p440 = pneg %p340
        $region62: #{tpu_custom_call.1} parent=11 // pred_check_branch
          %442 = sbr.rel (%p440) target = $region64
        $region63: #{tpu_custom_call.1} parent=11 // pred_region
          _
        $region64: #{tpu_custom_call.1} parent=11 // pred_fallthru
          _
        // Predicated region
        $region65: #{tpu_custom_call.1} parent=11 // pred_check
          %p443 = pneg %p361
        $region66: #{tpu_custom_call.1} parent=11 // pred_check_branch
          %445 = sbr.rel (%p443) target = $region68
        $region67: #{tpu_custom_call.1} parent=11 // pred_region
          _
        $region68: #{tpu_custom_call.1} parent=11 // pred_fallthru
          _
      $region12: #{tpu_custom_call.1} parent=5 // pred_fallthru
        _
      %p446 = scmp.lt.s32.totalorder %s27, 8
      // Predicated region
      $region69: #{tpu_custom_call.1} parent=5 // pred_check
        %p447 = pneg %p446
      $region70: #{tpu_custom_call.1} parent=5 // pred_check_branch
        %449 = sbr.rel (%p447) target = $region72
      $region71: #{tpu_custom_call.1} parent=5 // pred_region
        // Predicated region
        $region73: #{tpu_custom_call.1} parent=71 // pred_check
          %p450 = pneg %p61
        $region74: #{tpu_custom_call.1} parent=71 // pred_check_branch
          %452 = sbr.rel (%p450) target = $region76
        $region75: #{tpu_custom_call.1} parent=71 // pred_region
          %s453 = sand.u32 %s51, 1
          %s454 = scalar_lea.sflag [#allocation3], %s453
          %s455 = sand.u32 %s51, 1
          %s456 = smul.addr %s455, 8
          %s457 = scalar_lea.vmem [#allocation2], %s456
          %459 = vsyncadd %s454, 0
          %s460 = smul.addr %s34, 4
          %s461 = sadd.s32 %s35, %s460
          %s462 = smul.addr %s461, 8
          %s463 = scalar_lea.hbm %s0, %s462
          %s465 = sshll.u32 %s463, 4
          %s466 = int_to_ptr.hbm [resolvable:$true] %s465
          %s467 = sshll.u32 %s457, 4
          %s468 = int_to_ptr.vmem [resolvable:$true] %s467
          %470 = dma.hbm_to_vmem [thread:$0]  %s466, 128, %s468, %s454
        $region76: #{tpu_custom_call.1} parent=71 // pred_fallthru
          _
      $region72: #{tpu_custom_call.1} parent=5 // pred_fallthru
        _
      %p471 = scmp.le.s32.totalorder 1, %s27
      %p472 = scmp.lt.s32.totalorder %s27, 9
      %p473 = pnand %p471, %p472
      %p474 = pneg %p473
      // Predicated region
      $region77: #{tpu_custom_call.1} parent=5 // pred_check
        _
      $region78: #{tpu_custom_call.1} parent=5 // pred_check_branch
        %476 = sbr.rel (%p473) target = $region80
      $region79: #{tpu_custom_call.1} parent=5 // pred_region
        %s477 = ssub.s32 %s27, 1
        %s478 = sand.u32 %s54, 1
        %s479 = scalar_lea.sflag [#allocation3], %s478
        %s480 = sand.u32 %s54, 1
        %s481 = smul.addr %s480, 8
        %s482 = scalar_lea.vmem [#allocation2], %s481
        // Predicated region
        $region81: #{tpu_custom_call.1} parent=79 // pred_check
          %p483 = pneg %p67
        $region82: #{tpu_custom_call.1} parent=79 // pred_check_branch
          %485 = sbr.rel (%p483) target = $region84
        $region83: #{tpu_custom_call.1} parent=79 // pred_region
          %487 = dma.done %s479, 128
        $region84: #{tpu_custom_call.1} parent=79 // pred_fallthru
          _
        %s488 = sand.u32 %s54, 1
        %s489 = scalar_lea.sflag [#allocation3], %s488
        %s490 = sand.u32 %s54, 1
        %s491 = smul.addr %s490, 8
        %s492 = scalar_lea.vmem [#allocation2], %s491
        %p493 = pneg %p67
        %p494 = pneg %p64
        %p495 = pneg %p88
        %p496 = pneg %p85
        %p497 = pneg %p109
        %p498 = pneg %p106
        %p499 = pneg %p130
        %p500 = pneg %p127
        %p501 = pneg %p151
        %p502 = pneg %p148
        %p503 = pneg %p172
        %p504 = pneg %p169
        %p505 = pneg %p193
        %p506 = pneg %p190
        %p507 = pneg %p214
        %p508 = pneg %p211
        %p509 = pneg %p235
        %p510 = pneg %p232
        %p511 = pneg %p256
        %p512 = pneg %p253
        %p513 = pneg %p277
        %p514 = pneg %p274
        %p515 = pneg %p298
        %p516 = pneg %p295
        %p517 = pneg %p319
        %p518 = pneg %p316
        %p519 = pneg %p340
        %p520 = pneg %p337
        %p521 = pneg %p361
        %p522 = pneg %p358
        %p523 = pneg %p389
        %p524 = pneg %p386
        %s525 = sand.u32 %s376, 1
        %s526 = scalar_lea.sflag [#allocation4], %s525
        %s527 = sand.u32 %s376, 1
        %s528 = smul.addr %s527, 8
        %s529 = scalar_lea.vmem [#allocation5], %s528
        %v531 = vld [vmem:[%s482] sm:$0xff]
        %v532 = vld [vmem:[%s13] sm:$0x1]
        %v533 = vld [vmem:[%s14] sm:$0x1]
        %vm534 = vcmask 261120
        %v535 = vsel %vm534, %v531, 0.0
        %536 = vadd.xlane.f32.xlu0 %v535
        %v537 = vpop.xlane.xlu0 %536
        %v538 = vrcp.pop 32.0
        %v539 = vmul.f32 32.0, %v538
        %v540 = vsub.f32 1.0, %v539
        %v541 = vmul.f32 %v538, %v540
        %v542 = vadd.f32 %v538, %v541
        %vm543 = vweird.f32 %v538
        %v544 = vsel %vm543, %v538, %v542
        %v545 = vmul.f32 %v537, %v544
        %v546 = vsub.f32 %v531, %v545
        %v547 = vmul.f32 %v546, %v546
        %v548 = vsel %vm534, %v547, 0.0
        %549 = vadd.xlane.f32.xlu0 %v548
        %v550 = vpop.xlane.xlu0 %549
        %v551 = vmul.f32 %v550, %v544
        %v552 = vadd.f32 %v551, 1e-05
        %v553 = vrsqrt.pop %v552
        %v554 = vmul.f32 %v553, %v552
        %v555 = vmul.f32 %v554, %v553
        %v556 = vmul.f32 0.5, %v555
        %v557 = vsub.f32 1.5, %v556
        %v558 = vmul.f32 %v553, %v557
        %vm559 = vweird.f32 %v552
        %vm560 = vweird.f32 %v553
        %vm561 = vmor %vm559, %vm560
        %v562 = vsel %vm561, %v553, %v558
        %v563 = vmul.f32 %v546, %v562
        %v565 = vperm.slane %v532, 0
        %v567 = vmul.f32 %v563, %v565
        %v569 = vperm.slane %v533, 0
        %v571 = vadd.f32 %v567, %v569
        %v572 = vpack.c.bf16 %v571, %v571
        %v573 = vld [vmem:[%s1] sm:$0xf]
        %v574 = vld [vmem:[%s1 + $0x4] sm:$0xf]
        %v575 = vld [vmem:[%s1 + $0x8] sm:$0xf]
        %v576 = vld [vmem:[%s1 + $0xc] sm:$0xf]
        %v577 = vld [vmem:[%s2] sm:$0x1]
        %v579 = vperm.slane %v577, 0
        %v585 = vunpack.c.l.b16 %v573
        %v586 = vunpack.c.l.b16 %v574
        %v587 = vunpack.c.l.b16 %v575
        %v588 = vunpack.c.l.b16 %v576
        %v589 = vpack.c.b16 %v586, %v585
        %v590 = vpack.c.b16 %v588, %v587
        %v594 = vsel %vm534, %v572, 0
        %596 = vmatpush.bf16.msra.mxu0 0
        %597 = vmatpush.bf16.msra.mxu0 0
        %598 = vmatpush.bf16.msra.mxu0 0
        %599 = vmatpush.bf16.msra.mxu0 0
        %600 = vmatpush.bf16.msra.mxu0 0
        %601 = vmatpush.bf16.msra.mxu0 0
        %602 = vmatpush.bf16.msra.mxu0 %v590
        %603 = vmatpush.bf16.msra.mxu0 %v589
        %604 = vmatmul.bf16.gmra.mxu0 %v594
        %v605 = vpop.f32.mrf.mxu0
        %v606 = vadd.f32 %v579, %v605
        %v607 = vpop.f32.mrf.mxu0
        %608 = vdwg.mxu0
        %v609 = vmul.f32 %v606, 0.35355338
        %611 = vrot.lane.b32.xlu0 %v606, 96
        %v612 = vpop.permute.xlu0 %611
        %vm613 = vcmask 64512
        %v615 = vsel %vm613, %v609, 0
        %v617 = vsel %vm613, %v612, 0
        %619 = vmatpush.xpose.msra.mxu0 0.0
        %620 = vmatpush.xpose.msra.mxu0 0.0
        %621 = vmatpush.xpose.msra.mxu0 0.0
        %622 = vmatpush.xpose.msra.mxu0 0.0
        %623 = vmatpush.xpose.msra.mxu0 0.0
        %624 = vmatpush.xpose.msra.mxu0 0.0
        %625 = vmatpush.xpose.msra.mxu0 0.0
        %626 = vmatpush.xpose.msra.mxu0 0.0
        %627 = vmatpush.xpose.msra.mxu0 0.0
        %628 = vmatpush.xpose.msra.mxu0 0.0
        %629 = vmatpush.xpose.msra.mxu0 0.0
        %630 = vmatpush.xpose.msra.mxu0 0.0
        %631 = vmatpush.xpose.msra.mxu0 0.0
        %632 = vmatpush.xpose.msra.mxu0 0.0
        %633 = vmatpush.xpose.msra.mxu0 0.0
        %634 = vmatpush.xpose.msra.mxu0 %v617
        %635 = vmatmul.f32.gmra.mxu0 %v615
        %v636 = vpop.f32.mrf.mxu0
        %v637 = vadd.f32 0.0, %v636
        %638 = vdwg.mxu0
        %v639 = vsel %vm613, %v637, -inf
        %640 = vmax.xlane.f32.xlu0 %v639
        %v641 = vpop.xlane.xlu0 %640
        %v642 = vsub.f32 %v637, %v641
        %v643 = vmul.f32 %v642, 1.442695
        %v644 = vpow.pop %v643
        %v645 = vsel %vm613, %v644, 0.0
        %646 = vadd.xlane.f32.xlu0 %v645
        %v647 = vpop.xlane.xlu0 %646
        %v648 = vrcp.pop %v647
        %v649 = vmul.f32 %v644, %v648
        %v650 = vpack.c.bf16 %v649, %v649
        %v651 = vpack.c.bf16 %v606, %v606
        %653 = vrot.lane.b32.xlu0 %v651, 64
        %v654 = vpop.permute.xlu0 %653
        %v656 = vsel %vm613, %v650, 0
        %vm658 = vcmask 1043456
        %v660 = vsel %vm658, %v654, 0
        %662 = vmatpush.bf16.msra.mxu0 0
        %663 = vmatpush.bf16.msra.mxu0 0
        %664 = vmatpush.bf16.msra.mxu0 0
        %665 = vmatpush.bf16.msra.mxu0 0
        %666 = vmatpush.bf16.msra.mxu0 0
        %667 = vmatpush.bf16.msra.mxu0 0
        %668 = vmatpush.bf16.msra.mxu0 0
        %669 = vmatpush.bf16.msra.mxu0 %v660
        %670 = vmatmul.bf16.gmra.mxu0 %v656
        %v671 = vpop.f32.mrf.mxu0
        %v672 = vadd.f32 0.0, %v671
        %v673 = vpop.f32.mrf.mxu0
        %674 = vdwg.mxu0
        %v675 = vpack.c.bf16 %v672, %v672
        %v676 = vld [vmem:[%s3] sm:$0xf]
        %677 = vrot.lane.b32.xlu0 %v609, 120
        %v678 = vpop.permute.xlu0 %677
        %679 = vrot.lane.b32.xlu0 %v606, 88
        %v680 = vpop.permute.xlu0 %679
        %v681 = vsel %vm613, %v678, 0
        %v683 = vsel %vm613, %v680, 0
        %685 = vmatpush.xpose.msra.mxu0 0.0
        %686 = vmatpush.xpose.msra.mxu0 0.0
        %687 = vmatpush.xpose.msra.mxu0 0.0
        %688 = vmatpush.xpose.msra.mxu0 0.0
        %689 = vmatpush.xpose.msra.mxu0 0.0
        %690 = vmatpush.xpose.msra.mxu0 0.0
        %691 = vmatpush.xpose.msra.mxu0 0.0
        %692 = vmatpush.xpose.msra.mxu0 0.0
        %693 = vmatpush.xpose.msra.mxu0 0.0
        %694 = vmatpush.xpose.msra.mxu0 0.0
        %695 = vmatpush.xpose.msra.mxu0 0.0
        %696 = vmatpush.xpose.msra.mxu0 0.0
        %697 = vmatpush.xpose.msra.mxu0 0.0
        %698 = vmatpush.xpose.msra.mxu0 0.0
        %699 = vmatpush.xpose.msra.mxu0 0.0
        %700 = vmatpush.xpose.msra.mxu0 %v683
        %701 = vmatmul.f32.gmra.mxu0 %v681
        %v702 = vpop.f32.mrf.mxu0
        %v703 = vadd.f32 0.0, %v702
        %704 = vdwg.mxu0
        %v705 = vsel %vm613, %v703, -inf
        %706 = vmax.xlane.f32.xlu0 %v705
        %v707 = vpop.xlane.xlu0 %706
        %v708 = vsub.f32 %v703, %v707
        %v709 = vmul.f32 %v708, 1.442695
        %v710 = vpow.pop %v709
        %v711 = vsel %vm613, %v710, 0.0
        %712 = vadd.xlane.f32.xlu0 %v711
        %v713 = vpop.xlane.xlu0 %712
        %v714 = vrcp.pop %v713
        %v715 = vmul.f32 %v710, %v714
        %v716 = vpack.c.bf16 %v715, %v715
        %717 = vrot.lane.b32.xlu0 %v651, 56
        %v718 = vpop.permute.xlu0 %717
        %v720 = vsel %vm613, %v716, 0
        %v723 = vsel %vm658, %v718, 0
        %725 = vmatpush.bf16.msra.mxu0 0
        %726 = vmatpush.bf16.msra.mxu0 0
        %727 = vmatpush.bf16.msra.mxu0 0
        %728 = vmatpush.bf16.msra.mxu0 0
        %729 = vmatpush.bf16.msra.mxu0 0
        %730 = vmatpush.bf16.msra.mxu0 0
        %731 = vmatpush.bf16.msra.mxu0 0
        %732 = vmatpush.bf16.msra.mxu0 %v723
        %733 = vmatmul.bf16.gmra.mxu0 %v720
        %v734 = vpop.f32.mrf.mxu0
        %v735 = vadd.f32 0.0, %v734
        %v736 = vpop.f32.mrf.mxu0
        %737 = vdwg.mxu0
        %v738 = vpack.c.bf16 %v735, %v735
        %v739 = vld [vmem:[%s3 + $0x4] sm:$0xf]
        %v741 = vsel %vm613, %v738, 0
        %v744 = vsel %vm658, %v739, 0
        %746 = vmatpush.bf16.msra.mxu0 0
        %747 = vmatpush.bf16.msra.mxu0 0
        %748 = vmatpush.bf16.msra.mxu0 0
        %749 = vmatpush.bf16.msra.mxu0 0
        %750 = vmatpush.bf16.msra.mxu0 0
        %751 = vmatpush.bf16.msra.mxu0 0
        %752 = vmatpush.bf16.msra.mxu0 0
        %753 = vmatpush.bf16.msra.mxu0 %v744
        %754 = vmatmul.bf16.gmra.mxu0 %v741
        %v755 = vpop.f32.mrf.mxu0
        %v756 = vadd.f32 0.0, %v755
        %v757 = vpop.f32.mrf.mxu0
        %758 = vdwg.mxu0
        %v760 = vsel %vm613, %v675, 0
        %v763 = vsel %vm658, %v676, 0
        %765 = vmatpush.bf16.msra.mxu0 0
        %766 = vmatpush.bf16.msra.mxu0 0
        %767 = vmatpush.bf16.msra.mxu0 0
        %768 = vmatpush.bf16.msra.mxu0 0
        %769 = vmatpush.bf16.msra.mxu0 0
        %770 = vmatpush.bf16.msra.mxu0 0
        %771 = vmatpush.bf16.msra.mxu0 0
        %772 = vmatpush.bf16.msra.mxu0 %v763
        %773 = vmatmul.bf16.gmra.mxu0 %v760
        %v774 = vpop.f32.mrf.mxu0
        %v775 = vadd.f32 %v756, %v774
        %v776 = vpop.f32.mrf.mxu0
        %777 = vdwg.mxu0
        %778 = vrot.lane.b32.xlu0 %v609, 112
        %v779 = vpop.permute.xlu0 %778
        %780 = vrot.lane.b32.xlu0 %v606, 80
        %v781 = vpop.permute.xlu0 %780
        %v782 = vsel %vm613, %v779, 0
        %v784 = vsel %vm613, %v781, 0
        %786 = vmatpush.xpose.msra.mxu0 0.0
        %787 = vmatpush.xpose.msra.mxu0 0.0
        %788 = vmatpush.xpose.msra.mxu0 0.0
        %789 = vmatpush.xpose.msra.mxu0 0.0
        %790 = vmatpush.xpose.msra.mxu0 0.0
        %791 = vmatpush.xpose.msra.mxu0 0.0
        %792 = vmatpush.xpose.msra.mxu0 0.0
        %793 = vmatpush.xpose.msra.mxu0 0.0
        %794 = vmatpush.xpose.msra.mxu0 0.0
        %795 = vmatpush.xpose.msra.mxu0 0.0
        %796 = vmatpush.xpose.msra.mxu0 0.0
        %797 = vmatpush.xpose.msra.mxu0 0.0
        %798 = vmatpush.xpose.msra.mxu0 0.0
        %799 = vmatpush.xpose.msra.mxu0 0.0
        %800 = vmatpush.xpose.msra.mxu0 0.0
        %801 = vmatpush.xpose.msra.mxu0 %v784
        %802 = vmatmul.f32.gmra.mxu0 %v782
        %v803 = vpop.f32.mrf.mxu0
        %v804 = vadd.f32 0.0, %v803
        %805 = vdwg.mxu0
        %v806 = vsel %vm613, %v804, -inf
        %807 = vmax.xlane.f32.xlu0 %v806
        %v808 = vpop.xlane.xlu0 %807
        %v809 = vsub.f32 %v804, %v808
        %v810 = vmul.f32 %v809, 1.442695
        %v811 = vpow.pop %v810
        %v812 = vsel %vm613, %v811, 0.0
        %813 = vadd.xlane.f32.xlu0 %v812
        %v814 = vpop.xlane.xlu0 %813
        %v815 = vrcp.pop %v814
        %v816 = vmul.f32 %v811, %v815
        %v817 = vpack.c.bf16 %v816, %v816
        %818 = vrot.lane.b32.xlu0 %v651, 48
        %v819 = vpop.permute.xlu0 %818
        %v821 = vsel %vm613, %v817, 0
        %v824 = vsel %vm658, %v819, 0
        %826 = vmatpush.bf16.msra.mxu0 0
        %827 = vmatpush.bf16.msra.mxu0 0
        %828 = vmatpush.bf16.msra.mxu0 0
        %829 = vmatpush.bf16.msra.mxu0 0
        %830 = vmatpush.bf16.msra.mxu0 0
        %831 = vmatpush.bf16.msra.mxu0 0
        %832 = vmatpush.bf16.msra.mxu0 0
        %833 = vmatpush.bf16.msra.mxu0 %v824
        %834 = vmatmul.bf16.gmra.mxu0 %v821
        %v835 = vpop.f32.mrf.mxu0
        %v836 = vadd.f32 0.0, %v835
        %v837 = vpop.f32.mrf.mxu0
        %838 = vdwg.mxu0
        %v839 = vpack.c.bf16 %v836, %v836
        %v840 = vld [vmem:[%s3 + $0x8] sm:$0xf]
        %v842 = vsel %vm613, %v839, 0
        %v845 = vsel %vm658, %v840, 0
        %847 = vmatpush.bf16.msra.mxu0 0
        %848 = vmatpush.bf16.msra.mxu0 0
        %849 = vmatpush.bf16.msra.mxu0 0
        %850 = vmatpush.bf16.msra.mxu0 0
        %851 = vmatpush.bf16.msra.mxu0 0
        %852 = vmatpush.bf16.msra.mxu0 0
        %853 = vmatpush.bf16.msra.mxu0 0
        %854 = vmatpush.bf16.msra.mxu0 %v845
        %855 = vmatmul.bf16.gmra.mxu0 %v842
        %v856 = vpop.f32.mrf.mxu0
        %v857 = vadd.f32 0.0, %v856
        %v858 = vpop.f32.mrf.mxu0
        %859 = vdwg.mxu0
        %v860 = vadd.f32 %v775, %v857
        %861 = vrot.lane.b32.xlu0 %v609, 104
        %v862 = vpop.permute.xlu0 %861
        %863 = vrot.lane.b32.xlu0 %v606, 72
        %v864 = vpop.permute.xlu0 %863
        %v865 = vsel %vm613, %v862, 0
        %v867 = vsel %vm613, %v864, 0
        %869 = vmatpush.xpose.msra.mxu0 0.0
        %870 = vmatpush.xpose.msra.mxu0 0.0
        %871 = vmatpush.xpose.msra.mxu0 0.0
        %872 = vmatpush.xpose.msra.mxu0 0.0
        %873 = vmatpush.xpose.msra.mxu0 0.0
        %874 = vmatpush.xpose.msra.mxu0 0.0
        %875 = vmatpush.xpose.msra.mxu0 0.0
        %876 = vmatpush.xpose.msra.mxu0 0.0
        %877 = vmatpush.xpose.msra.mxu0 0.0
        %878 = vmatpush.xpose.msra.mxu0 0.0
        %879 = vmatpush.xpose.msra.mxu0 0.0
        %880 = vmatpush.xpose.msra.mxu0 0.0
        %881 = vmatpush.xpose.msra.mxu0 0.0
        %882 = vmatpush.xpose.msra.mxu0 0.0
        %883 = vmatpush.xpose.msra.mxu0 0.0
        %884 = vmatpush.xpose.msra.mxu0 %v867
        %885 = vmatmul.f32.gmra.mxu0 %v865
        %v886 = vpop.f32.mrf.mxu0
        %v887 = vadd.f32 0.0, %v886
        %888 = vdwg.mxu0
        %v889 = vsel %vm613, %v887, -inf
        %890 = vmax.xlane.f32.xlu0 %v889
        %v891 = vpop.xlane.xlu0 %890
        %v892 = vsub.f32 %v887, %v891
        %v893 = vmul.f32 %v892, 1.442695
        %v894 = vpow.pop %v893
        %v895 = vsel %vm613, %v894, 0.0
        %896 = vadd.xlane.f32.xlu0 %v895
        %v897 = vpop.xlane.xlu0 %896
        %v898 = vrcp.pop %v897
        %v899 = vmul.f32 %v894, %v898
        %v900 = vpack.c.bf16 %v899, %v899
        %901 = vrot.lane.b32.xlu0 %v651, 40
        %v902 = vpop.permute.xlu0 %901
        %v904 = vsel %vm613, %v900, 0
        %v907 = vsel %vm658, %v902, 0
        %909 = vmatpush.bf16.msra.mxu0 0
        %910 = vmatpush.bf16.msra.mxu0 0
        %911 = vmatpush.bf16.msra.mxu0 0
        %912 = vmatpush.bf16.msra.mxu0 0
        %913 = vmatpush.bf16.msra.mxu0 0
        %914 = vmatpush.bf16.msra.mxu0 0
        %915 = vmatpush.bf16.msra.mxu0 0
        %916 = vmatpush.bf16.msra.mxu0 %v907
        %917 = vmatmul.bf16.gmra.mxu0 %v904
        %v918 = vpop.f32.mrf.mxu0
        %v919 = vadd.f32 0.0, %v918
        %v920 = vpop.f32.mrf.mxu0
        %921 = vdwg.mxu0
        %v922 = vpack.c.bf16 %v919, %v919
        %v923 = vld [vmem:[%s3 + $0xc] sm:$0xf]
        %v925 = vsel %vm613, %v922, 0
        %v928 = vsel %vm658, %v923, 0
        %930 = vmatpush.bf16.msra.mxu0 0
        %931 = vmatpush.bf16.msra.mxu0 0
        %932 = vmatpush.bf16.msra.mxu0 0
        %933 = vmatpush.bf16.msra.mxu0 0
        %934 = vmatpush.bf16.msra.mxu0 0
        %935 = vmatpush.bf16.msra.mxu0 0
        %936 = vmatpush.bf16.msra.mxu0 0
        %937 = vmatpush.bf16.msra.mxu0 %v928
        %938 = vmatmul.bf16.gmra.mxu0 %v925
        %v939 = vpop.f32.mrf.mxu0
        %v940 = vadd.f32 0.0, %v939
        %v941 = vpop.f32.mrf.mxu0
        %942 = vdwg.mxu0
        %v943 = vadd.f32 %v860, %v940
        %v944 = vadd.f32 %v571, %v943
        %v945 = vld [vmem:[%s4] sm:$0x1]
        %v947 = vperm.slane %v945, 0
        %v949 = vadd.f32 %v944, %v947
        %v950 = vld [vmem:[%s5] sm:$0x1]
        %v951 = vld [vmem:[%s6] sm:$0x1]
        %v952 = vsel %vm534, %v949, 0.0
        %953 = vadd.xlane.f32.xlu0 %v952
        %v954 = vpop.xlane.xlu0 %953
        %v955 = vmul.f32 %v954, %v544
        %v956 = vsub.f32 %v949, %v955
        %v957 = vmul.f32 %v956, %v956
        %v958 = vsel %vm534, %v957, 0.0
        %959 = vadd.xlane.f32.xlu0 %v958
        %v960 = vpop.xlane.xlu0 %959
        %v961 = vmul.f32 %v960, %v544
        %v962 = vadd.f32 %v961, 1e-05
        %v963 = vrsqrt.pop %v962
        %v964 = vmul.f32 %v963, %v962
        %v965 = vmul.f32 %v964, %v963
        %v966 = vmul.f32 0.5, %v965
        %v967 = vsub.f32 1.5, %v966
        %v968 = vmul.f32 %v963, %v967
        %vm969 = vweird.f32 %v962
        %vm970 = vweird.f32 %v963
        %vm971 = vmor %vm969, %vm970
        %v972 = vsel %vm971, %v963, %v968
        %v973 = vmul.f32 %v956, %v972
        %v975 = vperm.slane %v950, 0
        %v977 = vmul.f32 %v973, %v975
        %v979 = vperm.slane %v951, 0
        %v981 = vadd.f32 %v977, %v979
        %v982 = vpack.c.bf16 %v981, %v981
        %v983 = vld [vmem:[%s7] sm:$0xf]
        %v984 = vld [vmem:[%s7 + $0x4] sm:$0xf]
        %v985 = vld [vmem:[%s7 + $0x8] sm:$0xf]
        %v986 = vld [vmem:[%s7 + $0xc] sm:$0xf]
        %v987 = vld [vmem:[%s8] sm:$0x1]
        %v989 = vperm.slane %v987, 0
        %v995 = vunpack.c.l.b16 %v983
        %v996 = vunpack.c.l.b16 %v984
        %v997 = vunpack.c.l.b16 %v985
        %v998 = vunpack.c.l.b16 %v986
        %v999 = vpack.c.b16 %v996, %v995
        %v1000 = vpack.c.b16 %v998, %v997
        %v1004 = vsel %vm534, %v982, 0
        %1006 = vmatpush.bf16.msra.mxu0 0
        %1007 = vmatpush.bf16.msra.mxu0 0
        %1008 = vmatpush.bf16.msra.mxu0 0
        %1009 = vmatpush.bf16.msra.mxu0 0
        %1010 = vmatpush.bf16.msra.mxu0 0
        %1011 = vmatpush.bf16.msra.mxu0 0
        %1012 = vmatpush.bf16.msra.mxu0 %v1000
        %1013 = vmatpush.bf16.msra.mxu0 %v999
        %1014 = vmatmul.bf16.gmra.mxu0 %v1004
        %v1015 = vpop.f32.mrf.mxu0
        %v1016 = vadd.f32 %v989, %v1015
        %v1017 = vpop.f32.mrf.mxu0
        %1018 = vdwg.mxu0
        %v1019 = vmax.f32 %v1016, 0.0
        %v1020 = vpack.c.bf16 %v1019, %v1019
        %v1021 = vld [vmem:[%s9] sm:$0xf]
        %v1022 = vld [vmem:[%s9 + $0x4] sm:$0xf]
        %v1023 = vld [vmem:[%s9 + $0x8] sm:$0xf]
        %v1024 = vld [vmem:[%s9 + $0xc] sm:$0xf]
        %v1025 = vld [vmem:[%s9 + $0x10] sm:$0xf]
        %v1026 = vld [vmem:[%s9 + $0x14] sm:$0xf]
        %v1027 = vld [vmem:[%s9 + $0x18] sm:$0xf]
        %v1028 = vld [vmem:[%s9 + $0x1c] sm:$0xf]
        %v1029 = vld [vmem:[%s10] sm:$0x1]
        %v1031 = vperm.slane %v1029, 0
        %v1041 = vunpack.c.l.b16 %v1021
        %v1042 = vunpack.c.l.b16 %v1022
        %v1043 = vunpack.c.l.b16 %v1023
        %v1044 = vunpack.c.l.b16 %v1024
        %v1045 = vunpack.c.l.b16 %v1025
        %v1046 = vunpack.c.l.b16 %v1026
        %v1047 = vunpack.c.l.b16 %v1027
        %v1048 = vunpack.c.l.b16 %v1028
        %v1049 = vpack.c.b16 %v1042, %v1041
        %v1050 = vpack.c.b16 %v1044, %v1043
        %v1051 = vpack.c.b16 %v1046, %v1045
        %v1052 = vpack.c.b16 %v1048, %v1047
        %vm1057 = vcmask 523264
        %v1059 = vsel %vm1057, %v1020, 0
        %1061 = vmatpush.bf16.msra.mxu0 0
        %1062 = vmatpush.bf16.msra.mxu0 0
        %1063 = vmatpush.bf16.msra.mxu0 0
        %1064 = vmatpush.bf16.msra.mxu0 0
        %1065 = vmatpush.bf16.msra.mxu0 %v1052
        %1066 = vmatpush.bf16.msra.mxu0 %v1051
        %1067 = vmatpush.bf16.msra.mxu0 %v1050
        %1068 = vmatpush.bf16.msra.mxu0 %v1049
        %1069 = vmatmul.bf16.gmra.mxu0 %v1059
        %v1070 = vpop.f32.mrf.mxu0
        %v1071 = vadd.f32 %v1031, %v1070
        %v1072 = vpop.f32.mrf.mxu0
        %1073 = vdwg.mxu0
        %v1074 = vadd.f32 %v981, %v1071
        %v1075 = vld [vmem:[%s11] sm:$0x1]
        %v1076 = vld [vmem:[%s12] sm:$0x1]
        %v1077 = vsel %vm534, %v1074, 0.0
        %1078 = vadd.xlane.f32.xlu0 %v1077
        %v1079 = vpop.xlane.xlu0 %1078
        %v1080 = vmul.f32 %v1079, %v544
        %v1081 = vsub.f32 %v1074, %v1080
        %v1082 = vmul.f32 %v1081, %v1081
        %v1083 = vsel %vm534, %v1082, 0.0
        %1084 = vadd.xlane.f32.xlu0 %v1083
        %v1085 = vpop.xlane.xlu0 %1084
        %v1086 = vmul.f32 %v1085, %v544
        %v1087 = vadd.f32 %v1086, 1e-05
        %v1088 = vrsqrt.pop %v1087
        %v1089 = vmul.f32 %v1088, %v1087
        %v1090 = vmul.f32 %v1089, %v1088
        %v1091 = vmul.f32 0.5, %v1090
        %v1092 = vsub.f32 1.5, %v1091
        %v1093 = vmul.f32 %v1088, %v1092
        %vm1094 = vweird.f32 %v1087
        %vm1095 = vweird.f32 %v1088
        %vm1096 = vmor %vm1094, %vm1095
        %v1097 = vsel %vm1096, %v1088, %v1093
        %v1098 = vmul.f32 %v1081, %v1097
        %v1100 = vperm.slane %v1075, 0
        %v1102 = vmul.f32 %v1098, %v1100
        %v1104 = vperm.slane %v1076, 0
        %v1106 = vadd.f32 %v1102, %v1104
        %1107 = vst.msk [vmem:[%s529] sm:$0xff] %vm534, %v1106
        %s1108 = sand.u32 %s376, 1
        %s1109 = scalar_lea.sflag [#allocation4], %s1108
        %s1110 = sand.u32 %s376, 1
        %s1111 = smul.addr %s1110, 8
        %s1112 = scalar_lea.vmem [#allocation5], %s1111
        // Predicated region
        $region85: #{tpu_custom_call.1} parent=79 // pred_check
          %p1113 = pneg %p386
        $region86: #{tpu_custom_call.1} parent=79 // pred_check_branch
          %1115 = sbr.rel (%p1113) target = $region88
        $region87: #{tpu_custom_call.1} parent=79 // pred_region
          %1117 = vsyncadd %s1109, 0
          %s1118 = smul.addr %s36, 4
          %s1119 = sadd.s32 %s37, %s1118
          %s1120 = smul.addr %s1119, 8
          %s1121 = scalar_lea.hbm %s15, %s1120
          %s1123 = sshll.u32 %s1112, 4
          %s1124 = int_to_ptr.vmem [resolvable:$true] %s1123
          %s1125 = sshll.u32 %s1121, 4
          %s1126 = int_to_ptr.hbm [resolvable:$true] %s1125
          %1128 = dma.vmem_to_hbm [thread:$0]  %s1124, 128, %s1126, %s1109
        $region88: #{tpu_custom_call.1} parent=79 // pred_fallthru
          _
      $region80: #{tpu_custom_call.1} parent=5 // pred_fallthru
        _
      %p1129 = scmp.le.s32.totalorder 2, %s27
      // Predicated region
      $region89: #{tpu_custom_call.1} parent=5 // pred_check
        %p1130 = pneg %p1129
      $region90: #{tpu_custom_call.1} parent=5 // pred_check_branch
        %1132 = sbr.rel (%p1130) target = $region92
      $region91: #{tpu_custom_call.1} parent=5 // pred_region
        %s1133 = ssub.s32 %s27, 2
        // Predicated region
        $region93: #{tpu_custom_call.1} parent=91 // pred_check
          %p1134 = pneg %p392
        $region94: #{tpu_custom_call.1} parent=91 // pred_check_branch
          %1136 = sbr.rel (%p1134) target = $region96
        $region95: #{tpu_custom_call.1} parent=91 // pred_region
          %s1137 = sand.u32 %s377, 1
          %s1138 = scalar_lea.sflag [#allocation4], %s1137
          %s1139 = sand.u32 %s377, 1
          %s1140 = smul.addr %s1139, 8
          %s1141 = scalar_lea.vmem [#allocation5], %s1140
          %1143 = dma.done %s1138, 128
        $region96: #{tpu_custom_call.1} parent=91 // pred_fallthru
          _
      $region92: #{tpu_custom_call.1} parent=5 // pred_fallthru
        _
    $region6: #{tpu_custom_call.1} parent=1 // loop_footer
      %s31 = sadd.s32 1, %s27
    $region7: #{tpu_custom_call.1} parent=1 // loop_footer_branch
      %26 = sbr.rel target = $region3
    $region8: #{tpu_custom_call.1} parent=1 // loop_exit
      _
    %1144 = vsyncpa [#allocation3], 1
    %s1145 = scalar_lea.sflag [#allocation3], 1
    %1146 = vsyncpa %s1145, 1
    %1147 = vsyncpa [#allocation4], 1
    %s1148 = scalar_lea.sflag [#allocation4], 1
    %1149 = vsyncpa %s1148, 1

// kernel: tpu_custom_call.1
$region0: #{tpu_custom_call.1}
  #allocation0 [shape = 'u32[]', space=smem, size = 0x4, offset = 0x4, fixed_abs, tag = 'smem constant byte address 0x4 - core index']
  #allocation1 [shape = 'u32[72,128]{1,0:T(1,128)}', space=vmem, size = 0x9000, scoped, tag = 'internal scratch']
  %s0 = inlined_call_operand.hbm [shape: f32[2,32,32], index: 0, kind: input, shape index: {}]
  %s1 = inlined_call_operand.vmem [shape: bf16[32,96], index: 1, kind: input, shape index: {}]
  %s2 = inlined_call_operand.vmem [shape: f32[1,96], index: 2, kind: input, shape index: {}]
  %s3 = inlined_call_operand.vmem [shape: bf16[32,32], index: 3, kind: input, shape index: {}]
  %s4 = inlined_call_operand.vmem [shape: f32[1,32], index: 4, kind: input, shape index: {}]
  %s5 = inlined_call_operand.vmem [shape: f32[1,32], index: 5, kind: input, shape index: {}]
  %s6 = inlined_call_operand.vmem [shape: f32[1,32], index: 6, kind: input, shape index: {}]
  %s7 = inlined_call_operand.vmem [shape: bf16[32,64], index: 7, kind: input, shape index: {}]
  %s8 = inlined_call_operand.vmem [shape: f32[1,64], index: 8, kind: input, shape index: {}]
  %s9 = inlined_call_operand.vmem [shape: bf16[64,32], index: 9, kind: input, shape index: {}]
  %s10 = inlined_call_operand.vmem [shape: f32[1,32], index: 10, kind: input, shape index: {}]
  %s11 = inlined_call_operand.vmem [shape: f32[1,32], index: 11, kind: input, shape index: {}]
  %s12 = inlined_call_operand.vmem [shape: f32[1,32], index: 12, kind: input, shape index: {}]
  %s13 = inlined_call_operand.vmem [shape: f32[1,32], index: 13, kind: input, shape index: {}]
  %s14 = inlined_call_operand.vmem [shape: f32[1,32], index: 14, kind: input, shape index: {}]
  %s15 = inlined_call_operand.hbm [shape: f32[2,32,32], index: 15, kind: output, shape index: {}]
  %s16 = sld [smem:[#allocation0]]
  $region97: #{tpu_custom_call.1} parent=0
    _
  %s18 = ssub.s32 1, %s16
  %s19 = scalar_select 0, %s18, %s16
  $region1: #{tpu_custom_call.1} parent=0
    #allocation2 [shape = 'u8[8192]{0}', space=vmem, size = 0x2000, scoped, tag = 'input window, operand 0']
    #allocation3 [shape = 's32[2]{0}', space=sflag, size = 0x8, scoped, tag = 'scoped memory for tpu_custom_call.1']
    #allocation4 [shape = 's32[2]{0}', space=sflag, size = 0x8, scoped, tag = 'scoped memory for tpu_custom_call.1']
    #allocation5 [shape = 'u8[8192]{0}', space=vmem, size = 0x2000, scoped, tag = 'output window, operand 0']
    %20 = vsyncpa [#allocation3], 0
    %s21 = scalar_lea.sflag [#allocation3], 1
    %22 = vsyncpa %s21, 0
    %23 = vsyncpa [#allocation4], 0
    %s24 = scalar_lea.sflag [#allocation4], 1
    %25 = vsyncpa %s24, 0
    loop: start=0, step=1, limit=10
    $region2: #{tpu_custom_call.1} parent=1 // loop_pre_header
      _
    $region3: #{tpu_custom_call.1} parent=1 // loop_header
      %s27 = sphi 0, %s31
      %p28 = scmp.ge.s32.totalorder %s27, 10
      %s34 = sphi 0, %s46
      %s35 = sphi 0, %s42
      %s36 = sphi 0, %s34
      %s37 = sphi 0, %s35
      %s38 = sphi 0, %s36
      %s39 = sphi 0, %s37
      %s51 = sphi 0, %s53
      %s54 = sphi 0, %s51
      %s55 = sphi 0, %s54
      %s71 = sphi 0, %s55
      %s75 = sphi 0, %s75
      %s77 = sphi 0, %s75
      %s78 = sphi 0, %s77
      %s92 = sphi 0, %s78
      %s96 = sphi 0, %s96
      %s98 = sphi 0, %s96
      %s99 = sphi 0, %s98
      %s113 = sphi 0, %s99
      %s117 = sphi 0, %s117
      %s119 = sphi 0, %s117
      %s120 = sphi 0, %s119
      %s134 = sphi 0, %s120
      %s138 = sphi 0, %s138
      %s140 = sphi 0, %s138
      %s141 = sphi 0, %s140
      %s155 = sphi 0, %s141
      %s159 = sphi 0, %s159
      %s161 = sphi 0, %s159
      %s162 = sphi 0, %s161
      %s176 = sphi 0, %s162
      %s180 = sphi 0, %s180
      %s182 = sphi 0, %s180
      %s183 = sphi 0, %s182
      %s197 = sphi 0, %s183
      %s201 = sphi 0, %s201
      %s203 = sphi 0, %s201
      %s204 = sphi 0, %s203
      %s218 = sphi 0, %s204
      %s222 = sphi 0, %s222
      %s224 = sphi 0, %s222
      %s225 = sphi 0, %s224
      %s239 = sphi 0, %s225
      %s243 = sphi 0, %s243
      %s245 = sphi 0, %s243
      %s246 = sphi 0, %s245
      %s260 = sphi 0, %s246
      %s264 = sphi 0, %s264
      %s266 = sphi 0, %s264
      %s267 = sphi 0, %s266
      %s281 = sphi 0, %s267
      %s285 = sphi 0, %s285
      %s287 = sphi 0, %s285
      %s288 = sphi 0, %s287
      %s302 = sphi 0, %s288
      %s306 = sphi 0, %s306
      %s308 = sphi 0, %s306
      %s309 = sphi 0, %s308
      %s323 = sphi 0, %s309
      %s327 = sphi 0, %s327
      %s329 = sphi 0, %s327
      %s330 = sphi 0, %s329
      %s344 = sphi 0, %s330
      %s348 = sphi 0, %s348
      %s350 = sphi 0, %s348
      %s351 = sphi 0, %s350
      %s365 = sphi 0, %s351
      %s373 = sphi 0, %s375
      %s376 = sphi 0, %s373
      %s377 = sphi 0, %s376
      %s393 = sphi 0, %s377
    $region4: #{tpu_custom_call.1} parent=1 // loop_header_branch
      %30 = sbr.rel (%p28) target = $region8
    $region5: #{tpu_custom_call.1} parent=1 // loop_body
      %s32 = ssub.s32 %s27, 1
      %s33 = ssub.s32 %s27, 2
      %s40 = sadd.s32 1, %s35
      %p41 = scmp.ge.s32.totalorder %s40, 4
      %s42 = scalar_select %p41, 0, %s40
      %s43 = sadd.s32 1, %s34
      %s44 = scalar_select %p41, %s43, %s34
      %p45 = scmp.ge.s32.totalorder %s44, 2
      %s46 = scalar_select %p45, 0, %s44
      %s47 = ssub.s32 %s34, %s46
      %s48 = ssub.s32 %s35, %s42
      %s49 = sor.u32 %s47, %s48
      %p50 = scmp.eq.s32.totalorder %s49, 0
      %s52 = sadd.s32 %s51, 1
      %s53 = scalar_select %p50, %s51, %s52
      %p56 = pneg %p50
      %p57 = scmp.eq.s32.totalorder %s27, 7
      %p58 = por %p56, %p57
      %p59 = scmp.ne.s32.totalorder %s51, %s54
      %p60 = scmp.eq.s32.totalorder %s27, 0
      %p61 = por %p59, %p60
      %p62 = scmp.ne.s32.totalorder %s51, %s54
      %p63 = scmp.eq.s32.totalorder %s32, 7
      %p64 = por %p62, %p63
      %p65 = scmp.ne.s32.totalorder %s54, %s55
      %p66 = scmp.eq.s32.totalorder %s32, 0
      %p67 = por %p65, %p66
      %p68 = scmp.ne.s32.totalorder %s54, %s55
      %p69 = scmp.eq.s32.totalorder %s33, 7
      %p70 = por %p68, %p69
      %p72 = scmp.ne.s32.totalorder %s55, %s71
      %p73 = scmp.eq.s32.totalorder %s33, 0
      %p74 = por %p72, %p73
      %s76 = sadd.s32 %s75, 1
      %p79 = scmp.eq.s32.totalorder %s27, 7
      %p80 = scmp.ne.s32.totalorder %s75, %s77
      %p81 = scmp.eq.s32.totalorder %s27, 0
      %p82 = por %p80, %p81
      %p83 = scmp.ne.s32.totalorder %s75, %s77
      %p84 = scmp.eq.s32.totalorder %s32, 7
      %p85 = por %p83, %p84
      %p86 = scmp.ne.s32.totalorder %s77, %s78
      %p87 = scmp.eq.s32.totalorder %s32, 0
      %p88 = por %p86, %p87
      %p89 = scmp.ne.s32.totalorder %s77, %s78
      %p90 = scmp.eq.s32.totalorder %s33, 7
      %p91 = por %p89, %p90
      %p93 = scmp.ne.s32.totalorder %s78, %s92
      %p94 = scmp.eq.s32.totalorder %s33, 0
      %p95 = por %p93, %p94
      %s97 = sadd.s32 %s96, 1
      %p100 = scmp.eq.s32.totalorder %s27, 7
      %p101 = scmp.ne.s32.totalorder %s96, %s98
      %p102 = scmp.eq.s32.totalorder %s27, 0
      %p103 = por %p101, %p102
      %p104 = scmp.ne.s32.totalorder %s96, %s98
      %p105 = scmp.eq.s32.totalorder %s32, 7
      %p106 = por %p104, %p105
      %p107 = scmp.ne.s32.totalorder %s98, %s99
      %p108 = scmp.eq.s32.totalorder %s32, 0
      %p109 = por %p107, %p108
      %p110 = scmp.ne.s32.totalorder %s98, %s99
      %p111 = scmp.eq.s32.totalorder %s33, 7
      %p112 = por %p110, %p111
      %p114 = scmp.ne.s32.totalorder %s99, %s113
      %p115 = scmp.eq.s32.totalorder %s33, 0
      %p116 = por %p114, %p115
      %s118 = sadd.s32 %s117, 1
      %p121 = scmp.eq.s32.totalorder %s27, 7
      %p122 = scmp.ne.s32.totalorder %s117, %s119
      %p123 = scmp.eq.s32.totalorder %s27, 0
      %p124 = por %p122, %p123
      %p125 = scmp.ne.s32.totalorder %s117, %s119
      %p126 = scmp.eq.s32.totalorder %s32, 7
      %p127 = por %p125, %p126
      %p128 = scmp.ne.s32.totalorder %s119, %s120
      %p129 = scmp.eq.s32.totalorder %s32, 0
      %p130 = por %p128, %p129
      %p131 = scmp.ne.s32.totalorder %s119, %s120
      %p132 = scmp.eq.s32.totalorder %s33, 7
      %p133 = por %p131, %p132
      %p135 = scmp.ne.s32.totalorder %s120, %s134
      %p136 = scmp.eq.s32.totalorder %s33, 0
      %p137 = por %p135, %p136
      %s139 = sadd.s32 %s138, 1
      %p142 = scmp.eq.s32.totalorder %s27, 7
      %p143 = scmp.ne.s32.totalorder %s138, %s140
      %p144 = scmp.eq.s32.totalorder %s27, 0
      %p145 = por %p143, %p144
      %p146 = scmp.ne.s32.totalorder %s138, %s140
      %p147 = scmp.eq.s32.totalorder %s32, 7
      %p148 = por %p146, %p147
      %p149 = scmp.ne.s32.totalorder %s140, %s141
      %p150 = scmp.eq.s32.totalorder %s32, 0
      %p151 = por %p149, %p150
      %p152 = scmp.ne.s32.totalorder %s140, %s141
      %p153 = scmp.eq.s32.totalorder %s33, 7
      %p154 = por %p152, %p153
      %p156 = scmp.ne.s32.totalorder %s141, %s155
      %p157 = scmp.eq.s32.totalorder %s33, 0
      %p158 = por %p156, %p157
      %s160 = sadd.s32 %s159, 1
      %p163 = scmp.eq.s32.totalorder %s27, 7
      %p164 = scmp.ne.s32.totalorder %s159, %s161
      %p165 = scmp.eq.s32.totalorder %s27, 0
      %p166 = por %p164, %p165
      %p167 = scmp.ne.s32.totalorder %s159, %s161
      %p168 = scmp.eq.s32.totalorder %s32, 7
      %p169 = por %p167, %p168
      %p170 = scmp.ne.s32.totalorder %s161, %s162
      %p171 = scmp.eq.s32.totalorder %s32, 0
      %p172 = por %p170, %p171
      %p173 = scmp.ne.s32.totalorder %s161, %s162
      %p174 = scmp.eq.s32.totalorder %s33, 7
      %p175 = por %p173, %p174
      %p177 = scmp.ne.s32.totalorder %s162, %s176
      %p178 = scmp.eq.s32.totalorder %s33, 0
      %p179 = por %p177, %p178
      %s181 = sadd.s32 %s180, 1
      %p184 = scmp.eq.s32.totalorder %s27, 7
      %p185 = scmp.ne.s32.totalorder %s180, %s182
      %p186 = scmp.eq.s32.totalorder %s27, 0
      %p187 = por %p185, %p186
      %p188 = scmp.ne.s32.totalorder %s180, %s182
      %p189 = scmp.eq.s32.totalorder %s32, 7
      %p190 = por %p188, %p189
      %p191 = scmp.ne.s32.totalorder %s182, %s183
      %p192 = scmp.eq.s32.totalorder %s32, 0
      %p193 = por %p191, %p192
      %p194 = scmp.ne.s32.totalorder %s182, %s183
      %p195 = scmp.eq.s32.totalorder %s33, 7
      %p196 = por %p194, %p195
      %p198 = scmp.ne.s32.totalorder %s183, %s197
      %p199 = scmp.eq.s32.totalorder %s33, 0
      %p200 = por %p198, %p199
      %s202 = sadd.s32 %s201, 1
      %p205 = scmp.eq.s32.totalorder %s27, 7
      %p206 = scmp.ne.s32.totalorder %s201, %s203
      %p207 = scmp.eq.s32.totalorder %s27, 0
      %p208 = por %p206, %p207
      %p209 = scmp.ne.s32.totalorder %s201, %s203
      %p210 = scmp.eq.s32.totalorder %s32, 7
      %p211 = por %p209, %p210
      %p212 = scmp.ne.s32.totalorder %s203, %s204
      %p213 = scmp.eq.s32.totalorder %s32, 0
      %p214 = por %p212, %p213
      %p215 = scmp.ne.s32.totalorder %s203, %s204
      %p216 = scmp.eq.s32.totalorder %s33, 7
      %p217 = por %p215, %p216
      %p219 = scmp.ne.s32.totalorder %s204, %s218
      %p220 = scmp.eq.s32.totalorder %s33, 0
      %p221 = por %p219, %p220
      %s223 = sadd.s32 %s222, 1
      %p226 = scmp.eq.s32.totalorder %s27, 7
      %p227 = scmp.ne.s32.totalorder %s222, %s224
      %p228 = scmp.eq.s32.totalorder %s27, 0
      %p229 = por %p227, %p228
      %p230 = scmp.ne.s32.totalorder %s222, %s224
      %p231 = scmp.eq.s32.totalorder %s32, 7
      %p232 = por %p230, %p231
      %p233 = scmp.ne.s32.totalorder %s224, %s225
      %p234 = scmp.eq.s32.totalorder %s32, 0
      %p235 = por %p233, %p234
      %p236 = scmp.ne.s32.totalorder %s224, %s225
      %p237 = scmp.eq.s32.totalorder %s33, 7
      %p238 = por %p236, %p237
      %p240 = scmp.ne.s32.totalorder %s225, %s239
      %p241 = scmp.eq.s32.totalorder %s33, 0
      %p242 = por %p240, %p241
      %s244 = sadd.s32 %s243, 1
      %p247 = scmp.eq.s32.totalorder %s27, 7
      %p248 = scmp.ne.s32.totalorder %s243, %s245
      %p249 = scmp.eq.s32.totalorder %s27, 0
      %p250 = por %p248, %p249
      %p251 = scmp.ne.s32.totalorder %s243, %s245
      %p252 = scmp.eq.s32.totalorder %s32, 7
      %p253 = por %p251, %p252
      %p254 = scmp.ne.s32.totalorder %s245, %s246
      %p255 = scmp.eq.s32.totalorder %s32, 0
      %p256 = por %p254, %p255
      %p257 = scmp.ne.s32.totalorder %s245, %s246
      %p258 = scmp.eq.s32.totalorder %s33, 7
      %p259 = por %p257, %p258
      %p261 = scmp.ne.s32.totalorder %s246, %s260
      %p262 = scmp.eq.s32.totalorder %s33, 0
      %p263 = por %p261, %p262
      %s265 = sadd.s32 %s264, 1
      %p268 = scmp.eq.s32.totalorder %s27, 7
      %p269 = scmp.ne.s32.totalorder %s264, %s266
      %p270 = scmp.eq.s32.totalorder %s27, 0
      %p271 = por %p269, %p270
      %p272 = scmp.ne.s32.totalorder %s264, %s266
      %p273 = scmp.eq.s32.totalorder %s32, 7
      %p274 = por %p272, %p273
      %p275 = scmp.ne.s32.totalorder %s266, %s267
      %p276 = scmp.eq.s32.totalorder %s32, 0
      %p277 = por %p275, %p276
      %p278 = scmp.ne.s32.totalorder %s266, %s267
      %p279 = scmp.eq.s32.totalorder %s33, 7
      %p280 = por %p278, %p279
      %p282 = scmp.ne.s32.totalorder %s267, %s281
      %p283 = scmp.eq.s32.totalorder %s33, 0
      %p284 = por %p282, %p283
      %s286 = sadd.s32 %s285, 1
      %p289 = scmp.eq.s32.totalorder %s27, 7
      %p290 = scmp.ne.s32.totalorder %s285, %s287
      %p291 = scmp.eq.s32.totalorder %s27, 0
      %p292 = por %p290, %p291
      %p293 = scmp.ne.s32.totalorder %s285, %s287
      %p294 = scmp.eq.s32.totalorder %s32, 7
      %p295 = por %p293, %p294
      %p296 = scmp.ne.s32.totalorder %s287, %s288
      %p297 = scmp.eq.s32.totalorder %s32, 0
      %p298 = por %p296, %p297
      %p299 = scmp.ne.s32.totalorder %s287, %s288
      %p300 = scmp.eq.s32.totalorder %s33, 7
      %p301 = por %p299, %p300
      %p303 = scmp.ne.s32.totalorder %s288, %s302
      %p304 = scmp.eq.s32.totalorder %s33, 0
      %p305 = por %p303, %p304
      %s307 = sadd.s32 %s306, 1
      %p310 = scmp.eq.s32.totalorder %s27, 7
      %p311 = scmp.ne.s32.totalorder %s306, %s308
      %p312 = scmp.eq.s32.totalorder %s27, 0
      %p313 = por %p311, %p312
      %p314 = scmp.ne.s32.totalorder %s306, %s308
      %p315 = scmp.eq.s32.totalorder %s32, 7
      %p316 = por %p314, %p315
      %p317 = scmp.ne.s32.totalorder %s308, %s309
      %p318 = scmp.eq.s32.totalorder %s32, 0
      %p319 = por %p317, %p318
      %p320 = scmp.ne.s32.totalorder %s308, %s309
      %p321 = scmp.eq.s32.totalorder %s33, 7
      %p322 = por %p320, %p321
      %p324 = scmp.ne.s32.totalorder %s309, %s323
      %p325 = scmp.eq.s32.totalorder %s33, 0
      %p326 = por %p324, %p325
      %s328 = sadd.s32 %s327, 1
      %p331 = scmp.eq.s32.totalorder %s27, 7
      %p332 = scmp.ne.s32.totalorder %s327, %s329
      %p333 = scmp.eq.s32.totalorder %s27, 0
      %p334 = por %p332, %p333
      %p335 = scmp.ne.s32.totalorder %s327, %s329
      %p336 = scmp.eq.s32.totalorder %s32, 7
      %p337 = por %p335, %p336
      %p338 = scmp.ne.s32.totalorder %s329, %s330
      %p339 = scmp.eq.s32.totalorder %s32, 0
      %p340 = por %p338, %p339
      %p341 = scmp.ne.s32.totalorder %s329, %s330
      %p342 = scmp.eq.s32.totalorder %s33, 7
      %p343 = por %p341, %p342
      %p345 = scmp.ne.s32.totalorder %s330, %s344
      %p346 = scmp.eq.s32.totalorder %s33, 0
      %p347 = por %p345, %p346
      %s349 = sadd.s32 %s348, 1
      %p352 = scmp.eq.s32.totalorder %s27, 7
      %p353 = scmp.ne.s32.totalorder %s348, %s350
      %p354 = scmp.eq.s32.totalorder %s27, 0
      %p355 = por %p353, %p354
      %p356 = scmp.ne.s32.totalorder %s348, %s350
      %p357 = scmp.eq.s32.totalorder %s32, 7
      %p358 = por %p356, %p357
      %p359 = scmp.ne.s32.totalorder %s350, %s351
      %p360 = scmp.eq.s32.totalorder %s32, 0
      %p361 = por %p359, %p360
      %p362 = scmp.ne.s32.totalorder %s350, %s351
      %p363 = scmp.eq.s32.totalorder %s33, 7
      %p364 = por %p362, %p363
      %p366 = scmp.ne.s32.totalorder %s351, %s365
      %p367 = scmp.eq.s32.totalorder %s33, 0
      %p368 = por %p366, %p367
      %s369 = ssub.s32 %s34, %s46
      %s370 = ssub.s32 %s35, %s42
      %s371 = sor.u32 %s369, %s370
      %p372 = scmp.eq.s32.totalorder %s371, 0
      %s374 = sadd.s32 %s373, 1
      %s375 = scalar_select %p372, %s373, %s374
      %p378 = pneg %p372
      %p379 = scmp.eq.s32.totalorder %s27, 7
      %p380 = por %p378, %p379
      %p381 = scmp.ne.s32.totalorder %s373, %s376
      %p382 = scmp.eq.s32.totalorder %s27, 0
      %p383 = por %p381, %p382
      %p384 = scmp.ne.s32.totalorder %s373, %s376
      %p385 = scmp.eq.s32.totalorder %s32, 7
      %p386 = por %p384, %p385
      %p387 = scmp.ne.s32.totalorder %s376, %s377
      %p388 = scmp.eq.s32.totalorder %s32, 0
      %p389 = por %p387, %p388
      %p390 = scmp.ne.s32.totalorder %s376, %s377
      %p391 = scmp.eq.s32.totalorder %s33, 7
      %p392 = por %p390, %p391
      %p394 = scmp.ne.s32.totalorder %s377, %s393
      %p395 = scmp.eq.s32.totalorder %s33, 0
      %p396 = por %p394, %p395
      %p397 = scmp.le.s32.totalorder 1, %s27
      %p398 = scmp.lt.s32.totalorder %s27, 9
      %p399 = pnand %p397, %p398
      %p400 = pneg %p399
      // Predicated region
      $region9: #{tpu_custom_call.1} parent=5 // pred_check
        _
      $region10: #{tpu_custom_call.1} parent=5 // pred_check_branch
        %402 = sbr.rel (%p399) target = $region12
      $region11: #{tpu_custom_call.1} parent=5 // pred_region
        %s403 = ssub.s32 %s27, 1
        // Predicated region
        $region13: #{tpu_custom_call.1} parent=11 // pred_check
          %p404 = pneg %p88
        $region14: #{tpu_custom_call.1} parent=11 // pred_check_branch
          %406 = sbr.rel (%p404) target = $region16
        $region15: #{tpu_custom_call.1} parent=11 // pred_region
          _
        $region16: #{tpu_custom_call.1} parent=11 // pred_fallthru
          _
        // Predicated region
        $region17: #{tpu_custom_call.1} parent=11 // pred_check
          %p407 = pneg %p109
        $region18: #{tpu_custom_call.1} parent=11 // pred_check_branch
          %409 = sbr.rel (%p407) target = $region20
        $region19: #{tpu_custom_call.1} parent=11 // pred_region
          _
        $region20: #{tpu_custom_call.1} parent=11 // pred_fallthru
          _
        // Predicated region
        $region21: #{tpu_custom_call.1} parent=11 // pred_check
          %p410 = pneg %p130
        $region22: #{tpu_custom_call.1} parent=11 // pred_check_branch
          %412 = sbr.rel (%p410) target = $region24
        $region23: #{tpu_custom_call.1} parent=11 // pred_region
          _
        $region24: #{tpu_custom_call.1} parent=11 // pred_fallthru
          _
        // Predicated region
        $region25: #{tpu_custom_call.1} parent=11 // pred_check
          %p413 = pneg %p151
        $region26: #{tpu_custom_call.1} parent=11 // pred_check_branch
          %415 = sbr.rel (%p413) target = $region28
        $region27: #{tpu_custom_call.1} parent=11 // pred_region
          _
        $region28: #{tpu_custom_call.1} parent=11 // pred_fallthru
          _
        // Predicated region
        $region29: #{tpu_custom_call.1} parent=11 // pred_check
          %p416 = pneg %p172
        $region30: #{tpu_custom_call.1} parent=11 // pred_check_branch
          %418 = sbr.rel (%p416) target = $region32
        $region31: #{tpu_custom_call.1} parent=11 // pred_region
          _
        $region32: #{tpu_custom_call.1} parent=11 // pred_fallthru
          _
        // Predicated region
        $region33: #{tpu_custom_call.1} parent=11 // pred_check
          %p419 = pneg %p193
        $region34: #{tpu_custom_call.1} parent=11 // pred_check_branch
          %421 = sbr.rel (%p419) target = $region36
        $region35: #{tpu_custom_call.1} parent=11 // pred_region
          _
        $region36: #{tpu_custom_call.1} parent=11 // pred_fallthru
          _
        // Predicated region
        $region37: #{tpu_custom_call.1} parent=11 // pred_check
          %p422 = pneg %p214
        $region38: #{tpu_custom_call.1} parent=11 // pred_check_branch
          %424 = sbr.rel (%p422) target = $region40
        $region39: #{tpu_custom_call.1} parent=11 // pred_region
          _
        $region40: #{tpu_custom_call.1} parent=11 // pred_fallthru
          _
        // Predicated region
        $region41: #{tpu_custom_call.1} parent=11 // pred_check
          %p425 = pneg %p235
        $region42: #{tpu_custom_call.1} parent=11 // pred_check_branch
          %427 = sbr.rel (%p425) target = $region44
        $region43: #{tpu_custom_call.1} parent=11 // pred_region
          _
        $region44: #{tpu_custom_call.1} parent=11 // pred_fallthru
          _
        // Predicated region
        $region45: #{tpu_custom_call.1} parent=11 // pred_check
          %p428 = pneg %p256
        $region46: #{tpu_custom_call.1} parent=11 // pred_check_branch
          %430 = sbr.rel (%p428) target = $region48
        $region47: #{tpu_custom_call.1} parent=11 // pred_region
          _
        $region48: #{tpu_custom_call.1} parent=11 // pred_fallthru
          _
        // Predicated region
        $region49: #{tpu_custom_call.1} parent=11 // pred_check
          %p431 = pneg %p277
        $region50: #{tpu_custom_call.1} parent=11 // pred_check_branch
          %433 = sbr.rel (%p431) target = $region52
        $region51: #{tpu_custom_call.1} parent=11 // pred_region
          _
        $region52: #{tpu_custom_call.1} parent=11 // pred_fallthru
          _
        // Predicated region
        $region53: #{tpu_custom_call.1} parent=11 // pred_check
          %p434 = pneg %p298
        $region54: #{tpu_custom_call.1} parent=11 // pred_check_branch
          %436 = sbr.rel (%p434) target = $region56
        $region55: #{tpu_custom_call.1} parent=11 // pred_region
          _
        $region56: #{tpu_custom_call.1} parent=11 // pred_fallthru
          _
        // Predicated region
        $region57: #{tpu_custom_call.1} parent=11 // pred_check
          %p437 = pneg %p319
        $region58: #{tpu_custom_call.1} parent=11 // pred_check_branch
          %439 = sbr.rel (%p437) target = $region60
        $region59: #{tpu_custom_call.1} parent=11 // pred_region
          _
        $region60: #{tpu_custom_call.1} parent=11 // pred_fallthru
          _
        // Predicated region
        $region61: #{tpu_custom_call.1} parent=11 // pred_check
          %p440 = pneg %p340
        $region62: #{tpu_custom_call.1} parent=11 // pred_check_branch
          %442 = sbr.rel (%p440) target = $region64
        $region63: #{tpu_custom_call.1} parent=11 // pred_region
          _
        $region64: #{tpu_custom_call.1} parent=11 // pred_fallthru
          _
        // Predicated region
        $region65: #{tpu_custom_call.1} parent=11 // pred_check
          %p443 = pneg %p361
        $region66: #{tpu_custom_call.1} parent=11 // pred_check_branch
          %445 = sbr.rel (%p443) target = $region68
        $region67: #{tpu_custom_call.1} parent=11 // pred_region
          _
        $region68: #{tpu_custom_call.1} parent=11 // pred_fallthru
          _
      $region12: #{tpu_custom_call.1} parent=5 // pred_fallthru
        _
      %p446 = scmp.lt.s32.totalorder %s27, 8
      // Predicated region
      $region69: #{tpu_custom_call.1} parent=5 // pred_check
        %p447 = pneg %p446
      $region70: #{tpu_custom_call.1} parent=5 // pred_check_branch
        %449 = sbr.rel (%p447) target = $region72
      $region71: #{tpu_custom_call.1} parent=5 // pred_region
        // Predicated region
        $region73: #{tpu_custom_call.1} parent=71 // pred_check
          %p450 = pneg %p61
        $region74: #{tpu_custom_call.1} parent=71 // pred_check_branch
          %452 = sbr.rel (%p450) target = $region76
        $region75: #{tpu_custom_call.1} parent=71 // pred_region
          %s453 = sand.u32 %s51, 1
          %s454 = scalar_lea.sflag [#allocation3], %s453
          %s455 = sand.u32 %s51, 1
          %s456 = smul.addr %s455, 8
          %s457 = scalar_lea.vmem [#allocation2], %s456
          %459 = vsyncadd %s454, 0
          %s460 = smul.addr %s34, 4
          %s461 = sadd.s32 %s35, %s460
          %s462 = smul.addr %s461, 8
          %s463 = scalar_lea.hbm %s0, %s462
          %s465 = sshll.u32 %s463, 4
          %s466 = int_to_ptr.hbm [resolvable:$true] %s465
          %s467 = sshll.u32 %s457, 4
          %s468 = int_to_ptr.vmem [resolvable:$true] %s467
          %470 = dma.hbm_to_vmem [thread:$0]  %s466, 128, %s468, %s454
        $region76: #{tpu_custom_call.1} parent=71 // pred_fallthru
          _
      $region72: #{tpu_custom_call.1} parent=5 // pred_fallthru
        _
      %p471 = scmp.le.s32.totalorder 1, %s27
      %p472 = scmp.lt.s32.totalorder %s27, 9
      %p473 = pnand %p471, %p472
      %p474 = pneg %p473
      // Predicated region
      $region77: #{tpu_custom_call.1} parent=5 // pred_check
        _
      $region78: #{tpu_custom_call.1} parent=5 // pred_check_branch
        %476 = sbr.rel (%p473) target = $region80
      $region79: #{tpu_custom_call.1} parent=5 // pred_region
        %s477 = ssub.s32 %s27, 1
        %s478 = sand.u32 %s54, 1
        %s479 = scalar_lea.sflag [#allocation3], %s478
        %s480 = sand.u32 %s54, 1
        %s481 = smul.addr %s480, 8
        %s482 = scalar_lea.vmem [#allocation2], %s481
        // Predicated region
        $region81: #{tpu_custom_call.1} parent=79 // pred_check
          %p483 = pneg %p67
        $region82: #{tpu_custom_call.1} parent=79 // pred_check_branch
          %485 = sbr.rel (%p483) target = $region84
        $region83: #{tpu_custom_call.1} parent=79 // pred_region
          %487 = dma.done %s479, 128
        $region84: #{tpu_custom_call.1} parent=79 // pred_fallthru
          _
        %s488 = sand.u32 %s54, 1
        %s489 = scalar_lea.sflag [#allocation3], %s488
        %s490 = sand.u32 %s54, 1
        %s491 = smul.addr %s490, 8
        %s492 = scalar_lea.vmem [#allocation2], %s491
        %p493 = pneg %p67
        %p494 = pneg %p64
        %p495 = pneg %p88
        %p496 = pneg %p85
        %p497 = pneg %p109
        %p498 = pneg %p106
        %p499 = pneg %p130
        %p500 = pneg %p127
        %p501 = pneg %p151
        %p502 = pneg %p148
        %p503 = pneg %p172
        %p504 = pneg %p169
        %p505 = pneg %p193
        %p506 = pneg %p190
        %p507 = pneg %p214
        %p508 = pneg %p211
        %p509 = pneg %p235
        %p510 = pneg %p232
        %p511 = pneg %p256
        %p512 = pneg %p253
        %p513 = pneg %p277
        %p514 = pneg %p274
        %p515 = pneg %p298
        %p516 = pneg %p295
        %p517 = pneg %p319
        %p518 = pneg %p316
        %p519 = pneg %p340
        %p520 = pneg %p337
        %p521 = pneg %p361
        %p522 = pneg %p358
        %p523 = pneg %p389
        %p524 = pneg %p386
        %s525 = sand.u32 %s376, 1
        %s526 = scalar_lea.sflag [#allocation4], %s525
        %s527 = sand.u32 %s376, 1
        %s528 = smul.addr %s527, 8
        %s529 = scalar_lea.vmem [#allocation5], %s528
        %v531 = vld [vmem:[%s482] sm:$0xff]
        %v532 = vld [vmem:[%s13] sm:$0x1]
        %v533 = vld [vmem:[%s14] sm:$0x1]
        %vm534 = vcmask 261120
        %v535 = vsel %vm534, %v531, 0.0
        %536 = vadd.xlane.f32.xlu0 %v535
        %v537 = vpop.xlane.xlu0 %536
        %v538 = vrcp.pop 32.0
        %v539 = vmul.f32 32.0, %v538
        %v540 = vsub.f32 1.0, %v539
        %v541 = vmul.f32 %v538, %v540
        %v542 = vadd.f32 %v538, %v541
        %vm543 = vweird.f32 %v538
        %v544 = vsel %vm543, %v538, %v542
        %v545 = vmul.f32 %v537, %v544
        %v546 = vsub.f32 %v531, %v545
        %v547 = vmul.f32 %v546, %v546
        %v548 = vsel %vm534, %v547, 0.0
        %549 = vadd.xlane.f32.xlu0 %v548
        %v550 = vpop.xlane.xlu0 %549
        %v551 = vmul.f32 %v550, %v544
        %v552 = vadd.f32 %v551, 1e-05
        %v553 = vrsqrt.pop %v552
        %v554 = vmul.f32 %v553, %v552
        %v555 = vmul.f32 %v554, %v553
        %v556 = vmul.f32 0.5, %v555
        %v557 = vsub.f32 1.5, %v556
        %v558 = vmul.f32 %v553, %v557
        %vm559 = vweird.f32 %v552
        %vm560 = vweird.f32 %v553
        %vm561 = vmor %vm559, %vm560
        %v562 = vsel %vm561, %v553, %v558
        %v563 = vmul.f32 %v546, %v562
        %v565 = vperm.slane %v532, 0
        %v567 = vmul.f32 %v563, %v565
        %v569 = vperm.slane %v533, 0
        %v571 = vadd.f32 %v567, %v569
        %v572 = vpack.c.bf16 %v571, %v571
        %v573 = vld [vmem:[%s1] sm:$0xf]
        %v574 = vld [vmem:[%s1 + $0x4] sm:$0xf]
        %v575 = vld [vmem:[%s1 + $0x8] sm:$0xf]
        %v576 = vld [vmem:[%s1 + $0xc] sm:$0xf]
        %v577 = vld [vmem:[%s2] sm:$0x1]
        %v579 = vperm.slane %v577, 0
        %v585 = vunpack.c.l.b16 %v573
        %v586 = vunpack.c.l.b16 %v574
        %v587 = vunpack.c.l.b16 %v575
        %v588 = vunpack.c.l.b16 %v576
        %v589 = vpack.c.b16 %v586, %v585
        %v590 = vpack.c.b16 %v588, %v587
        %v594 = vsel %vm534, %v572, 0
        %596 = vmatpush.bf16.msra.mxu0 0
        %597 = vmatpush.bf16.msra.mxu0 0
        %598 = vmatpush.bf16.msra.mxu0 0
        %599 = vmatpush.bf16.msra.mxu0 0
        %600 = vmatpush.bf16.msra.mxu0 0
        %601 = vmatpush.bf16.msra.mxu0 0
        %602 = vmatpush.bf16.msra.mxu0 %v590
        %603 = vmatpush.bf16.msra.mxu0 %v589
        %604 = vmatmul.bf16.gmra.mxu0 %v594
        %v605 = vpop.f32.mrf.mxu0
        %v606 = vadd.f32 %v579, %v605
        %v607 = vpop.f32.mrf.mxu0
        %608 = vdwg.mxu0
        %v609 = vmul.f32 %v606, 0.35355338
        %611 = vrot.lane.b32.xlu0 %v606, 96
        %v612 = vpop.permute.xlu0 %611
        %vm613 = vcmask 64512
        %v615 = vsel %vm613, %v609, 0
        %v617 = vsel %vm613, %v612, 0
        %619 = vmatpush.xpose.msra.mxu0 0.0
        %620 = vmatpush.xpose.msra.mxu0 0.0
        %621 = vmatpush.xpose.msra.mxu0 0.0
        %622 = vmatpush.xpose.msra.mxu0 0.0
        %623 = vmatpush.xpose.msra.mxu0 0.0
        %624 = vmatpush.xpose.msra.mxu0 0.0
        %625 = vmatpush.xpose.msra.mxu0 0.0
        %626 = vmatpush.xpose.msra.mxu0 0.0
        %627 = vmatpush.xpose.msra.mxu0 0.0
        %628 = vmatpush.xpose.msra.mxu0 0.0
        %629 = vmatpush.xpose.msra.mxu0 0.0
        %630 = vmatpush.xpose.msra.mxu0 0.0
        %631 = vmatpush.xpose.msra.mxu0 0.0
        %632 = vmatpush.xpose.msra.mxu0 0.0
        %633 = vmatpush.xpose.msra.mxu0 0.0
        %634 = vmatpush.xpose.msra.mxu0 %v617
        %635 = vmatmul.f32.gmra.mxu0 %v615
        %v636 = vpop.f32.mrf.mxu0
        %v637 = vadd.f32 0.0, %v636
        %638 = vdwg.mxu0
        %v639 = vsel %vm613, %v637, -inf
        %640 = vmax.xlane.f32.xlu0 %v639
        %v641 = vpop.xlane.xlu0 %640
        %v642 = vsub.f32 %v637, %v641
        %v643 = vmul.f32 %v642, 1.442695
        %v644 = vpow.pop %v643
        %v645 = vsel %vm613, %v644, 0.0
        %646 = vadd.xlane.f32.xlu0 %v645
        %v647 = vpop.xlane.xlu0 %646
        %v648 = vrcp.pop %v647
        %v649 = vmul.f32 %v644, %v648
        %v650 = vpack.c.bf16 %v649, %v649
        %v651 = vpack.c.bf16 %v606, %v606
        %653 = vrot.lane.b32.xlu0 %v651, 64
        %v654 = vpop.permute.xlu0 %653
        %v656 = vsel %vm613, %v650, 0
        %vm658 = vcmask 1043456
        %v660 = vsel %vm658, %v654, 0
        %662 = vmatpush.bf16.msra.mxu0 0
        %663 = vmatpush.bf16.msra.mxu0 0
        %664 = vmatpush.bf16.msra.mxu0 0
        %665 = vmatpush.bf16.msra.mxu0 0
        %666 = vmatpush.bf16.msra.mxu0 0
        %667 = vmatpush.bf16.msra.mxu0 0
        %668 = vmatpush.bf16.msra.mxu0 0
        %669 = vmatpush.bf16.msra.mxu0 %v660
        %670 = vmatmul.bf16.gmra.mxu0 %v656
        %v671 = vpop.f32.mrf.mxu0
        %v672 = vadd.f32 0.0, %v671
        %v673 = vpop.f32.mrf.mxu0
        %674 = vdwg.mxu0
        %v675 = vpack.c.bf16 %v672, %v672
        %v676 = vld [vmem:[%s3] sm:$0xf]
        %677 = vrot.lane.b32.xlu0 %v609, 120
        %v678 = vpop.permute.xlu0 %677
        %679 = vrot.lane.b32.xlu0 %v606, 88
        %v680 = vpop.permute.xlu0 %679
        %v681 = vsel %vm613, %v678, 0
        %v683 = vsel %vm613, %v680, 0
        %685 = vmatpush.xpose.msra.mxu0 0.0
        %686 = vmatpush.xpose.msra.mxu0 0.0
        %687 = vmatpush.xpose.msra.mxu0 0.0
        %688 = vmatpush.xpose.msra.mxu0 0.0
        %689 = vmatpush.xpose.msra.mxu0 0.0
        %690 = vmatpush.xpose.msra.mxu0 0.0
        %691 = vmatpush.xpose.msra.mxu0 0.0
        %692 = vmatpush.xpose.msra.mxu0 0.0
        %693 = vmatpush.xpose.msra.mxu0 0.0
        %694 = vmatpush.xpose.msra.mxu0 0.0
        %695 = vmatpush.xpose.msra.mxu0 0.0
        %696 = vmatpush.xpose.msra.mxu0 0.0
        %697 = vmatpush.xpose.msra.mxu0 0.0
        %698 = vmatpush.xpose.msra.mxu0 0.0
        %699 = vmatpush.xpose.msra.mxu0 0.0
        %700 = vmatpush.xpose.msra.mxu0 %v683
        %701 = vmatmul.f32.gmra.mxu0 %v681
        %v702 = vpop.f32.mrf.mxu0
        %v703 = vadd.f32 0.0, %v702
        %704 = vdwg.mxu0
        %v705 = vsel %vm613, %v703, -inf
        %706 = vmax.xlane.f32.xlu0 %v705
        %v707 = vpop.xlane.xlu0 %706
        %v708 = vsub.f32 %v703, %v707
        %v709 = vmul.f32 %v708, 1.442695
        %v710 = vpow.pop %v709
        %v711 = vsel %vm613, %v710, 0.0
        %712 = vadd.xlane.f32.xlu0 %v711
        %v713 = vpop.xlane.xlu0 %712
        %v714 = vrcp.pop %v713
        %v715 = vmul.f32 %v710, %v714
        %v716 = vpack.c.bf16 %v715, %v715
        %717 = vrot.lane.b32.xlu0 %v651, 56
        %v718 = vpop.permute.xlu0 %717
        %v720 = vsel %vm613, %v716, 0
        %v723 = vsel %vm658, %v718, 0
        %725 = vmatpush.bf16.msra.mxu0 0
        %726 = vmatpush.bf16.msra.mxu0 0
        %727 = vmatpush.bf16.msra.mxu0 0
        %728 = vmatpush.bf16.msra.mxu0 0
        %729 = vmatpush.bf16.msra.mxu0 0
        %730 = vmatpush.bf16.msra.mxu0 0
        %731 = vmatpush.bf16.msra.mxu0 0
        %732 = vmatpush.bf16.msra.mxu0 %v723
        %733 = vmatmul.bf16.gmra.mxu0 %v720
        %v734 = vpop.f32.mrf.mxu0
        %v735 = vadd.f32 0.0, %v734
        %v736 = vpop.f32.mrf.mxu0
        %737 = vdwg.mxu0
        %v738 = vpack.c.bf16 %v735, %v735
        %v739 = vld [vmem:[%s3 + $0x4] sm:$0xf]
        %v741 = vsel %vm613, %v738, 0
        %v744 = vsel %vm658, %v739, 0
        %746 = vmatpush.bf16.msra.mxu0 0
        %747 = vmatpush.bf16.msra.mxu0 0
        %748 = vmatpush.bf16.msra.mxu0 0
        %749 = vmatpush.bf16.msra.mxu0 0
        %750 = vmatpush.bf16.msra.mxu0 0
        %751 = vmatpush.bf16.msra.mxu0 0
        %752 = vmatpush.bf16.msra.mxu0 0
        %753 = vmatpush.bf16.msra.mxu0 %v744
        %754 = vmatmul.bf16.gmra.mxu0 %v741
        %v755 = vpop.f32.mrf.mxu0
        %v756 = vadd.f32 0.0, %v755
        %v757 = vpop.f32.mrf.mxu0
        %758 = vdwg.mxu0
        %v760 = vsel %vm613, %v675, 0
        %v763 = vsel %vm658, %v676, 0
        %765 = vmatpush.bf16.msra.mxu0 0
        %766 = vmatpush.bf16.msra.mxu0 0
        %767 = vmatpush.bf16.msra.mxu0 0
        %768 = vmatpush.bf16.msra.mxu0 0
        %769 = vmatpush.bf16.msra.mxu0 0
        %770 = vmatpush.bf16.msra.mxu0 0
        %771 = vmatpush.bf16.msra.mxu0 0
        %772 = vmatpush.bf16.msra.mxu0 %v763
        %773 = vmatmul.bf16.gmra.mxu0 %v760
        %v774 = vpop.f32.mrf.mxu0
        %v775 = vadd.f32 %v756, %v774
        %v776 = vpop.f32.mrf.mxu0
        %777 = vdwg.mxu0
        %778 = vrot.lane.b32.xlu0 %v609, 112
        %v779 = vpop.permute.xlu0 %778
        %780 = vrot.lane.b32.xlu0 %v606, 80
        %v781 = vpop.permute.xlu0 %780
        %v782 = vsel %vm613, %v779, 0
        %v784 = vsel %vm613, %v781, 0
        %786 = vmatpush.xpose.msra.mxu0 0.0
        %787 = vmatpush.xpose.msra.mxu0 0.0
        %788 = vmatpush.xpose.msra.mxu0 0.0
        %789 = vmatpush.xpose.msra.mxu0 0.0
        %790 = vmatpush.xpose.msra.mxu0 0.0
        %791 = vmatpush.xpose.msra.mxu0 0.0
        %792 = vmatpush.xpose.msra.mxu0 0.0
        %793 = vmatpush.xpose.msra.mxu0 0.0
        %794 = vmatpush.xpose.msra.mxu0 0.0
        %795 = vmatpush.xpose.msra.mxu0 0.0
        %796 = vmatpush.xpose.msra.mxu0 0.0
        %797 = vmatpush.xpose.msra.mxu0 0.0
        %798 = vmatpush.xpose.msra.mxu0 0.0
        %799 = vmatpush.xpose.msra.mxu0 0.0
        %800 = vmatpush.xpose.msra.mxu0 0.0
        %801 = vmatpush.xpose.msra.mxu0 %v784
        %802 = vmatmul.f32.gmra.mxu0 %v782
        %v803 = vpop.f32.mrf.mxu0
        %v804 = vadd.f32 0.0, %v803
        %805 = vdwg.mxu0
        %v806 = vsel %vm613, %v804, -inf
        %807 = vmax.xlane.f32.xlu0 %v806
        %v808 = vpop.xlane.xlu0 %807
        %v809 = vsub.f32 %v804, %v808
        %v810 = vmul.f32 %v809, 1.442695
        %v811 = vpow.pop %v810
        %v812 = vsel %vm613, %v811, 0.0
        %813 = vadd.xlane.f32.xlu0 %v812
        %v814 = vpop.xlane.xlu0 %813
        %v815 = vrcp.pop %v814
        %v816 = vmul.f32 %v811, %v815
        %v817 = vpack.c.bf16 %v816, %v816
        %818 = vrot.lane.b32.xlu0 %v651, 48
        %v819 = vpop.permute.xlu0 %818
        %v821 = vsel %vm613, %v817, 0
        %v824 = vsel %vm658, %v819, 0
        %826 = vmatpush.bf16.msra.mxu0 0
        %827 = vmatpush.bf16.msra.mxu0 0
        %828 = vmatpush.bf16.msra.mxu0 0
        %829 = vmatpush.bf16.msra.mxu0 0
        %830 = vmatpush.bf16.msra.mxu0 0
        %831 = vmatpush.bf16.msra.mxu0 0
        %832 = vmatpush.bf16.msra.mxu0 0
        %833 = vmatpush.bf16.msra.mxu0 %v824
        %834 = vmatmul.bf16.gmra.mxu0 %v821
        %v835 = vpop.f32.mrf.mxu0
        %v836 = vadd.f32 0.0, %v835
        %v837 = vpop.f32.mrf.mxu0
        %838 = vdwg.mxu0
        %v839 = vpack.c.bf16 %v836, %v836
        %v840 = vld [vmem:[%s3 + $0x8] sm:$0xf]
        %v842 = vsel %vm613, %v839, 0
        %v845 = vsel %vm658, %v840, 0
        %847 = vmatpush.bf16.msra.mxu0 0
        %848 = vmatpush.bf16.msra.mxu0 0
        %849 = vmatpush.bf16.msra.mxu0 0
        %850 = vmatpush.bf16.msra.mxu0 0
        %851 = vmatpush.bf16.msra.mxu0 0
        %852 = vmatpush.bf16.msra.mxu0 0
        %853 = vmatpush.bf16.msra.mxu0 0
        %854 = vmatpush.bf16.msra.mxu0 %v845
        %855 = vmatmul.bf16.gmra.mxu0 %v842
        %v856 = vpop.f32.mrf.mxu0
        %v857 = vadd.f32 0.0, %v856
        %v858 = vpop.f32.mrf.mxu0
        %859 = vdwg.mxu0
        %v860 = vadd.f32 %v775, %v857
        %861 = vrot.lane.b32.xlu0 %v609, 104
        %v862 = vpop.permute.xlu0 %861
        %863 = vrot.lane.b32.xlu0 %v606, 72
        %v864 = vpop.permute.xlu0 %863
        %v865 = vsel %vm613, %v862, 0
        %v867 = vsel %vm613, %v864, 0
        %869 = vmatpush.xpose.msra.mxu0 0.0
        %870 = vmatpush.xpose.msra.mxu0 0.0
        %871 = vmatpush.xpose.msra.mxu0 0.0
        %872 = vmatpush.xpose.msra.mxu0 0.0
        %873 = vmatpush.xpose.msra.mxu0 0.0
        %874 = vmatpush.xpose.msra.mxu0 0.0
        %875 = vmatpush.xpose.msra.mxu0 0.0
        %876 = vmatpush.xpose.msra.mxu0 0.0
        %877 = vmatpush.xpose.msra.mxu0 0.0
        %878 = vmatpush.xpose.msra.mxu0 0.0
        %879 = vmatpush.xpose.msra.mxu0 0.0
        %880 = vmatpush.xpose.msra.mxu0 0.0
        %881 = vmatpush.xpose.msra.mxu0 0.0
        %882 = vmatpush.xpose.msra.mxu0 0.0
        %883 = vmatpush.xpose.msra.mxu0 0.0
        %884 = vmatpush.xpose.msra.mxu0 %v867
        %885 = vmatmul.f32.gmra.mxu0 %v865
        %v886 = vpop.f32.mrf.mxu0
        %v887 = vadd.f32 0.0, %v886
        %888 = vdwg.mxu0
        %v889 = vsel %vm613, %v887, -inf
        %890 = vmax.xlane.f32.xlu0 %v889
        %v891 = vpop.xlane.xlu0 %890
        %v892 = vsub.f32 %v887, %v891
        %v893 = vmul.f32 %v892, 1.442695
        %v894 = vpow.pop %v893
        %v895 = vsel %vm613, %v894, 0.0
        %896 = vadd.xlane.f32.xlu0 %v895
        %v897 = vpop.xlane.xlu0 %896
        %v898 = vrcp.pop %v897
        %v899 = vmul.f32 %v894, %v898
        %v900 = vpack.c.bf16 %v899, %v899
        %901 = vrot.lane.b32.xlu0 %v651, 40
        %v902 = vpop.permute.xlu0 %901
        %v904 = vsel %vm613, %v900, 0
        %v907 = vsel %vm658, %v902, 0
        %909 = vmatpush.bf16.msra.mxu0 0
        %910 = vmatpush.bf16.msra.mxu0 0
        %911 = vmatpush.bf16.msra.mxu0 0
        %912 = vmatpush.bf16.msra.mxu0 0
        %913 = vmatpush.bf16.msra.mxu0 0
        %914 = vmatpush.bf16.msra.mxu0 0
        %915 = vmatpush.bf16.msra.mxu0 0
        %916 = vmatpush.bf16.msra.mxu0 %v907
        %917 = vmatmul.bf16.gmra.mxu0 %v904
        %v918 = vpop.f32.mrf.mxu0
        %v919 = vadd.f32 0.0, %v918
        %v920 = vpop.f32.mrf.mxu0
        %921 = vdwg.mxu0
        %v922 = vpack.c.bf16 %v919, %v919
        %v923 = vld [vmem:[%s3 + $0xc] sm:$0xf]
        %v925 = vsel %vm613, %v922, 0
        %v928 = vsel %vm658, %v923, 0
        %930 = vmatpush.bf16.msra.mxu0 0
        %931 = vmatpush.bf16.msra.mxu0 0
        %932 = vmatpush.bf16.msra.mxu0 0
        %933 = vmatpush.bf16.msra.mxu0 0
        %934 = vmatpush.bf16.msra.mxu0 0
        %935 = vmatpush.bf16.msra.mxu0 0
        %936 = vmatpush.bf16.msra.mxu0 0
        %937 = vmatpush.bf16.msra.mxu0 %v928
        %938 = vmatmul.bf16.gmra.mxu0 %v925
        %v939 = vpop.f32.mrf.mxu0
        %v940 = vadd.f32 0.0, %v939
        %v941 = vpop.f32.mrf.mxu0
        %942 = vdwg.mxu0
        %v943 = vadd.f32 %v860, %v940
        %v944 = vadd.f32 %v571, %v943
        %v945 = vld [vmem:[%s4] sm:$0x1]
        %v947 = vperm.slane %v945, 0
        %v949 = vadd.f32 %v944, %v947
        %v950 = vld [vmem:[%s5] sm:$0x1]
        %v951 = vld [vmem:[%s6] sm:$0x1]
        %v952 = vsel %vm534, %v949, 0.0
        %953 = vadd.xlane.f32.xlu0 %v952
        %v954 = vpop.xlane.xlu0 %953
        %v955 = vmul.f32 %v954, %v544
        %v956 = vsub.f32 %v949, %v955
        %v957 = vmul.f32 %v956, %v956
        %v958 = vsel %vm534, %v957, 0.0
        %959 = vadd.xlane.f32.xlu0 %v958
        %v960 = vpop.xlane.xlu0 %959
        %v961 = vmul.f32 %v960, %v544
        %v962 = vadd.f32 %v961, 1e-05
        %v963 = vrsqrt.pop %v962
        %v964 = vmul.f32 %v963, %v962
        %v965 = vmul.f32 %v964, %v963
        %v966 = vmul.f32 0.5, %v965
        %v967 = vsub.f32 1.5, %v966
        %v968 = vmul.f32 %v963, %v967
        %vm969 = vweird.f32 %v962
        %vm970 = vweird.f32 %v963
        %vm971 = vmor %vm969, %vm970
        %v972 = vsel %vm971, %v963, %v968
        %v973 = vmul.f32 %v956, %v972
        %v975 = vperm.slane %v950, 0
        %v977 = vmul.f32 %v973, %v975
        %v979 = vperm.slane %v951, 0
        %v981 = vadd.f32 %v977, %v979
        %v982 = vpack.c.bf16 %v981, %v981
        %v983 = vld [vmem:[%s7] sm:$0xf]
        %v984 = vld [vmem:[%s7 + $0x4] sm:$0xf]
        %v985 = vld [vmem:[%s7 + $0x8] sm:$0xf]
        %v986 = vld [vmem:[%s7 + $0xc] sm:$0xf]
        %v987 = vld [vmem:[%s8] sm:$0x1]
        %v989 = vperm.slane %v987, 0
        %v995 = vunpack.c.l.b16 %v983
        %v996 = vunpack.c.l.b16 %v984
        %v997 = vunpack.c.l.b16 %v985
        %v998 = vunpack.c.l.b16 %v986
        %v999 = vpack.c.b16 %v996, %v995
        %v1000 = vpack.c.b16 %v998, %v997
        %v1004 = vsel %vm534, %v982, 0
        %1006 = vmatpush.bf16.msra.mxu0 0
        %1007 = vmatpush.bf16.msra.mxu0 0
        %1008 = vmatpush.bf16.msra.mxu0 0
        %1009 = vmatpush.bf16.msra.mxu0 0
        %1010 = vmatpush.bf16.msra.mxu0 0
        %1011 = vmatpush.bf16.msra.mxu0 0
        %1012 = vmatpush.bf16.msra.mxu0 %v1000
        %1013 = vmatpush.bf16.msra.mxu0 %v999
        %1014 = vmatmul.bf16.gmra.mxu0 %v1004
        %v1015 = vpop.f32.mrf.mxu0
        %v1016 = vadd.f32 %v989, %v1015
        %v1017 = vpop.f32.mrf.mxu0
        %1018 = vdwg.mxu0
        %v1019 = vmax.f32 %v1016, 0.0
        %v1020 = vpack.c.bf16 %v1019, %v1019
        %v1021 = vld [vmem:[%s9] sm:$0xf]
        %v1022 = vld [vmem:[%s9 + $0x4] sm:$0xf]
        %v1023 = vld [vmem:[%s9 + $0x8] sm:$0xf]
        %v1024 = vld [vmem:[%s9 + $0xc] sm:$0xf]
        %v1025 = vld [vmem:[%s9 + $0x10] sm:$0xf]
        %v1026 = vld [vmem:[%s9 + $0x14] sm:$0xf]
        %v1027 = vld [vmem:[%s9 + $0x18] sm:$0xf]
        %v1028 = vld [vmem:[%s9 + $0x1c] sm:$0xf]
        %v1029 = vld [vmem:[%s10] sm:$0x1]
        %v1031 = vperm.slane %v1029, 0
        %v1041 = vunpack.c.l.b16 %v1021
        %v1042 = vunpack.c.l.b16 %v1022
        %v1043 = vunpack.c.l.b16 %v1023
        %v1044 = vunpack.c.l.b16 %v1024
        %v1045 = vunpack.c.l.b16 %v1025
        %v1046 = vunpack.c.l.b16 %v1026
        %v1047 = vunpack.c.l.b16 %v1027
        %v1048 = vunpack.c.l.b16 %v1028
        %v1049 = vpack.c.b16 %v1042, %v1041
        %v1050 = vpack.c.b16 %v1044, %v1043
        %v1051 = vpack.c.b16 %v1046, %v1045
        %v1052 = vpack.c.b16 %v1048, %v1047
        %vm1057 = vcmask 523264
        %v1059 = vsel %vm1057, %v1020, 0
        %1061 = vmatpush.bf16.msra.mxu0 0
        %1062 = vmatpush.bf16.msra.mxu0 0
        %1063 = vmatpush.bf16.msra.mxu0 0
        %1064 = vmatpush.bf16.msra.mxu0 0
        %1065 = vmatpush.bf16.msra.mxu0 %v1052
        %1066 = vmatpush.bf16.msra.mxu0 %v1051
        %1067 = vmatpush.bf16.msra.mxu0 %v1050
        %1068 = vmatpush.bf16.msra.mxu0 %v1049
        %1069 = vmatmul.bf16.gmra.mxu0 %v1059
        %v1070 = vpop.f32.mrf.mxu0
        %v1071 = vadd.f32 %v1031, %v1070
        %v1072 = vpop.f32.mrf.mxu0
        %1073 = vdwg.mxu0
        %v1074 = vadd.f32 %v981, %v1071
        %v1075 = vld [vmem:[%s11] sm:$0x1]
        %v1076 = vld [vmem:[%s12] sm:$0x1]
        %v1077 = vsel %vm534, %v1074, 0.0
        %1078 = vadd.xlane.f32.xlu0 %v1077
        %v1079 = vpop.xlane.xlu0 %1078
        %v1080 = vmul.f32 %v1079, %v544
        %v1081 = vsub.f32 %v1074, %v1080
        %v1082 = vmul.f32 %v1081, %v1081
        %v1083 = vsel %vm534, %v1082, 0.0
        %1084 = vadd.xlane.f32.xlu0 %v1083
        %v1085 = vpop.xlane.xlu0 %1084
        %v1086 = vmul.f32 %v1085, %v544
        %v1087 = vadd.f32 %v1086, 1e-05
        %v1088 = vrsqrt.pop %v1087
        %v1089 = vmul.f32 %v1088, %v1087
        %v1090 = vmul.f32 %v1089, %v1088
        %v1091 = vmul.f32 0.5, %v1090
        %v1092 = vsub.f32 1.5, %v1091
        %v1093 = vmul.f32 %v1088, %v1092
        %vm1094 = vweird.f32 %v1087
        %vm1095 = vweird.f32 %v1088
        %vm1096 = vmor %vm1094, %vm1095
        %v1097 = vsel %vm1096, %v1088, %v1093
        %v1098 = vmul.f32 %v1081, %v1097
        %v1100 = vperm.slane %v1075, 0
        %v1102 = vmul.f32 %v1098, %v1100
        %v1104 = vperm.slane %v1076, 0
        %v1106 = vadd.f32 %v1102, %v1104
        %1107 = vst.msk [vmem:[%s529] sm:$0xff] %vm534, %v1106
        %s1108 = sand.u32 %s376, 1
        %s1109 = scalar_lea.sflag [#allocation4], %s1108
        %s1110 = sand.u32 %s376, 1
        %s1111 = smul.addr %s1110, 8
        %s1112 = scalar_lea.vmem [#allocation5], %s1111
        // Predicated region
        $region85: #{tpu_custom_call.1} parent=79 // pred_check
          %p1113 = pneg %p386
        $region86: #{tpu_custom_call.1} parent=79 // pred_check_branch
          %1115 = sbr.rel (%p1113) target = $region88
        $region87: #{tpu_custom_call.1} parent=79 // pred_region
          %1117 = vsyncadd %s1109, 0
          %s1118 = smul.addr %s36, 4
          %s1119 = sadd.s32 %s37, %s1118
          %s1120 = smul.addr %s1119, 8
          %s1121 = scalar_lea.hbm %s15, %s1120
          %s1123 = sshll.u32 %s1112, 4
          %s1124 = int_to_ptr.vmem [resolvable:$true] %s1123
          %s1125 = sshll.u32 %s1121, 4
          %s1126 = int_to_ptr.hbm [resolvable:$true] %s1125
          %1128 = dma.vmem_to_hbm [thread:$0]  %s1124, 128, %s1126, %s1109
        $region88: #{tpu_custom_call.1} parent=79 // pred_fallthru
          _
      $region80: #{tpu_custom_call.1} parent=5 // pred_fallthru
        _
      %p1129 = scmp.le.s32.totalorder 2, %s27
      // Predicated region
      $region89: #{tpu_custom_call.1} parent=5 // pred_check
        %p1130 = pneg %p1129
      $region90: #{tpu_custom_call.1} parent=5 // pred_check_branch
        %1132 = sbr.rel (%p1130) target = $region92
      $region91: #{tpu_custom_call.1} parent=5 // pred_region
        %s1133 = ssub.s32 %s27, 2
        // Predicated region
        $region93: #{tpu_custom_call.1} parent=91 // pred_check
          %p1134 = pneg %p392
        $region94: #{tpu_custom_call.1} parent=91 // pred_check_branch
          %1136 = sbr.rel (%p1134) target = $region96
        $region95: #{tpu_custom_call.1} parent=91 // pred_region
          %s1137 = sand.u32 %s377, 1
          %s1138 = scalar_lea.sflag [#allocation4], %s1137
          %s1139 = sand.u32 %s377, 1
          %s1140 = smul.addr %s1139, 8
          %s1141 = scalar_lea.vmem [#allocation5], %s1140
          %1143 = dma.done %s1138, 128
        $region96: #{tpu_custom_call.1} parent=91 // pred_fallthru
          _
      $region92: #{tpu_custom_call.1} parent=5 // pred_fallthru
        _
    $region6: #{tpu_custom_call.1} parent=1 // loop_footer
      %s31 = sadd.s32 1, %s27
    $region7: #{tpu_custom_call.1} parent=1 // loop_footer_branch
      %26 = sbr.rel target = $region3
    $region8: #{tpu_custom_call.1} parent=1 // loop_exit
      _
    %1144 = vsyncpa [#allocation3], 1
    %s1145 = scalar_lea.sflag [#allocation3], 1
    %1146 = vsyncpa %s1145, 1
    %1147 = vsyncpa [#allocation4], 1
    %s1148 = scalar_lea.sflag [#allocation4], 1
    %1149 = vsyncpa %s1148, 1

</llo_original>
